<compile_context>
chip_gen: v7x
topology: tpu7x:2x2x1
jax: 0.10.0
libtpu: 0.0.40
codegen_flags: <defaults>
</compile_context>

<pallas_src>
import jax
import jax.numpy as jnp
from jax.experimental import pallas as pl
from jax.experimental.pallas import tpu as pltpu


def hdc_kernel(idx_ref, bound_ref, w_ref, out_ref):
    TB, N = idx_ref.shape
    LN, D = bound_ref.shape
    L = LN // N

    idx = idx_ref[...]                                                 # (TB, N) int32

    # One-hot level mask, laid out to match bound's (l*N + n) row order.
    lvl_iota = jax.lax.broadcasted_iota(jnp.int32, (L, N), 0)          # (L, N) value = l
    mask = (idx[:, None, :] == lvl_iota[None, :, :]).astype(jnp.bfloat16)  # (TB, L, N)
    mask = mask.reshape(TB, LN)                                        # (TB, L*N)

    # Fused gather + bind + multiset:  acc[b,d] = sum_n pos[n,d] * lvl[idx[b,n],d]
    acc = jnp.dot(mask, bound_ref[...], preferred_element_type=jnp.float32)  # (TB, D) f32

    # hard_quantize (acc == 0 -> -1, matching torchhd); enc is exactly +/-1 -> bf16 exact.
    enc = jnp.where(acc > 0.0, 1.0, -1.0).astype(jnp.bfloat16)

    # classify: Linear(D, C, bias=False); weight^T lane-padded to C_pad in the wrapper.
    out_ref[...] = jnp.dot(enc, w_ref[...], preferred_element_type=jnp.float32)


def _round_up(a, m):
    return ((a + m - 1) // m) * m


def hdc_classifier_forward(x_img, pos_w, lvl_w, cls_w, *, block_b=512):
    """x_img: (B, 1, size, size) NCHW; pos_w: (N, D); lvl_w: (L, D); cls_w: (C, D)."""
    B = x_img.shape[0]
    N, D = pos_w.shape
    L = lvl_w.shape[0]
    C = cls_w.shape[0]

    x_flat = x_img.reshape(B, -1).astype(jnp.float32)
    assert x_flat.shape[1] == N

    # torchhd.embeddings.Level index: round(map_range(x, 0, 1, 0, L-1)), clamped.
    # Done once here (f32 round, identical numerics) so the kernel DMAs int32 indices.
    idx = jnp.clip(jnp.round(x_flat * (L - 1.0)), 0.0, L - 1.0).astype(jnp.int32)  # (B, N)

    # Batch tile: sublane-aligned (multiple of 8).  If the whole batch would fit a
    # single tile, split it so the parallel grid axis has >= 2 steps (v7x megacore).
    B8 = _round_up(B, 8)
    TB = min(block_b, B8)
    if B > 8:
        TB = min(TB, _round_up(-(-B8 // 2), 8))
    B_pad = _round_up(B, TB)
    if B_pad != B:
        idx = jnp.pad(idx, ((0, B_pad - B), (0, 0)))   # padded rows sliced off below

    # Pre-bound matrix: bound[l*N + n, d] = lvl[l, d] * pos[n, d]  (exact +/-1 in bf16).
    bound = (lvl_w.astype(jnp.float32)[:, None, :] * pos_w.astype(jnp.float32)[None, :, :])
    bound = bound.reshape(L * N, D).astype(jnp.bfloat16)

    # Lane-dense classifier output: pad C up to a multiple of 128 with zero columns.
    C_pad = _round_up(C, 128)
    w_t = jnp.transpose(cls_w).astype(jnp.bfloat16)  # (D, C); zero-filled in the module -> exact
    if C_pad != C:
        w_t = jnp.pad(w_t, ((0, 0), (0, C_pad - C)))

    out = pl.pallas_call(
        hdc_kernel,
        out_shape=jax.ShapeDtypeStruct((B_pad, C_pad), jnp.float32),
        grid_spec=pltpu.PrefetchScalarGridSpec(
            num_scalar_prefetch=0,
            grid=(B_pad // TB,),
            in_specs=[
                pl.BlockSpec((TB, N), lambda b: (b, 0)),          # per-tile level indices
                pl.BlockSpec((L * N, D), lambda b: (0, 0)),       # bound matrix (resident, bf16)
                pl.BlockSpec((D, C_pad), lambda b: (0, 0)),       # classifier weight^T (resident)
            ],
            out_specs=pl.BlockSpec((TB, C_pad), lambda b: (b, 0)),
        ),
        compiler_params=pltpu.CompilerParams(dimension_semantics=("parallel",)),
    )(idx, bound, w_t)

    return out[:B, :C]


def reference_forward(x_img, pos_w, lvl_w, cls_w):
    """Pure-JAX reference mirroring the PyTorch/torchhd forward."""
    B = x_img.shape[0]
    L = lvl_w.shape[0]
    xf = x_img.reshape(B, -1)
    idx = jnp.clip(jnp.round(xf * (L - 1.0)), 0.0, L - 1.0).astype(jnp.int32)
    val_hv = lvl_w[idx]                       # (B, N, D)
    sample_hv = pos_w[None, :, :] * val_hv    # bind
    enc = sample_hv.sum(axis=1)               # multiset
    enc = jnp.where(enc > 0.0, 1.0, -1.0)     # hard_quantize
    return enc @ cls_w.T


if __name__ == "__main__":
    # Small shapes consistent with the module constructor:
    num_classes, size, dimensions, num_levels = 10, 16, 512, 8
    B = 2
    N = size * size

    key = jax.random.PRNGKey(0)
    k_pos, k_base, k_thr, k_x = jax.random.split(key, 4)

    # Random embedding: bipolar (+1/-1) hypervectors, shape (N, D).
    pos_w = jnp.where(jax.random.uniform(k_pos, (N, dimensions)) < 0.5, -1.0, 1.0)

    # Level embedding: torchhd-style interpolation between two bipolar endpoints,
    # per-dimension random threshold controls at which level each bit flips.
    hv_low = jnp.where(jax.random.uniform(k_base, (dimensions,)) < 0.5, -1.0, 1.0)
    hv_high = -hv_low
    thresh = jax.random.uniform(k_thr, (dimensions,))
    level_frac = jnp.arange(num_levels, dtype=jnp.float32)[:, None] / (num_levels - 1)
    lvl_w = jnp.where(thresh[None, :] < level_frac, hv_high[None, :], hv_low[None, :])

    # classify.weight is explicitly zero-filled in the module's __init__.
    cls_w = jnp.zeros((num_classes, dimensions), jnp.float32)

    # Input image, NCHW with a single channel, values in [0, 1].
    x_img = jax.random.uniform(k_x, (B, 1, size, size), dtype=jnp.float32)

    logits = hdc_classifier_forward(x_img, pos_w, lvl_w, cls_w)
    logits = jax.block_until_ready(logits)

    ref = reference_forward(x_img, pos_w, lvl_w, cls_w)
    assert logits.shape == (B, num_classes)
    assert jnp.allclose(logits, ref, atol=1e-5), (logits, ref)

    print("KERNEL_OK")
</pallas_src>

<mosaic_0001>
module attributes {stable_mosaic.version = 11 : i64} {
  func.func @hdc_kernel(%arg0: i32, %arg1: memref<8x256xi32, #tpu.memory_space<vmem>>, %arg2: memref<2048x512xbf16, #tpu.memory_space<vmem>>, %arg3: memref<512x128xbf16, #tpu.memory_space<vmem>>, %arg4: memref<8x128xf32, #tpu.memory_space<vmem>>) attributes {dimension_semantics = [#tpu.dimension_semantics<parallel>], iteration_bounds = array<i64: 1>, scalar_prefetch = 0 : i64, scratch_operands = 0 : i64, tpu.core_type = #tpu.core_type<tc>, window_params = [{transform_indices = @transform_0, window_bounds = array<i64: 8, 256>}, {pipeline_mode = #tpu.pipeline_mode<synchronous>, transform_indices = @transform_1, window_bounds = array<i64: 2048, 512>}, {pipeline_mode = #tpu.pipeline_mode<synchronous>, transform_indices = @transform_2, window_bounds = array<i64: 512, 128>}, {transform_indices = @transform_3, window_bounds = array<i64: 8, 128>}]} {
    %c0 = arith.constant 0 : index
    %c0_0 = arith.constant 0 : index
    %0 = vector.load %arg1[%c0, %c0_0] : memref<8x256xi32, #tpu.memory_space<vmem>>, vector<8x256xi32>
    %1 = tpu.iota {dimensions = array<i32: 0>} : vector<8x256xi32>
    %2 = vector.shape_cast %0 : vector<8x256xi32> to vector<8x1x256xi32>
    %3 = vector.shape_cast %1 : vector<8x256xi32> to vector<1x8x256xi32>
    %4 = vector.broadcast %2 : vector<8x1x256xi32> to vector<8x8x256xi32>
    %5 = vector.broadcast %3 : vector<1x8x256xi32> to vector<8x8x256xi32>
    %6 = arith.cmpi eq, %4, %5 : vector<8x8x256xi32>
    %7 = arith.extui %6 : vector<8x8x256xi1> to vector<8x8x256xi32>
    %8 = arith.sitofp %7 : vector<8x8x256xi32> to vector<8x8x256xf32>
    %9 = arith.truncf %8 : vector<8x8x256xf32> to vector<8x8x256xbf16>
    %10 = vector.shape_cast %9 : vector<8x8x256xbf16> to vector<8x2048xbf16>
    %c0_1 = arith.constant 0 : index
    %c0_2 = arith.constant 0 : index
    %11 = vector.load %arg2[%c0_1, %c0_2] : memref<2048x512xbf16, #tpu.memory_space<vmem>>, vector<2048x512xbf16>
    %cst = arith.constant dense<0.000000e+00> : vector<8x512xf32>
    %12 = tpu.matmul %10, %11, %cst {dimension_numbers = #tpu.dot_dimension_numbers<[1], [0], [0], [1], [0, 0, 1, 1], [], []>} : vector<8x2048xbf16>, vector<2048x512xbf16>, vector<8x512xf32> -> vector<8x512xf32>
    %cst_3 = arith.constant 0.000000e+00 : f32
    %13 = vector.broadcast %cst_3 : f32 to vector<8x512xf32>
    %14 = arith.cmpf ogt, %12, %13 : vector<8x512xf32>
    %cst_4 = arith.constant 1.000000e+00 : f32
    %cst_5 = arith.constant -1.000000e+00 : f32
    %15 = vector.broadcast %cst_4 : f32 to vector<8x512xf32>
    %16 = vector.broadcast %cst_5 : f32 to vector<8x512xf32>
    %17 = arith.select %14, %15, %16 : vector<8x512xi1>, vector<8x512xf32>
    %18 = arith.truncf %17 : vector<8x512xf32> to vector<8x512xbf16>
    %c0_6 = arith.constant 0 : index
    %c0_7 = arith.constant 0 : index
    %19 = vector.load %arg3[%c0_6, %c0_7] : memref<512x128xbf16, #tpu.memory_space<vmem>>, vector<512x128xbf16>
    %cst_8 = arith.constant dense<0.000000e+00> : vector<8x128xf32>
    %20 = tpu.matmul %18, %19, %cst_8 {dimension_numbers = #tpu.dot_dimension_numbers<[1], [0], [0], [1], [0, 0, 1, 1], [], []>} : vector<8x512xbf16>, vector<512x128xbf16>, vector<8x128xf32> -> vector<8x128xf32>
    %c0_9 = arith.constant 0 : index
    %c0_10 = arith.constant 0 : index
    %21 = vector.load %arg4[%c0_9, %c0_10] : memref<8x128xf32, #tpu.memory_space<vmem>>, vector<8x128xf32>
    tpu.vector_store %arg4[%c0_9, %c0_10], %20 {strides = array<i32>} : memref<8x128xf32, #tpu.memory_space<vmem>>, vector<8x128xf32>,
    return
  }
  func.func @transform_0(%arg0: i32) -> (i32, i32) {
    %c0_i32 = arith.constant 0 : i32
    %c0_i32_0 = arith.constant 0 : i32
    return %arg0, %c0_i32 : i32, i32
  }
  func.func @transform_1(%arg0: i32) -> (i32, i32) {
    %c0_i32 = arith.constant 0 : i32
    %c0_i32_0 = arith.constant 0 : i32
    %c0_i32_1 = arith.constant 0 : i32
    return %c0_i32, %c0_i32_0 : i32, i32
  }
  func.func @transform_2(%arg0: i32) -> (i32, i32) {
    %c0_i32 = arith.constant 0 : i32
    %c0_i32_0 = arith.constant 0 : i32
    %c0_i32_1 = arith.constant 0 : i32
    return %c0_i32, %c0_i32_0 : i32, i32
  }
  func.func @transform_3(%arg0: i32) -> (i32, i32) {
    %c0_i32 = arith.constant 0 : i32
    %c0_i32_0 = arith.constant 0 : i32
    return %arg0, %c0_i32 : i32, i32
  }
}

</mosaic_0001>

<llo_original>
// kernel: tpu_custom_call.1
$region0: #{tpu_custom_call.1}
  #allocation0 [shape = 'u32[]', space=smem, size = 0x4, offset = 0x4, fixed_abs, tag = 'smem constant byte address 0x4 - core index']
  #allocation1 [shape = 'u32[144,128]{1,0:T(1,128)}', space=vmem, size = 0x12000, scoped, tag = 'internal scratch']
  %s0 = inlined_call_operand.hbm [shape: s32[8,256], index: 0, kind: input, shape index: {}]
  %s1 = inlined_call_operand.hbm [shape: bf16[2048,512], index: 1, kind: input, shape index: {}]
  %s2 = inlined_call_operand.hbm [shape: bf16[512,128], index: 2, kind: input, shape index: {}]
  %s3 = inlined_call_operand.hbm [shape: f32[8,128], index: 3, kind: output, shape index: {}]
  %s4 = sld [smem:[#allocation0]]
  $region34: #{tpu_custom_call.1} parent=0
    _
  %s6 = ssub.s32 1, %s4
  %s7 = scalar_select 0, %s6, %s4
  $region1: #{tpu_custom_call.1} parent=0
    #allocation2 [shape = 'u8[8192]{0}', space=vmem, size = 0x2000, scoped, tag = 'input window, operand 0, single buffered']
    #allocation3 [shape = 's32[1]{0}', space=sflag, size = 0x4, scoped, tag = 'scoped memory for tpu_custom_call.1']
    #allocation4 [shape = 's32[1]{0}', space=sflag, size = 0x4, scoped, tag = 'scoped memory for tpu_custom_call.1']
    #allocation5 [shape = 'u8[2097152]{0}', space=vmem, size = 0x200000, scoped, tag = 'input window, operand 1, single buffered']
    #allocation6 [shape = 's32[1]{0}', space=sflag, size = 0x4, scoped, tag = 'scoped memory for tpu_custom_call.1']
    #allocation7 [shape = 'u8[131072]{0}', space=vmem, size = 0x20000, scoped, tag = 'input window, operand 2, single buffered']
    #allocation8 [shape = 'u8[4096]{0}', space=vmem, size = 0x1000, scoped, tag = 'output window, operand 0, single buffered']
    %8 = vsyncpa [#allocation3], 0
    %9 = vsyncpa [#allocation6], 0
    %10 = vsyncpa [#allocation4], 0
    // Predicated region
    $region2: #{tpu_custom_call.1} parent=1 // pred_check
      _
    $region3: #{tpu_custom_call.1} parent=1 // pred_check_branch
      %12 = sbr.rel (0) target = $region5
    $region4: #{tpu_custom_call.1} parent=1 // pred_region
      %s14 = ssub.s32 256, 256
      %15 = vsyncadd [#allocation3], %s14
      %s17 = sshll.u32 [#allocation2], 4
      %s18 = int_to_ptr.vmem [resolvable:$true] %s17
      %20 = dma.hbm_to_vmem [thread:$0]  %s0, 256, %s18, [#allocation3]
    $region5: #{tpu_custom_call.1} parent=1 // pred_fallthru
      _
    // Predicated region
    $region6: #{tpu_custom_call.1} parent=1 // pred_check
      _
    $region7: #{tpu_custom_call.1} parent=1 // pred_check_branch
      %22 = sbr.rel (0) target = $region9
    $region8: #{tpu_custom_call.1} parent=1 // pred_region
      %s24 = ssub.s32 65536, 65536
      %25 = vsyncadd [#allocation6], %s24
      %s26 = sshll.u32 [#allocation5], 4
      %s27 = int_to_ptr.vmem [resolvable:$true] %s26
      %32 = dma.hbm_to_vmem [thread:$0]  %s1, 65536, %s27, [#allocation6], 256, 256, 16
    $region9: #{tpu_custom_call.1} parent=1 // pred_fallthru
      _
    // Predicated region
    $region10: #{tpu_custom_call.1} parent=1 // pred_check
      _
    $region11: #{tpu_custom_call.1} parent=1 // pred_check_branch
      %34 = sbr.rel (0) target = $region13
    $region12: #{tpu_custom_call.1} parent=1 // pred_region
      %s36 = ssub.s32 4096, 4096
      %37 = vsyncadd [#allocation6], %s36
      %s38 = sshll.u32 [#allocation7], 4
      %s39 = int_to_ptr.vmem [resolvable:$true] %s38
      %44 = dma.hbm_to_vmem [thread:$0]  %s2, 4096, %s39, [#allocation6], 64, 64, 4
    $region13: #{tpu_custom_call.1} parent=1 // pred_fallthru
      _
    // Predicated region
    $region14: #{tpu_custom_call.1} parent=1 // pred_check
      _
    $region15: #{tpu_custom_call.1} parent=1 // pred_check_branch
      %46 = sbr.rel (0) target = $region17
    $region16: #{tpu_custom_call.1} parent=1 // pred_region
      %47 = dma.done [#allocation3], 256
    $region17: #{tpu_custom_call.1} parent=1 // pred_fallthru
      _
    // Predicated region
    $region18: #{tpu_custom_call.1} parent=1 // pred_check
      _
    $region19: #{tpu_custom_call.1} parent=1 // pred_check_branch
      %49 = sbr.rel (0) target = $region21
    $region20: #{tpu_custom_call.1} parent=1 // pred_region
      %50 = dma.done [#allocation6], 65536
    $region21: #{tpu_custom_call.1} parent=1 // pred_fallthru
      _
    // Predicated region
    $region22: #{tpu_custom_call.1} parent=1 // pred_check
      _
    $region23: #{tpu_custom_call.1} parent=1 // pred_check_branch
      %52 = sbr.rel (0) target = $region25
    $region24: #{tpu_custom_call.1} parent=1 // pred_region
      %53 = dma.done [#allocation6], 4096
    $region25: #{tpu_custom_call.1} parent=1 // pred_fallthru
      _
    %v55 = vld [vmem:[#allocation2] sm:$0xff]
    %v56 = vld [vmem:[#allocation2 + $0x8] sm:$0xff]
    %v57 = vlaneseq
    %v58 = vshrl.u32 %v57, 7
    %v59 = vcombine.low %v55, %v56
    %v60 = vcombine.high %v55, %v56
    %v62 = vunpack.c.l.s4 1966171168
    %v63 = vunpack.c.0.s8 %v62
    %v64 = vlaneseq
    %v65 = vshrl.u32 %v64, 7
    %v66 = vsub.s32 %v63, %v65
    %v67 = vrot.slane %v59, %v66
    %v69 = vunpack.c.l.s4 1966171168
    %v70 = vunpack.c.0.s8 %v69
    %v71 = vlaneseq
    %v72 = vshrl.u32 %v71, 7
    %v73 = vsub.s32 %v70, %v72
    %v74 = vrot.slane %v60, %v73
    %v75 = vcombine.high %v67, %v67
    %v76 = vcombine.high %v74, %v74
    %v78 = vunpack.c.l.s4 1966171168
    %v79 = vunpack.c.0.s8 %v78
    %v80 = vlaneseq
    %v81 = vshrl.u32 %v80, 7
    %v82 = vsub.s32 %v79, %v81
    %v83 = vrot.slane %v67, %v82
    %v85 = vunpack.c.l.s4 1966171168
    %v86 = vunpack.c.0.s8 %v85
    %v87 = vlaneseq
    %v88 = vshrl.u32 %v87, 7
    %v89 = vsub.s32 %v86, %v88
    %v90 = vrot.slane %v74, %v89
    %v92 = vunpack.c.l.s4 1966171168
    %v93 = vunpack.c.0.s8 %v92
    %v94 = vlaneseq
    %v95 = vshrl.u32 %v94, 7
    %v96 = vsub.s32 %v93, %v95
    %v97 = vrot.slane %v75, %v96
    %v99 = vunpack.c.l.s4 1966171168
    %v100 = vunpack.c.0.s8 %v99
    %v101 = vlaneseq
    %v102 = vshrl.u32 %v101, 7
    %v103 = vsub.s32 %v100, %v102
    %v104 = vrot.slane %v76, %v103
    %v105 = vcombine.high %v83, %v83
    %v106 = vcombine.high %v90, %v90
    %v107 = vcombine.high %v97, %v97
    %v108 = vcombine.high %v104, %v104
    %v109 = vlaneseq
    %v110 = vshrl.u32 %v109, 7
    %v111 = vsub.s32 0, %v110
    %v112 = vrot.slane %v83, %v111
    %v113 = vlaneseq
    %v114 = vshrl.u32 %v113, 7
    %v115 = vsub.s32 1, %v114
    %v116 = vrot.slane %v83, %v115
    %v117 = vlaneseq
    %v118 = vshrl.u32 %v117, 7
    %v119 = vsub.s32 0, %v118
    %v120 = vrot.slane %v97, %v119
    %v121 = vlaneseq
    %v122 = vshrl.u32 %v121, 7
    %v123 = vsub.s32 1, %v122
    %v124 = vrot.slane %v97, %v123
    %v125 = vlaneseq
    %v126 = vshrl.u32 %v125, 7
    %v127 = vsub.s32 0, %v126
    %v128 = vrot.slane %v105, %v127
    %v129 = vlaneseq
    %v130 = vshrl.u32 %v129, 7
    %v131 = vsub.s32 1, %v130
    %v132 = vrot.slane %v105, %v131
    %v133 = vlaneseq
    %v134 = vshrl.u32 %v133, 7
    %v135 = vsub.s32 0, %v134
    %v136 = vrot.slane %v107, %v135
    %v137 = vlaneseq
    %v138 = vshrl.u32 %v137, 7
    %v139 = vsub.s32 1, %v138
    %v140 = vrot.slane %v107, %v139
    %v141 = vlaneseq
    %v142 = vshrl.u32 %v141, 7
    %v143 = vsub.s32 0, %v142
    %v144 = vrot.slane %v90, %v143
    %v145 = vlaneseq
    %v146 = vshrl.u32 %v145, 7
    %v147 = vsub.s32 1, %v146
    %v148 = vrot.slane %v90, %v147
    %v149 = vlaneseq
    %v150 = vshrl.u32 %v149, 7
    %v151 = vsub.s32 0, %v150
    %v152 = vrot.slane %v104, %v151
    %v153 = vlaneseq
    %v154 = vshrl.u32 %v153, 7
    %v155 = vsub.s32 1, %v154
    %v156 = vrot.slane %v104, %v155
    %v157 = vlaneseq
    %v158 = vshrl.u32 %v157, 7
    %v159 = vsub.s32 0, %v158
    %v160 = vrot.slane %v106, %v159
    %v161 = vlaneseq
    %v162 = vshrl.u32 %v161, 7
    %v163 = vsub.s32 1, %v162
    %v164 = vrot.slane %v106, %v163
    %v165 = vlaneseq
    %v166 = vshrl.u32 %v165, 7
    %v167 = vsub.s32 0, %v166
    %v168 = vrot.slane %v108, %v167
    %v169 = vlaneseq
    %v170 = vshrl.u32 %v169, 7
    %v171 = vsub.s32 1, %v170
    %v172 = vrot.slane %v108, %v171
    %vm173 = vcmp.eq.s32.totalorder %v112, %v58
    %vm174 = vcmp.eq.s32.totalorder %v116, %v58
    %vm175 = vcmp.eq.s32.totalorder %v120, %v58
    %vm176 = vcmp.eq.s32.totalorder %v124, %v58
    %vm177 = vcmp.eq.s32.totalorder %v128, %v58
    %vm178 = vcmp.eq.s32.totalorder %v132, %v58
    %vm179 = vcmp.eq.s32.totalorder %v136, %v58
    %vm180 = vcmp.eq.s32.totalorder %v140, %v58
    %vm181 = vcmp.eq.s32.totalorder %v144, %v58
    %vm182 = vcmp.eq.s32.totalorder %v148, %v58
    %vm183 = vcmp.eq.s32.totalorder %v152, %v58
    %vm184 = vcmp.eq.s32.totalorder %v156, %v58
    %vm185 = vcmp.eq.s32.totalorder %v160, %v58
    %vm186 = vcmp.eq.s32.totalorder %v164, %v58
    %vm187 = vcmp.eq.s32.totalorder %v168, %v58
    %vm188 = vcmp.eq.s32.totalorder %v172, %v58
    %v189 = vsel %vm173, 1, 0
    %v190 = vsel %vm174, 1, 0
    %v191 = vsel %vm175, 1, 0
    %v192 = vsel %vm176, 1, 0
    %v193 = vsel %vm177, 1, 0
    %v194 = vsel %vm178, 1, 0
    %v195 = vsel %vm179, 1, 0
    %v196 = vsel %vm180, 1, 0
    %v197 = vsel %vm181, 1, 0
    %v198 = vsel %vm182, 1, 0
    %v199 = vsel %vm183, 1, 0
    %v200 = vsel %vm184, 1, 0
    %v201 = vsel %vm185, 1, 0
    %v202 = vsel %vm186, 1, 0
    %v203 = vsel %vm187, 1, 0
    %v204 = vsel %vm188, 1, 0
    %v205 = vcvt.s32.f32 %v189
    %v206 = vcvt.s32.f32 %v190
    %v207 = vcvt.s32.f32 %v191
    %v208 = vcvt.s32.f32 %v192
    %v209 = vcvt.s32.f32 %v193
    %v210 = vcvt.s32.f32 %v194
    %v211 = vcvt.s32.f32 %v195
    %v212 = vcvt.s32.f32 %v196
    %v213 = vcvt.s32.f32 %v197
    %v214 = vcvt.s32.f32 %v198
    %v215 = vcvt.s32.f32 %v199
    %v216 = vcvt.s32.f32 %v200
    %v217 = vcvt.s32.f32 %v201
    %v218 = vcvt.s32.f32 %v202
    %v219 = vcvt.s32.f32 %v203
    %v220 = vcvt.s32.f32 %v204
    %v221 = vpack.c.bf16 %v205, %v205
    %v222 = vpack.c.bf16 %v206, %v206
    %v223 = vpack.c.bf16 %v207, %v207
    %v224 = vpack.c.bf16 %v208, %v208
    %v225 = vpack.c.bf16 %v209, %v209
    %v226 = vpack.c.bf16 %v210, %v210
    %v227 = vpack.c.bf16 %v211, %v211
    %v228 = vpack.c.bf16 %v212, %v212
    %v229 = vpack.c.bf16 %v213, %v213
    %v230 = vpack.c.bf16 %v214, %v214
    %v231 = vpack.c.bf16 %v215, %v215
    %v232 = vpack.c.bf16 %v216, %v216
    %v233 = vpack.c.bf16 %v217, %v217
    %v234 = vpack.c.bf16 %v218, %v218
    %v235 = vpack.c.bf16 %v219, %v219
    %v236 = vpack.c.bf16 %v220, %v220
    %v253 = vunpack.c.l.b16 %v221
    %v254 = vunpack.c.l.b16 %v222
    %v255 = vunpack.c.l.b16 %v223
    %v256 = vunpack.c.l.b16 %v224
    %v257 = vunpack.c.l.b16 %v225
    %v258 = vunpack.c.l.b16 %v226
    %v259 = vunpack.c.l.b16 %v227
    %v260 = vunpack.c.l.b16 %v228
    %v261 = vunpack.c.l.b16 %v229
    %v262 = vunpack.c.l.b16 %v230
    %v263 = vunpack.c.l.b16 %v231
    %v264 = vunpack.c.l.b16 %v232
    %v265 = vunpack.c.l.b16 %v233
    %v266 = vunpack.c.l.b16 %v234
    %v267 = vunpack.c.l.b16 %v235
    %v268 = vunpack.c.l.b16 %v236
    %v269 = vpack.c.b16 %v254, %v253
    %v270 = vpack.c.b16 %v256, %v255
    %v271 = vpack.c.b16 %v258, %v257
    %v272 = vpack.c.b16 %v260, %v259
    %v273 = vpack.c.b16 %v262, %v261
    %v274 = vpack.c.b16 %v264, %v263
    %v275 = vpack.c.b16 %v266, %v265
    %v276 = vpack.c.b16 %v268, %v267
    %v285 = vcombine.low %v269, %v273
    %v286 = vcombine.high %v269, %v273
    %v288 = vunpack.c.l.s4 1983009808
    %v289 = vunpack.c.0.s8 %v288
    %v290 = vlaneseq
    %v291 = vshrl.u32 %v290, 7
    %v292 = vsub.s32 %v289, %v291
    %v293 = vrot.slane %v285, %v292
    %v295 = vunpack.c.l.s4 1983009808
    %v296 = vunpack.c.0.s8 %v295
    %v297 = vlaneseq
    %v298 = vshrl.u32 %v297, 7
    %v299 = vsub.s32 %v296, %v298
    %v300 = vrot.slane %v286, %v299
    %v301 = vcombine.low %v271, %v275
    %v302 = vcombine.high %v271, %v275
    %v304 = vunpack.c.l.s4 1983009808
    %v305 = vunpack.c.0.s8 %v304
    %v306 = vlaneseq
    %v307 = vshrl.u32 %v306, 7
    %v308 = vsub.s32 %v305, %v307
    %v309 = vrot.slane %v301, %v308
    %v311 = vunpack.c.l.s4 1983009808
    %v312 = vunpack.c.0.s8 %v311
    %v313 = vlaneseq
    %v314 = vshrl.u32 %v313, 7
    %v315 = vsub.s32 %v312, %v314
    %v316 = vrot.slane %v302, %v315
    %v317 = vcombine.low %v293, %v309
    %v318 = vcombine.high %v293, %v309
    %v320 = vunpack.c.l.s4 1934713408
    %v321 = vunpack.c.0.s8 %v320
    %v322 = vlaneseq
    %v323 = vshrl.u32 %v322, 7
    %v324 = vsub.s32 %v321, %v323
    %v325 = vrot.slane %v317, %v324
    %v327 = vunpack.c.l.s4 1934713408
    %v328 = vunpack.c.0.s8 %v327
    %v329 = vlaneseq
    %v330 = vshrl.u32 %v329, 7
    %v331 = vsub.s32 %v328, %v330
    %v332 = vrot.slane %v318, %v331
    %v333 = vcombine.low %v300, %v316
    %v334 = vcombine.high %v300, %v316
    %v336 = vunpack.c.l.s4 1934713408
    %v337 = vunpack.c.0.s8 %v336
    %v338 = vlaneseq
    %v339 = vshrl.u32 %v338, 7
    %v340 = vsub.s32 %v337, %v339
    %v341 = vrot.slane %v333, %v340
    %v343 = vunpack.c.l.s4 1934713408
    %v344 = vunpack.c.0.s8 %v343
    %v345 = vlaneseq
    %v346 = vshrl.u32 %v345, 7
    %v347 = vsub.s32 %v344, %v346
    %v348 = vrot.slane %v334, %v347
    %v349 = vcombine.low %v325, %v341
    %v350 = vcombine.high %v325, %v341
    %v351 = vcombine.low %v332, %v348
    %v352 = vcombine.high %v332, %v348
    %v353 = vcombine.low %v270, %v274
    %v354 = vcombine.high %v270, %v274
    %v356 = vunpack.c.l.s4 1983009808
    %v357 = vunpack.c.0.s8 %v356
    %v358 = vlaneseq
    %v359 = vshrl.u32 %v358, 7
    %v360 = vsub.s32 %v357, %v359
    %v361 = vrot.slane %v353, %v360
    %v363 = vunpack.c.l.s4 1983009808
    %v364 = vunpack.c.0.s8 %v363
    %v365 = vlaneseq
    %v366 = vshrl.u32 %v365, 7
    %v367 = vsub.s32 %v364, %v366
    %v368 = vrot.slane %v354, %v367
    %v369 = vcombine.low %v272, %v276
    %v370 = vcombine.high %v272, %v276
    %v372 = vunpack.c.l.s4 1983009808
    %v373 = vunpack.c.0.s8 %v372
    %v374 = vlaneseq
    %v375 = vshrl.u32 %v374, 7
    %v376 = vsub.s32 %v373, %v375
    %v377 = vrot.slane %v369, %v376
    %v379 = vunpack.c.l.s4 1983009808
    %v380 = vunpack.c.0.s8 %v379
    %v381 = vlaneseq
    %v382 = vshrl.u32 %v381, 7
    %v383 = vsub.s32 %v380, %v382
    %v384 = vrot.slane %v370, %v383
    %v385 = vcombine.low %v361, %v377
    %v386 = vcombine.high %v361, %v377
    %v388 = vunpack.c.l.s4 1934713408
    %v389 = vunpack.c.0.s8 %v388
    %v390 = vlaneseq
    %v391 = vshrl.u32 %v390, 7
    %v392 = vsub.s32 %v389, %v391
    %v393 = vrot.slane %v385, %v392
    %v395 = vunpack.c.l.s4 1934713408
    %v396 = vunpack.c.0.s8 %v395
    %v397 = vlaneseq
    %v398 = vshrl.u32 %v397, 7
    %v399 = vsub.s32 %v396, %v398
    %v400 = vrot.slane %v386, %v399
    %v401 = vcombine.low %v368, %v384
    %v402 = vcombine.high %v368, %v384
    %v404 = vunpack.c.l.s4 1934713408
    %v405 = vunpack.c.0.s8 %v404
    %v406 = vlaneseq
    %v407 = vshrl.u32 %v406, 7
    %v408 = vsub.s32 %v405, %v407
    %v409 = vrot.slane %v401, %v408
    %v411 = vunpack.c.l.s4 1934713408
    %v412 = vunpack.c.0.s8 %v411
    %v413 = vlaneseq
    %v414 = vshrl.u32 %v413, 7
    %v415 = vsub.s32 %v412, %v414
    %v416 = vrot.slane %v402, %v415
    %v417 = vcombine.low %v393, %v409
    %v418 = vcombine.high %v393, %v409
    %v419 = vcombine.low %v400, %v416
    %v420 = vcombine.high %v400, %v416
    %v423 = vpack.i.b16 %v417, %v349
    %v424 = vshrl.u32 %v349, 16
    %v425 = vshrl.u32 %v417, 16
    %v426 = vpack.i.b16 %v425, %v424
    %v429 = vpack.i.b16 %v418, %v350
    %v430 = vshrl.u32 %v350, 16
    %v431 = vshrl.u32 %v418, 16
    %v432 = vpack.i.b16 %v431, %v430
    %v435 = vpack.i.b16 %v419, %v351
    %v436 = vshrl.u32 %v351, 16
    %v437 = vshrl.u32 %v419, 16
    %v438 = vpack.i.b16 %v437, %v436
    %v441 = vpack.i.b16 %v420, %v352
    %v442 = vshrl.u32 %v352, 16
    %v443 = vshrl.u32 %v420, 16
    %v444 = vpack.i.b16 %v443, %v442
    %v445 = vunpack.c.l.b16 %v423
    %v446 = vunpack.c.h.b16 %v423
    %v447 = vpack.c.b16 %v445, %v445
    %v448 = vpack.c.b16 %v446, %v446
    %v451 = vunpack.c.l.b16 %v426
    %v452 = vunpack.c.h.b16 %v426
    %v453 = vpack.c.b16 %v451, %v451
    %v454 = vpack.c.b16 %v452, %v452
    %v457 = vunpack.c.l.b16 %v429
    %v458 = vunpack.c.h.b16 %v429
    %v459 = vpack.c.b16 %v457, %v457
    %v460 = vpack.c.b16 %v458, %v458
    %v463 = vunpack.c.l.b16 %v432
    %v464 = vunpack.c.h.b16 %v432
    %v465 = vpack.c.b16 %v463, %v463
    %v466 = vpack.c.b16 %v464, %v464
    %v469 = vunpack.c.l.b16 %v435
    %v470 = vunpack.c.h.b16 %v435
    %v471 = vpack.c.b16 %v469, %v469
    %v472 = vpack.c.b16 %v470, %v470
    %v475 = vunpack.c.l.b16 %v438
    %v476 = vunpack.c.h.b16 %v438
    %v477 = vpack.c.b16 %v475, %v475
    %v478 = vpack.c.b16 %v476, %v476
    %v481 = vunpack.c.l.b16 %v441
    %v482 = vunpack.c.h.b16 %v441
    %v483 = vpack.c.b16 %v481, %v481
    %v484 = vpack.c.b16 %v482, %v482
    %v487 = vunpack.c.l.b16 %v444
    %v488 = vunpack.c.h.b16 %v444
    %v489 = vpack.c.b16 %v487, %v487
    %v490 = vpack.c.b16 %v488, %v488
    %v493 = vld [vmem:[#allocation5] sm:$0xff]
    %v494 = vld [vmem:[#allocation5 + $0x8] sm:$0xff]
    %v495 = vld [vmem:[#allocation5 + $0x10] sm:$0xff]
    %v496 = vld [vmem:[#allocation5 + $0x18] sm:$0xff]
    %v497 = vld [vmem:[#allocation5 + $0x20] sm:$0xff]
    %v498 = vld [vmem:[#allocation5 + $0x28] sm:$0xff]
    %v499 = vld [vmem:[#allocation5 + $0x30] sm:$0xff]
    %v500 = vld [vmem:[#allocation5 + $0x38] sm:$0xff]
    %v501 = vld [vmem:[#allocation5 + $0x40] sm:$0xff]
    %v502 = vld [vmem:[#allocation5 + $0x48] sm:$0xff]
    %v503 = vld [vmem:[#allocation5 + $0x50] sm:$0xff]
    %v504 = vld [vmem:[#allocation5 + $0x58] sm:$0xff]
    %v505 = vld [vmem:[#allocation5 + $0x60] sm:$0xff]
    %v506 = vld [vmem:[#allocation5 + $0x68] sm:$0xff]
    %v507 = vld [vmem:[#allocation5 + $0x70] sm:$0xff]
    %v508 = vld [vmem:[#allocation5 + $0x78] sm:$0xff]
    %v509 = vld [vmem:[#allocation5 + $0x80] sm:$0xff]
    %v510 = vld [vmem:[#allocation5 + $0x88] sm:$0xff]
    %v511 = vld [vmem:[#allocation5 + $0x90] sm:$0xff]
    %v512 = vld [vmem:[#allocation5 + $0x98] sm:$0xff]
    %v513 = vld [vmem:[#allocation5 + $0xa0] sm:$0xff]
    %v514 = vld [vmem:[#allocation5 + $0xa8] sm:$0xff]
    %v515 = vld [vmem:[#allocation5 + $0xb0] sm:$0xff]
    %v516 = vld [vmem:[#allocation5 + $0xb8] sm:$0xff]
    %v517 = vld [vmem:[#allocation5 + $0xc0] sm:$0xff]
    %v518 = vld [vmem:[#allocation5 + $0xc8] sm:$0xff]
    %v519 = vld [vmem:[#allocation5 + $0xd0] sm:$0xff]
    %v520 = vld [vmem:[#allocation5 + $0xd8] sm:$0xff]
    %v521 = vld [vmem:[#allocation5 + $0xe0] sm:$0xff]
    %v522 = vld [vmem:[#allocation5 + $0xe8] sm:$0xff]
    %v523 = vld [vmem:[#allocation5 + $0xf0] sm:$0xff]
    %v524 = vld [vmem:[#allocation5 + $0xf8] sm:$0xff]
    %v525 = vld [vmem:[#allocation5 + $0x100] sm:$0xff]
    %v526 = vld [vmem:[#allocation5 + $0x108] sm:$0xff]
    %v527 = vld [vmem:[#allocation5 + $0x110] sm:$0xff]
    %v528 = vld [vmem:[#allocation5 + $0x118] sm:$0xff]
    %v529 = vld [vmem:[#allocation5 + $0x120] sm:$0xff]
    %v530 = vld [vmem:[#allocation5 + $0x128] sm:$0xff]
    %v531 = vld [vmem:[#allocation5 + $0x130] sm:$0xff]
    %v532 = vld [vmem:[#allocation5 + $0x138] sm:$0xff]
    %v533 = vld [vmem:[#allocation5 + $0x140] sm:$0xff]
    %v534 = vld [vmem:[#allocation5 + $0x148] sm:$0xff]
    %v535 = vld [vmem:[#allocation5 + $0x150] sm:$0xff]
    %v536 = vld [vmem:[#allocation5 + $0x158] sm:$0xff]
    %v537 = vld [vmem:[#allocation5 + $0x160] sm:$0xff]
    %v538 = vld [vmem:[#allocation5 + $0x168] sm:$0xff]
    %v539 = vld [vmem:[#allocation5 + $0x170] sm:$0xff]
    %v540 = vld [vmem:[#allocation5 + $0x178] sm:$0xff]
    %v541 = vld [vmem:[#allocation5 + $0x180] sm:$0xff]
    %v542 = vld [vmem:[#allocation5 + $0x188] sm:$0xff]
    %v543 = vld [vmem:[#allocation5 + $0x190] sm:$0xff]
    %v544 = vld [vmem:[#allocation5 + $0x198] sm:$0xff]
    %v545 = vld [vmem:[#allocation5 + $0x1a0] sm:$0xff]
    %v546 = vld [vmem:[#allocation5 + $0x1a8] sm:$0xff]
    %v547 = vld [vmem:[#allocation5 + $0x1b0] sm:$0xff]
    %v548 = vld [vmem:[#allocation5 + $0x1b8] sm:$0xff]
    %v549 = vld [vmem:[#allocation5 + $0x1c0] sm:$0xff]
    %v550 = vld [vmem:[#allocation5 + $0x1c8] sm:$0xff]
    %v551 = vld [vmem:[#allocation5 + $0x1d0] sm:$0xff]
    %v552 = vld [vmem:[#allocation5 + $0x1d8] sm:$0xff]
    %v553 = vld [vmem:[#allocation5 + $0x1e0] sm:$0xff]
    %v554 = vld [vmem:[#allocation5 + $0x1e8] sm:$0xff]
    %v555 = vld [vmem:[#allocation5 + $0x1f0] sm:$0xff]
    %v556 = vld [vmem:[#allocation5 + $0x1f8] sm:$0xff]
    %v557 = vld [vmem:[#allocation5 + $0x200] sm:$0xff]
    %v558 = vld [vmem:[#allocation5 + $0x208] sm:$0xff]
    %v559 = vld [vmem:[#allocation5 + $0x210] sm:$0xff]
    %v560 = vld [vmem:[#allocation5 + $0x218] sm:$0xff]
    %v561 = vld [vmem:[#allocation5 + $0x220] sm:$0xff]
    %v562 = vld [vmem:[#allocation5 + $0x228] sm:$0xff]
    %v563 = vld [vmem:[#allocation5 + $0x230] sm:$0xff]
    %v564 = vld [vmem:[#allocation5 + $0x238] sm:$0xff]
    %v565 = vld [vmem:[#allocation5 + $0x240] sm:$0xff]
    %v566 = vld [vmem:[#allocation5 + $0x248] sm:$0xff]
    %v567 = vld [vmem:[#allocation5 + $0x250] sm:$0xff]
    %v568 = vld [vmem:[#allocation5 + $0x258] sm:$0xff]
    %v569 = vld [vmem:[#allocation5 + $0x260] sm:$0xff]
    %v570 = vld [vmem:[#allocation5 + $0x268] sm:$0xff]
    %v571 = vld [vmem:[#allocation5 + $0x270] sm:$0xff]
    %v572 = vld [vmem:[#allocation5 + $0x278] sm:$0xff]
    %v573 = vld [vmem:[#allocation5 + $0x280] sm:$0xff]
    %v574 = vld [vmem:[#allocation5 + $0x288] sm:$0xff]
    %v575 = vld [vmem:[#allocation5 + $0x290] sm:$0xff]
    %v576 = vld [vmem:[#allocation5 + $0x298] sm:$0xff]
    %v577 = vld [vmem:[#allocation5 + $0x2a0] sm:$0xff]
    %v578 = vld [vmem:[#allocation5 + $0x2a8] sm:$0xff]
    %v579 = vld [vmem:[#allocation5 + $0x2b0] sm:$0xff]
    %v580 = vld [vmem:[#allocation5 + $0x2b8] sm:$0xff]
    %v581 = vld [vmem:[#allocation5 + $0x2c0] sm:$0xff]
    %v582 = vld [vmem:[#allocation5 + $0x2c8] sm:$0xff]
    %v583 = vld [vmem:[#allocation5 + $0x2d0] sm:$0xff]
    %v584 = vld [vmem:[#allocation5 + $0x2d8] sm:$0xff]
    %v585 = vld [vmem:[#allocation5 + $0x2e0] sm:$0xff]
    %v586 = vld [vmem:[#allocation5 + $0x2e8] sm:$0xff]
    %v587 = vld [vmem:[#allocation5 + $0x2f0] sm:$0xff]
    %v588 = vld [vmem:[#allocation5 + $0x2f8] sm:$0xff]
    %v589 = vld [vmem:[#allocation5 + $0x300] sm:$0xff]
    %v590 = vld [vmem:[#allocation5 + $0x308] sm:$0xff]
    %v591 = vld [vmem:[#allocation5 + $0x310] sm:$0xff]
    %v592 = vld [vmem:[#allocation5 + $0x318] sm:$0xff]
    %v593 = vld [vmem:[#allocation5 + $0x320] sm:$0xff]
    %v594 = vld [vmem:[#allocation5 + $0x328] sm:$0xff]
    %v595 = vld [vmem:[#allocation5 + $0x330] sm:$0xff]
    %v596 = vld [vmem:[#allocation5 + $0x338] sm:$0xff]
    %v597 = vld [vmem:[#allocation5 + $0x340] sm:$0xff]
    %v598 = vld [vmem:[#allocation5 + $0x348] sm:$0xff]
    %v599 = vld [vmem:[#allocation5 + $0x350] sm:$0xff]
    %v600 = vld [vmem:[#allocation5 + $0x358] sm:$0xff]
    %v601 = vld [vmem:[#allocation5 + $0x360] sm:$0xff]
    %v602 = vld [vmem:[#allocation5 + $0x368] sm:$0xff]
    %v603 = vld [vmem:[#allocation5 + $0x370] sm:$0xff]
    %v604 = vld [vmem:[#allocation5 + $0x378] sm:$0xff]
    %v605 = vld [vmem:[#allocation5 + $0x380] sm:$0xff]
    %v606 = vld [vmem:[#allocation5 + $0x388] sm:$0xff]
    %v607 = vld [vmem:[#allocation5 + $0x390] sm:$0xff]
    %v608 = vld [vmem:[#allocation5 + $0x398] sm:$0xff]
    %v609 = vld [vmem:[#allocation5 + $0x3a0] sm:$0xff]
    %v610 = vld [vmem:[#allocation5 + $0x3a8] sm:$0xff]
    %v611 = vld [vmem:[#allocation5 + $0x3b0] sm:$0xff]
    %v612 = vld [vmem:[#allocation5 + $0x3b8] sm:$0xff]
    %v613 = vld [vmem:[#allocation5 + $0x3c0] sm:$0xff]
    %v614 = vld [vmem:[#allocation5 + $0x3c8] sm:$0xff]
    %v615 = vld [vmem:[#allocation5 + $0x3d0] sm:$0xff]
    %v616 = vld [vmem:[#allocation5 + $0x3d8] sm:$0xff]
    %v617 = vld [vmem:[#allocation5 + $0x3e0] sm:$0xff]
    %v618 = vld [vmem:[#allocation5 + $0x3e8] sm:$0xff]
    %v619 = vld [vmem:[#allocation5 + $0x3f0] sm:$0xff]
    %v620 = vld [vmem:[#allocation5 + $0x3f8] sm:$0xff]
    %v621 = vld [vmem:[#allocation5 + $0x400] sm:$0xff]
    %v622 = vld [vmem:[#allocation5 + $0x408] sm:$0xff]
    %v623 = vld [vmem:[#allocation5 + $0x410] sm:$0xff]
    %v624 = vld [vmem:[#allocation5 + $0x418] sm:$0xff]
    %v625 = vld [vmem:[#allocation5 + $0x420] sm:$0xff]
    %v626 = vld [vmem:[#allocation5 + $0x428] sm:$0xff]
    %v627 = vld [vmem:[#allocation5 + $0x430] sm:$0xff]
    %v628 = vld [vmem:[#allocation5 + $0x438] sm:$0xff]
    %v629 = vld [vmem:[#allocation5 + $0x440] sm:$0xff]
    %v630 = vld [vmem:[#allocation5 + $0x448] sm:$0xff]
    %v631 = vld [vmem:[#allocation5 + $0x450] sm:$0xff]
    %v632 = vld [vmem:[#allocation5 + $0x458] sm:$0xff]
    %v633 = vld [vmem:[#allocation5 + $0x460] sm:$0xff]
    %v634 = vld [vmem:[#allocation5 + $0x468] sm:$0xff]
    %v635 = vld [vmem:[#allocation5 + $0x470] sm:$0xff]
    %v636 = vld [vmem:[#allocation5 + $0x478] sm:$0xff]
    %v637 = vld [vmem:[#allocation5 + $0x480] sm:$0xff]
    %v638 = vld [vmem:[#allocation5 + $0x488] sm:$0xff]
    %v639 = vld [vmem:[#allocation5 + $0x490] sm:$0xff]
    %v640 = vld [vmem:[#allocation5 + $0x498] sm:$0xff]
    %v641 = vld [vmem:[#allocation5 + $0x4a0] sm:$0xff]
    %v642 = vld [vmem:[#allocation5 + $0x4a8] sm:$0xff]
    %v643 = vld [vmem:[#allocation5 + $0x4b0] sm:$0xff]
    %v644 = vld [vmem:[#allocation5 + $0x4b8] sm:$0xff]
    %v645 = vld [vmem:[#allocation5 + $0x4c0] sm:$0xff]
    %v646 = vld [vmem:[#allocation5 + $0x4c8] sm:$0xff]
    %v647 = vld [vmem:[#allocation5 + $0x4d0] sm:$0xff]
    %v648 = vld [vmem:[#allocation5 + $0x4d8] sm:$0xff]
    %v649 = vld [vmem:[#allocation5 + $0x4e0] sm:$0xff]
    %v650 = vld [vmem:[#allocation5 + $0x4e8] sm:$0xff]
    %v651 = vld [vmem:[#allocation5 + $0x4f0] sm:$0xff]
    %v652 = vld [vmem:[#allocation5 + $0x4f8] sm:$0xff]
    %v653 = vld [vmem:[#allocation5 + $0x500] sm:$0xff]
    %v654 = vld [vmem:[#allocation5 + $0x508] sm:$0xff]
    %v655 = vld [vmem:[#allocation5 + $0x510] sm:$0xff]
    %v656 = vld [vmem:[#allocation5 + $0x518] sm:$0xff]
    %v657 = vld [vmem:[#allocation5 + $0x520] sm:$0xff]
    %v658 = vld [vmem:[#allocation5 + $0x528] sm:$0xff]
    %v659 = vld [vmem:[#allocation5 + $0x530] sm:$0xff]
    %v660 = vld [vmem:[#allocation5 + $0x538] sm:$0xff]
    %v661 = vld [vmem:[#allocation5 + $0x540] sm:$0xff]
    %v662 = vld [vmem:[#allocation5 + $0x548] sm:$0xff]
    %v663 = vld [vmem:[#allocation5 + $0x550] sm:$0xff]
    %v664 = vld [vmem:[#allocation5 + $0x558] sm:$0xff]
    %v665 = vld [vmem:[#allocation5 + $0x560] sm:$0xff]
    %v666 = vld [vmem:[#allocation5 + $0x568] sm:$0xff]
    %v667 = vld [vmem:[#allocation5 + $0x570] sm:$0xff]
    %v668 = vld [vmem:[#allocation5 + $0x578] sm:$0xff]
    %v669 = vld [vmem:[#allocation5 + $0x580] sm:$0xff]
    %v670 = vld [vmem:[#allocation5 + $0x588] sm:$0xff]
    %v671 = vld [vmem:[#allocation5 + $0x590] sm:$0xff]
    %v672 = vld [vmem:[#allocation5 + $0x598] sm:$0xff]
    %v673 = vld [vmem:[#allocation5 + $0x5a0] sm:$0xff]
    %v674 = vld [vmem:[#allocation5 + $0x5a8] sm:$0xff]
    %v675 = vld [vmem:[#allocation5 + $0x5b0] sm:$0xff]
    %v676 = vld [vmem:[#allocation5 + $0x5b8] sm:$0xff]
    %v677 = vld [vmem:[#allocation5 + $0x5c0] sm:$0xff]
    %v678 = vld [vmem:[#allocation5 + $0x5c8] sm:$0xff]
    %v679 = vld [vmem:[#allocation5 + $0x5d0] sm:$0xff]
    %v680 = vld [vmem:[#allocation5 + $0x5d8] sm:$0xff]
    %v681 = vld [vmem:[#allocation5 + $0x5e0] sm:$0xff]
    %v682 = vld [vmem:[#allocation5 + $0x5e8] sm:$0xff]
    %v683 = vld [vmem:[#allocation5 + $0x5f0] sm:$0xff]
    %v684 = vld [vmem:[#allocation5 + $0x5f8] sm:$0xff]
    %v685 = vld [vmem:[#allocation5 + $0x600] sm:$0xff]
    %v686 = vld [vmem:[#allocation5 + $0x608] sm:$0xff]
    %v687 = vld [vmem:[#allocation5 + $0x610] sm:$0xff]
    %v688 = vld [vmem:[#allocation5 + $0x618] sm:$0xff]
    %v689 = vld [vmem:[#allocation5 + $0x620] sm:$0xff]
    %v690 = vld [vmem:[#allocation5 + $0x628] sm:$0xff]
    %v691 = vld [vmem:[#allocation5 + $0x630] sm:$0xff]
    %v692 = vld [vmem:[#allocation5 + $0x638] sm:$0xff]
    %v693 = vld [vmem:[#allocation5 + $0x640] sm:$0xff]
    %v694 = vld [vmem:[#allocation5 + $0x648] sm:$0xff]
    %v695 = vld [vmem:[#allocation5 + $0x650] sm:$0xff]
    %v696 = vld [vmem:[#allocation5 + $0x658] sm:$0xff]
    %v697 = vld [vmem:[#allocation5 + $0x660] sm:$0xff]
    %v698 = vld [vmem:[#allocation5 + $0x668] sm:$0xff]
    %v699 = vld [vmem:[#allocation5 + $0x670] sm:$0xff]
    %v700 = vld [vmem:[#allocation5 + $0x678] sm:$0xff]
    %v701 = vld [vmem:[#allocation5 + $0x680] sm:$0xff]
    %v702 = vld [vmem:[#allocation5 + $0x688] sm:$0xff]
    %v703 = vld [vmem:[#allocation5 + $0x690] sm:$0xff]
    %v704 = vld [vmem:[#allocation5 + $0x698] sm:$0xff]
    %v705 = vld [vmem:[#allocation5 + $0x6a0] sm:$0xff]
    %v706 = vld [vmem:[#allocation5 + $0x6a8] sm:$0xff]
    %v707 = vld [vmem:[#allocation5 + $0x6b0] sm:$0xff]
    %v708 = vld [vmem:[#allocation5 + $0x6b8] sm:$0xff]
    %v709 = vld [vmem:[#allocation5 + $0x6c0] sm:$0xff]
    %v710 = vld [vmem:[#allocation5 + $0x6c8] sm:$0xff]
    %v711 = vld [vmem:[#allocation5 + $0x6d0] sm:$0xff]
    %v712 = vld [vmem:[#allocation5 + $0x6d8] sm:$0xff]
    %v713 = vld [vmem:[#allocation5 + $0x6e0] sm:$0xff]
    %v714 = vld [vmem:[#allocation5 + $0x6e8] sm:$0xff]
    %v715 = vld [vmem:[#allocation5 + $0x6f0] sm:$0xff]
    %v716 = vld [vmem:[#allocation5 + $0x6f8] sm:$0xff]
    %v717 = vld [vmem:[#allocation5 + $0x700] sm:$0xff]
    %v718 = vld [vmem:[#allocation5 + $0x708] sm:$0xff]
    %v719 = vld [vmem:[#allocation5 + $0x710] sm:$0xff]
    %v720 = vld [vmem:[#allocation5 + $0x718] sm:$0xff]
    %v721 = vld [vmem:[#allocation5 + $0x720] sm:$0xff]
    %v722 = vld [vmem:[#allocation5 + $0x728] sm:$0xff]
    %v723 = vld [vmem:[#allocation5 + $0x730] sm:$0xff]
    %v724 = vld [vmem:[#allocation5 + $0x738] sm:$0xff]
    %v725 = vld [vmem:[#allocation5 + $0x740] sm:$0xff]
    %v726 = vld [vmem:[#allocation5 + $0x748] sm:$0xff]
    %v727 = vld [vmem:[#allocation5 + $0x750] sm:$0xff]
    %v728 = vld [vmem:[#allocation5 + $0x758] sm:$0xff]
    %v729 = vld [vmem:[#allocation5 + $0x760] sm:$0xff]
    %v730 = vld [vmem:[#allocation5 + $0x768] sm:$0xff]
    %v731 = vld [vmem:[#allocation5 + $0x770] sm:$0xff]
    %v732 = vld [vmem:[#allocation5 + $0x778] sm:$0xff]
    %v733 = vld [vmem:[#allocation5 + $0x780] sm:$0xff]
    %v734 = vld [vmem:[#allocation5 + $0x788] sm:$0xff]
    %v735 = vld [vmem:[#allocation5 + $0x790] sm:$0xff]
    %v736 = vld [vmem:[#allocation5 + $0x798] sm:$0xff]
    %v737 = vld [vmem:[#allocation5 + $0x7a0] sm:$0xff]
    %v738 = vld [vmem:[#allocation5 + $0x7a8] sm:$0xff]
    %v739 = vld [vmem:[#allocation5 + $0x7b0] sm:$0xff]
    %v740 = vld [vmem:[#allocation5 + $0x7b8] sm:$0xff]
    %v741 = vld [vmem:[#allocation5 + $0x7c0] sm:$0xff]
    %v742 = vld [vmem:[#allocation5 + $0x7c8] sm:$0xff]
    %v743 = vld [vmem:[#allocation5 + $0x7d0] sm:$0xff]
    %v744 = vld [vmem:[#allocation5 + $0x7d8] sm:$0xff]
    %v745 = vld [vmem:[#allocation5 + $0x7e0] sm:$0xff]
    %v746 = vld [vmem:[#allocation5 + $0x7e8] sm:$0xff]
    %v747 = vld [vmem:[#allocation5 + $0x7f0] sm:$0xff]
    %v748 = vld [vmem:[#allocation5 + $0x7f8] sm:$0xff]
    %v749 = vld [vmem:[#allocation5 + $0x800] sm:$0xff]
    %v750 = vld [vmem:[#allocation5 + $0x808] sm:$0xff]
    %v751 = vld [vmem:[#allocation5 + $0x810] sm:$0xff]
    %v752 = vld [vmem:[#allocation5 + $0x818] sm:$0xff]
    %v753 = vld [vmem:[#allocation5 + $0x820] sm:$0xff]
    %v754 = vld [vmem:[#allocation5 + $0x828] sm:$0xff]
    %v755 = vld [vmem:[#allocation5 + $0x830] sm:$0xff]
    %v756 = vld [vmem:[#allocation5 + $0x838] sm:$0xff]
    %v757 = vld [vmem:[#allocation5 + $0x840] sm:$0xff]
    %v758 = vld [vmem:[#allocation5 + $0x848] sm:$0xff]
    %v759 = vld [vmem:[#allocation5 + $0x850] sm:$0xff]
    %v760 = vld [vmem:[#allocation5 + $0x858] sm:$0xff]
    %v761 = vld [vmem:[#allocation5 + $0x860] sm:$0xff]
    %v762 = vld [vmem:[#allocation5 + $0x868] sm:$0xff]
    %v763 = vld [vmem:[#allocation5 + $0x870] sm:$0xff]
    %v764 = vld [vmem:[#allocation5 + $0x878] sm:$0xff]
    %v765 = vld [vmem:[#allocation5 + $0x880] sm:$0xff]
    %v766 = vld [vmem:[#allocation5 + $0x888] sm:$0xff]
    %v767 = vld [vmem:[#allocation5 + $0x890] sm:$0xff]
    %v768 = vld [vmem:[#allocation5 + $0x898] sm:$0xff]
    %v769 = vld [vmem:[#allocation5 + $0x8a0] sm:$0xff]
    %v770 = vld [vmem:[#allocation5 + $0x8a8] sm:$0xff]
    %v771 = vld [vmem:[#allocation5 + $0x8b0] sm:$0xff]
    %v772 = vld [vmem:[#allocation5 + $0x8b8] sm:$0xff]
    %v773 = vld [vmem:[#allocation5 + $0x8c0] sm:$0xff]
    %v774 = vld [vmem:[#allocation5 + $0x8c8] sm:$0xff]
    %v775 = vld [vmem:[#allocation5 + $0x8d0] sm:$0xff]
    %v776 = vld [vmem:[#allocation5 + $0x8d8] sm:$0xff]
    %v777 = vld [vmem:[#allocation5 + $0x8e0] sm:$0xff]
    %v778 = vld [vmem:[#allocation5 + $0x8e8] sm:$0xff]
    %v779 = vld [vmem:[#allocation5 + $0x8f0] sm:$0xff]
    %v780 = vld [vmem:[#allocation5 + $0x8f8] sm:$0xff]
    %v781 = vld [vmem:[#allocation5 + $0x900] sm:$0xff]
    %v782 = vld [vmem:[#allocation5 + $0x908] sm:$0xff]
    %v783 = vld [vmem:[#allocation5 + $0x910] sm:$0xff]
    %v784 = vld [vmem:[#allocation5 + $0x918] sm:$0xff]
    %v785 = vld [vmem:[#allocation5 + $0x920] sm:$0xff]
    %v786 = vld [vmem:[#allocation5 + $0x928] sm:$0xff]
    %v787 = vld [vmem:[#allocation5 + $0x930] sm:$0xff]
    %v788 = vld [vmem:[#allocation5 + $0x938] sm:$0xff]
    %v789 = vld [vmem:[#allocation5 + $0x940] sm:$0xff]
    %v790 = vld [vmem:[#allocation5 + $0x948] sm:$0xff]
    %v791 = vld [vmem:[#allocation5 + $0x950] sm:$0xff]
    %v792 = vld [vmem:[#allocation5 + $0x958] sm:$0xff]
    %v793 = vld [vmem:[#allocation5 + $0x960] sm:$0xff]
    %v794 = vld [vmem:[#allocation5 + $0x968] sm:$0xff]
    %v795 = vld [vmem:[#allocation5 + $0x970] sm:$0xff]
    %v796 = vld [vmem:[#allocation5 + $0x978] sm:$0xff]
    %v797 = vld [vmem:[#allocation5 + $0x980] sm:$0xff]
    %v798 = vld [vmem:[#allocation5 + $0x988] sm:$0xff]
    %v799 = vld [vmem:[#allocation5 + $0x990] sm:$0xff]
    %v800 = vld [vmem:[#allocation5 + $0x998] sm:$0xff]
    %v801 = vld [vmem:[#allocation5 + $0x9a0] sm:$0xff]
    %v802 = vld [vmem:[#allocation5 + $0x9a8] sm:$0xff]
    %v803 = vld [vmem:[#allocation5 + $0x9b0] sm:$0xff]
    %v804 = vld [vmem:[#allocation5 + $0x9b8] sm:$0xff]
    %v805 = vld [vmem:[#allocation5 + $0x9c0] sm:$0xff]
    %v806 = vld [vmem:[#allocation5 + $0x9c8] sm:$0xff]
    %v807 = vld [vmem:[#allocation5 + $0x9d0] sm:$0xff]
    %v808 = vld [vmem:[#allocation5 + $0x9d8] sm:$0xff]
    %v809 = vld [vmem:[#allocation5 + $0x9e0] sm:$0xff]
    %v810 = vld [vmem:[#allocation5 + $0x9e8] sm:$0xff]
    %v811 = vld [vmem:[#allocation5 + $0x9f0] sm:$0xff]
    %v812 = vld [vmem:[#allocation5 + $0x9f8] sm:$0xff]
    %v813 = vld [vmem:[#allocation5 + $0xa00] sm:$0xff]
    %v814 = vld [vmem:[#allocation5 + $0xa08] sm:$0xff]
    %v815 = vld [vmem:[#allocation5 + $0xa10] sm:$0xff]
    %v816 = vld [vmem:[#allocation5 + $0xa18] sm:$0xff]
    %v817 = vld [vmem:[#allocation5 + $0xa20] sm:$0xff]
    %v818 = vld [vmem:[#allocation5 + $0xa28] sm:$0xff]
    %v819 = vld [vmem:[#allocation5 + $0xa30] sm:$0xff]
    %v820 = vld [vmem:[#allocation5 + $0xa38] sm:$0xff]
    %v821 = vld [vmem:[#allocation5 + $0xa40] sm:$0xff]
    %v822 = vld [vmem:[#allocation5 + $0xa48] sm:$0xff]
    %v823 = vld [vmem:[#allocation5 + $0xa50] sm:$0xff]
    %v824 = vld [vmem:[#allocation5 + $0xa58] sm:$0xff]
    %v825 = vld [vmem:[#allocation5 + $0xa60] sm:$0xff]
    %v826 = vld [vmem:[#allocation5 + $0xa68] sm:$0xff]
    %v827 = vld [vmem:[#allocation5 + $0xa70] sm:$0xff]
    %v828 = vld [vmem:[#allocation5 + $0xa78] sm:$0xff]
    %v829 = vld [vmem:[#allocation5 + $0xa80] sm:$0xff]
    %v830 = vld [vmem:[#allocation5 + $0xa88] sm:$0xff]
    %v831 = vld [vmem:[#allocation5 + $0xa90] sm:$0xff]
    %v832 = vld [vmem:[#allocation5 + $0xa98] sm:$0xff]
    %v833 = vld [vmem:[#allocation5 + $0xaa0] sm:$0xff]
    %v834 = vld [vmem:[#allocation5 + $0xaa8] sm:$0xff]
    %v835 = vld [vmem:[#allocation5 + $0xab0] sm:$0xff]
    %v836 = vld [vmem:[#allocation5 + $0xab8] sm:$0xff]
    %v837 = vld [vmem:[#allocation5 + $0xac0] sm:$0xff]
    %v838 = vld [vmem:[#allocation5 + $0xac8] sm:$0xff]
    %v839 = vld [vmem:[#allocation5 + $0xad0] sm:$0xff]
    %v840 = vld [vmem:[#allocation5 + $0xad8] sm:$0xff]
    %v841 = vld [vmem:[#allocation5 + $0xae0] sm:$0xff]
    %v842 = vld [vmem:[#allocation5 + $0xae8] sm:$0xff]
    %v843 = vld [vmem:[#allocation5 + $0xaf0] sm:$0xff]
    %v844 = vld [vmem:[#allocation5 + $0xaf8] sm:$0xff]
    %v845 = vld [vmem:[#allocation5 + $0xb00] sm:$0xff]
    %v846 = vld [vmem:[#allocation5 + $0xb08] sm:$0xff]
    %v847 = vld [vmem:[#allocation5 + $0xb10] sm:$0xff]
    %v848 = vld [vmem:[#allocation5 + $0xb18] sm:$0xff]
    %v849 = vld [vmem:[#allocation5 + $0xb20] sm:$0xff]
    %v850 = vld [vmem:[#allocation5 + $0xb28] sm:$0xff]
    %v851 = vld [vmem:[#allocation5 + $0xb30] sm:$0xff]
    %v852 = vld [vmem:[#allocation5 + $0xb38] sm:$0xff]
    %v853 = vld [vmem:[#allocation5 + $0xb40] sm:$0xff]
    %v854 = vld [vmem:[#allocation5 + $0xb48] sm:$0xff]
    %v855 = vld [vmem:[#allocation5 + $0xb50] sm:$0xff]
    %v856 = vld [vmem:[#allocation5 + $0xb58] sm:$0xff]
    %v857 = vld [vmem:[#allocation5 + $0xb60] sm:$0xff]
    %v858 = vld [vmem:[#allocation5 + $0xb68] sm:$0xff]
    %v859 = vld [vmem:[#allocation5 + $0xb70] sm:$0xff]
    %v860 = vld [vmem:[#allocation5 + $0xb78] sm:$0xff]
    %v861 = vld [vmem:[#allocation5 + $0xb80] sm:$0xff]
    %v862 = vld [vmem:[#allocation5 + $0xb88] sm:$0xff]
    %v863 = vld [vmem:[#allocation5 + $0xb90] sm:$0xff]
    %v864 = vld [vmem:[#allocation5 + $0xb98] sm:$0xff]
    %v865 = vld [vmem:[#allocation5 + $0xba0] sm:$0xff]
    %v866 = vld [vmem:[#allocation5 + $0xba8] sm:$0xff]
    %v867 = vld [vmem:[#allocation5 + $0xbb0] sm:$0xff]
    %v868 = vld [vmem:[#allocation5 + $0xbb8] sm:$0xff]
    %v869 = vld [vmem:[#allocation5 + $0xbc0] sm:$0xff]
    %v870 = vld [vmem:[#allocation5 + $0xbc8] sm:$0xff]
    %v871 = vld [vmem:[#allocation5 + $0xbd0] sm:$0xff]
    %v872 = vld [vmem:[#allocation5 + $0xbd8] sm:$0xff]
    %v873 = vld [vmem:[#allocation5 + $0xbe0] sm:$0xff]
    %v874 = vld [vmem:[#allocation5 + $0xbe8] sm:$0xff]
    %v875 = vld [vmem:[#allocation5 + $0xbf0] sm:$0xff]
    %v876 = vld [vmem:[#allocation5 + $0xbf8] sm:$0xff]
    %v877 = vld [vmem:[#allocation5 + $0xc00] sm:$0xff]
    %v878 = vld [vmem:[#allocation5 + $0xc08] sm:$0xff]
    %v879 = vld [vmem:[#allocation5 + $0xc10] sm:$0xff]
    %v880 = vld [vmem:[#allocation5 + $0xc18] sm:$0xff]
    %v881 = vld [vmem:[#allocation5 + $0xc20] sm:$0xff]
    %v882 = vld [vmem:[#allocation5 + $0xc28] sm:$0xff]
    %v883 = vld [vmem:[#allocation5 + $0xc30] sm:$0xff]
    %v884 = vld [vmem:[#allocation5 + $0xc38] sm:$0xff]
    %v885 = vld [vmem:[#allocation5 + $0xc40] sm:$0xff]
    %v886 = vld [vmem:[#allocation5 + $0xc48] sm:$0xff]
    %v887 = vld [vmem:[#allocation5 + $0xc50] sm:$0xff]
    %v888 = vld [vmem:[#allocation5 + $0xc58] sm:$0xff]
    %v889 = vld [vmem:[#allocation5 + $0xc60] sm:$0xff]
    %v890 = vld [vmem:[#allocation5 + $0xc68] sm:$0xff]
    %v891 = vld [vmem:[#allocation5 + $0xc70] sm:$0xff]
    %v892 = vld [vmem:[#allocation5 + $0xc78] sm:$0xff]
    %v893 = vld [vmem:[#allocation5 + $0xc80] sm:$0xff]
    %v894 = vld [vmem:[#allocation5 + $0xc88] sm:$0xff]
    %v895 = vld [vmem:[#allocation5 + $0xc90] sm:$0xff]
    %v896 = vld [vmem:[#allocation5 + $0xc98] sm:$0xff]
    %v897 = vld [vmem:[#allocation5 + $0xca0] sm:$0xff]
    %v898 = vld [vmem:[#allocation5 + $0xca8] sm:$0xff]
    %v899 = vld [vmem:[#allocation5 + $0xcb0] sm:$0xff]
    %v900 = vld [vmem:[#allocation5 + $0xcb8] sm:$0xff]
    %v901 = vld [vmem:[#allocation5 + $0xcc0] sm:$0xff]
    %v902 = vld [vmem:[#allocation5 + $0xcc8] sm:$0xff]
    %v903 = vld [vmem:[#allocation5 + $0xcd0] sm:$0xff]
    %v904 = vld [vmem:[#allocation5 + $0xcd8] sm:$0xff]
    %v905 = vld [vmem:[#allocation5 + $0xce0] sm:$0xff]
    %v906 = vld [vmem:[#allocation5 + $0xce8] sm:$0xff]
    %v907 = vld [vmem:[#allocation5 + $0xcf0] sm:$0xff]
    %v908 = vld [vmem:[#allocation5 + $0xcf8] sm:$0xff]
    %v909 = vld [vmem:[#allocation5 + $0xd00] sm:$0xff]
    %v910 = vld [vmem:[#allocation5 + $0xd08] sm:$0xff]
    %v911 = vld [vmem:[#allocation5 + $0xd10] sm:$0xff]
    %v912 = vld [vmem:[#allocation5 + $0xd18] sm:$0xff]
    %v913 = vld [vmem:[#allocation5 + $0xd20] sm:$0xff]
    %v914 = vld [vmem:[#allocation5 + $0xd28] sm:$0xff]
    %v915 = vld [vmem:[#allocation5 + $0xd30] sm:$0xff]
    %v916 = vld [vmem:[#allocation5 + $0xd38] sm:$0xff]
    %v917 = vld [vmem:[#allocation5 + $0xd40] sm:$0xff]
    %v918 = vld [vmem:[#allocation5 + $0xd48] sm:$0xff]
    %v919 = vld [vmem:[#allocation5 + $0xd50] sm:$0xff]
    %v920 = vld [vmem:[#allocation5 + $0xd58] sm:$0xff]
    %v921 = vld [vmem:[#allocation5 + $0xd60] sm:$0xff]
    %v922 = vld [vmem:[#allocation5 + $0xd68] sm:$0xff]
    %v923 = vld [vmem:[#allocation5 + $0xd70] sm:$0xff]
    %v924 = vld [vmem:[#allocation5 + $0xd78] sm:$0xff]
    %v925 = vld [vmem:[#allocation5 + $0xd80] sm:$0xff]
    %v926 = vld [vmem:[#allocation5 + $0xd88] sm:$0xff]
    %v927 = vld [vmem:[#allocation5 + $0xd90] sm:$0xff]
    %v928 = vld [vmem:[#allocation5 + $0xd98] sm:$0xff]
    %v929 = vld [vmem:[#allocation5 + $0xda0] sm:$0xff]
    %v930 = vld [vmem:[#allocation5 + $0xda8] sm:$0xff]
    %v931 = vld [vmem:[#allocation5 + $0xdb0] sm:$0xff]
    %v932 = vld [vmem:[#allocation5 + $0xdb8] sm:$0xff]
    %v933 = vld [vmem:[#allocation5 + $0xdc0] sm:$0xff]
    %v934 = vld [vmem:[#allocation5 + $0xdc8] sm:$0xff]
    %v935 = vld [vmem:[#allocation5 + $0xdd0] sm:$0xff]
    %v936 = vld [vmem:[#allocation5 + $0xdd8] sm:$0xff]
    %v937 = vld [vmem:[#allocation5 + $0xde0] sm:$0xff]
    %v938 = vld [vmem:[#allocation5 + $0xde8] sm:$0xff]
    %v939 = vld [vmem:[#allocation5 + $0xdf0] sm:$0xff]
    %v940 = vld [vmem:[#allocation5 + $0xdf8] sm:$0xff]
    %v941 = vld [vmem:[#allocation5 + $0xe00] sm:$0xff]
    %v942 = vld [vmem:[#allocation5 + $0xe08] sm:$0xff]
    %v943 = vld [vmem:[#allocation5 + $0xe10] sm:$0xff]
    %v944 = vld [vmem:[#allocation5 + $0xe18] sm:$0xff]
    %v945 = vld [vmem:[#allocation5 + $0xe20] sm:$0xff]
    %v946 = vld [vmem:[#allocation5 + $0xe28] sm:$0xff]
    %v947 = vld [vmem:[#allocation5 + $0xe30] sm:$0xff]
    %v948 = vld [vmem:[#allocation5 + $0xe38] sm:$0xff]
    %v949 = vld [vmem:[#allocation5 + $0xe40] sm:$0xff]
    %v950 = vld [vmem:[#allocation5 + $0xe48] sm:$0xff]
    %v951 = vld [vmem:[#allocation5 + $0xe50] sm:$0xff]
    %v952 = vld [vmem:[#allocation5 + $0xe58] sm:$0xff]
    %v953 = vld [vmem:[#allocation5 + $0xe60] sm:$0xff]
    %v954 = vld [vmem:[#allocation5 + $0xe68] sm:$0xff]
    %v955 = vld [vmem:[#allocation5 + $0xe70] sm:$0xff]
    %v956 = vld [vmem:[#allocation5 + $0xe78] sm:$0xff]
    %v957 = vld [vmem:[#allocation5 + $0xe80] sm:$0xff]
    %v958 = vld [vmem:[#allocation5 + $0xe88] sm:$0xff]
    %v959 = vld [vmem:[#allocation5 + $0xe90] sm:$0xff]
    %v960 = vld [vmem:[#allocation5 + $0xe98] sm:$0xff]
    %v961 = vld [vmem:[#allocation5 + $0xea0] sm:$0xff]
    %v962 = vld [vmem:[#allocation5 + $0xea8] sm:$0xff]
    %v963 = vld [vmem:[#allocation5 + $0xeb0] sm:$0xff]
    %v964 = vld [vmem:[#allocation5 + $0xeb8] sm:$0xff]
    %v965 = vld [vmem:[#allocation5 + $0xec0] sm:$0xff]
    %v966 = vld [vmem:[#allocation5 + $0xec8] sm:$0xff]
    %v967 = vld [vmem:[#allocation5 + $0xed0] sm:$0xff]
    %v968 = vld [vmem:[#allocation5 + $0xed8] sm:$0xff]
    %v969 = vld [vmem:[#allocation5 + $0xee0] sm:$0xff]
    %v970 = vld [vmem:[#allocation5 + $0xee8] sm:$0xff]
    %v971 = vld [vmem:[#allocation5 + $0xef0] sm:$0xff]
    %v972 = vld [vmem:[#allocation5 + $0xef8] sm:$0xff]
    %v973 = vld [vmem:[#allocation5 + $0xf00] sm:$0xff]
    %v974 = vld [vmem:[#allocation5 + $0xf08] sm:$0xff]
    %v975 = vld [vmem:[#allocation5 + $0xf10] sm:$0xff]
    %v976 = vld [vmem:[#allocation5 + $0xf18] sm:$0xff]
    %v977 = vld [vmem:[#allocation5 + $0xf20] sm:$0xff]
    %v978 = vld [vmem:[#allocation5 + $0xf28] sm:$0xff]
    %v979 = vld [vmem:[#allocation5 + $0xf30] sm:$0xff]
    %v980 = vld [vmem:[#allocation5 + $0xf38] sm:$0xff]
    %v981 = vld [vmem:[#allocation5 + $0xf40] sm:$0xff]
    %v982 = vld [vmem:[#allocation5 + $0xf48] sm:$0xff]
    %v983 = vld [vmem:[#allocation5 + $0xf50] sm:$0xff]
    %v984 = vld [vmem:[#allocation5 + $0xf58] sm:$0xff]
    %v985 = vld [vmem:[#allocation5 + $0xf60] sm:$0xff]
    %v986 = vld [vmem:[#allocation5 + $0xf68] sm:$0xff]
    %v987 = vld [vmem:[#allocation5 + $0xf70] sm:$0xff]
    %v988 = vld [vmem:[#allocation5 + $0xf78] sm:$0xff]
    %v989 = vld [vmem:[#allocation5 + $0xf80] sm:$0xff]
    %v990 = vld [vmem:[#allocation5 + $0xf88] sm:$0xff]
    %v991 = vld [vmem:[#allocation5 + $0xf90] sm:$0xff]
    %v992 = vld [vmem:[#allocation5 + $0xf98] sm:$0xff]
    %v993 = vld [vmem:[#allocation5 + $0xfa0] sm:$0xff]
    %v994 = vld [vmem:[#allocation5 + $0xfa8] sm:$0xff]
    %v995 = vld [vmem:[#allocation5 + $0xfb0] sm:$0xff]
    %v996 = vld [vmem:[#allocation5 + $0xfb8] sm:$0xff]
    %v997 = vld [vmem:[#allocation5 + $0xfc0] sm:$0xff]
    %v998 = vld [vmem:[#allocation5 + $0xfc8] sm:$0xff]
    %v999 = vld [vmem:[#allocation5 + $0xfd0] sm:$0xff]
    %v1000 = vld [vmem:[#allocation5 + $0xfd8] sm:$0xff]
    %v1001 = vld [vmem:[#allocation5 + $0xfe0] sm:$0xff]
    %v1002 = vld [vmem:[#allocation5 + $0xfe8] sm:$0xff]
    %v1003 = vld [vmem:[#allocation5 + $0xff0] sm:$0xff]
    %v1004 = vld [vmem:[#allocation5 + $0xff8] sm:$0xff]
    %v1517 = vunpack.c.l.b16 %v493
    %v1518 = vunpack.c.h.b16 %v493
    %v1519 = vunpack.c.l.b16 %v494
    %v1520 = vunpack.c.h.b16 %v494
    %v1521 = vunpack.c.l.b16 %v495
    %v1522 = vunpack.c.h.b16 %v495
    %v1523 = vunpack.c.l.b16 %v496
    %v1524 = vunpack.c.h.b16 %v496
    %v1525 = vunpack.c.l.b16 %v497
    %v1526 = vunpack.c.h.b16 %v497
    %v1527 = vunpack.c.l.b16 %v498
    %v1528 = vunpack.c.h.b16 %v498
    %v1529 = vunpack.c.l.b16 %v499
    %v1530 = vunpack.c.h.b16 %v499
    %v1531 = vunpack.c.l.b16 %v500
    %v1532 = vunpack.c.h.b16 %v500
    %v1533 = vunpack.c.l.b16 %v501
    %v1534 = vunpack.c.h.b16 %v501
    %v1535 = vunpack.c.l.b16 %v502
    %v1536 = vunpack.c.h.b16 %v502
    %v1537 = vunpack.c.l.b16 %v503
    %v1538 = vunpack.c.h.b16 %v503
    %v1539 = vunpack.c.l.b16 %v504
    %v1540 = vunpack.c.h.b16 %v504
    %v1541 = vunpack.c.l.b16 %v505
    %v1542 = vunpack.c.h.b16 %v505
    %v1543 = vunpack.c.l.b16 %v506
    %v1544 = vunpack.c.h.b16 %v506
    %v1545 = vunpack.c.l.b16 %v507
    %v1546 = vunpack.c.h.b16 %v507
    %v1547 = vunpack.c.l.b16 %v508
    %v1548 = vunpack.c.h.b16 %v508
    %v1549 = vunpack.c.l.b16 %v509
    %v1550 = vunpack.c.h.b16 %v509
    %v1551 = vunpack.c.l.b16 %v510
    %v1552 = vunpack.c.h.b16 %v510
    %v1553 = vunpack.c.l.b16 %v511
    %v1554 = vunpack.c.h.b16 %v511
    %v1555 = vunpack.c.l.b16 %v512
    %v1556 = vunpack.c.h.b16 %v512
    %v1557 = vunpack.c.l.b16 %v513
    %v1558 = vunpack.c.h.b16 %v513
    %v1559 = vunpack.c.l.b16 %v514
    %v1560 = vunpack.c.h.b16 %v514
    %v1561 = vunpack.c.l.b16 %v515
    %v1562 = vunpack.c.h.b16 %v515
    %v1563 = vunpack.c.l.b16 %v516
    %v1564 = vunpack.c.h.b16 %v516
    %v1565 = vunpack.c.l.b16 %v517
    %v1566 = vunpack.c.h.b16 %v517
    %v1567 = vunpack.c.l.b16 %v518
    %v1568 = vunpack.c.h.b16 %v518
    %v1569 = vunpack.c.l.b16 %v519
    %v1570 = vunpack.c.h.b16 %v519
    %v1571 = vunpack.c.l.b16 %v520
    %v1572 = vunpack.c.h.b16 %v520
    %v1573 = vunpack.c.l.b16 %v521
    %v1574 = vunpack.c.h.b16 %v521
    %v1575 = vunpack.c.l.b16 %v522
    %v1576 = vunpack.c.h.b16 %v522
    %v1577 = vunpack.c.l.b16 %v523
    %v1578 = vunpack.c.h.b16 %v523
    %v1579 = vunpack.c.l.b16 %v524
    %v1580 = vunpack.c.h.b16 %v524
    %v1581 = vunpack.c.l.b16 %v525
    %v1582 = vunpack.c.h.b16 %v525
    %v1583 = vunpack.c.l.b16 %v526
    %v1584 = vunpack.c.h.b16 %v526
    %v1585 = vunpack.c.l.b16 %v527
    %v1586 = vunpack.c.h.b16 %v527
    %v1587 = vunpack.c.l.b16 %v528
    %v1588 = vunpack.c.h.b16 %v528
    %v1589 = vunpack.c.l.b16 %v529
    %v1590 = vunpack.c.h.b16 %v529
    %v1591 = vunpack.c.l.b16 %v530
    %v1592 = vunpack.c.h.b16 %v530
    %v1593 = vunpack.c.l.b16 %v531
    %v1594 = vunpack.c.h.b16 %v531
    %v1595 = vunpack.c.l.b16 %v532
    %v1596 = vunpack.c.h.b16 %v532
    %v1597 = vunpack.c.l.b16 %v533
    %v1598 = vunpack.c.h.b16 %v533
    %v1599 = vunpack.c.l.b16 %v534
    %v1600 = vunpack.c.h.b16 %v534
    %v1601 = vunpack.c.l.b16 %v535
    %v1602 = vunpack.c.h.b16 %v535
    %v1603 = vunpack.c.l.b16 %v536
    %v1604 = vunpack.c.h.b16 %v536
    %v1605 = vunpack.c.l.b16 %v537
    %v1606 = vunpack.c.h.b16 %v537
    %v1607 = vunpack.c.l.b16 %v538
    %v1608 = vunpack.c.h.b16 %v538
    %v1609 = vunpack.c.l.b16 %v539
    %v1610 = vunpack.c.h.b16 %v539
    %v1611 = vunpack.c.l.b16 %v540
    %v1612 = vunpack.c.h.b16 %v540
    %v1613 = vunpack.c.l.b16 %v541
    %v1614 = vunpack.c.h.b16 %v541
    %v1615 = vunpack.c.l.b16 %v542
    %v1616 = vunpack.c.h.b16 %v542
    %v1617 = vunpack.c.l.b16 %v543
    %v1618 = vunpack.c.h.b16 %v543
    %v1619 = vunpack.c.l.b16 %v544
    %v1620 = vunpack.c.h.b16 %v544
    %v1621 = vunpack.c.l.b16 %v545
    %v1622 = vunpack.c.h.b16 %v545
    %v1623 = vunpack.c.l.b16 %v546
    %v1624 = vunpack.c.h.b16 %v546
    %v1625 = vunpack.c.l.b16 %v547
    %v1626 = vunpack.c.h.b16 %v547
    %v1627 = vunpack.c.l.b16 %v548
    %v1628 = vunpack.c.h.b16 %v548
    %v1629 = vunpack.c.l.b16 %v549
    %v1630 = vunpack.c.h.b16 %v549
    %v1631 = vunpack.c.l.b16 %v550
    %v1632 = vunpack.c.h.b16 %v550
    %v1633 = vunpack.c.l.b16 %v551
    %v1634 = vunpack.c.h.b16 %v551
    %v1635 = vunpack.c.l.b16 %v552
    %v1636 = vunpack.c.h.b16 %v552
    %v1637 = vunpack.c.l.b16 %v553
    %v1638 = vunpack.c.h.b16 %v553
    %v1639 = vunpack.c.l.b16 %v554
    %v1640 = vunpack.c.h.b16 %v554
    %v1641 = vunpack.c.l.b16 %v555
    %v1642 = vunpack.c.h.b16 %v555
    %v1643 = vunpack.c.l.b16 %v556
    %v1644 = vunpack.c.h.b16 %v556
    %v1645 = vunpack.c.l.b16 %v557
    %v1646 = vunpack.c.h.b16 %v557
    %v1647 = vunpack.c.l.b16 %v558
    %v1648 = vunpack.c.h.b16 %v558
    %v1649 = vunpack.c.l.b16 %v559
    %v1650 = vunpack.c.h.b16 %v559
    %v1651 = vunpack.c.l.b16 %v560
    %v1652 = vunpack.c.h.b16 %v560
    %v1653 = vunpack.c.l.b16 %v561
    %v1654 = vunpack.c.h.b16 %v561
    %v1655 = vunpack.c.l.b16 %v562
    %v1656 = vunpack.c.h.b16 %v562
    %v1657 = vunpack.c.l.b16 %v563
    %v1658 = vunpack.c.h.b16 %v563
    %v1659 = vunpack.c.l.b16 %v564
    %v1660 = vunpack.c.h.b16 %v564
    %v1661 = vunpack.c.l.b16 %v565
    %v1662 = vunpack.c.h.b16 %v565
    %v1663 = vunpack.c.l.b16 %v566
    %v1664 = vunpack.c.h.b16 %v566
    %v1665 = vunpack.c.l.b16 %v567
    %v1666 = vunpack.c.h.b16 %v567
    %v1667 = vunpack.c.l.b16 %v568
    %v1668 = vunpack.c.h.b16 %v568
    %v1669 = vunpack.c.l.b16 %v569
    %v1670 = vunpack.c.h.b16 %v569
    %v1671 = vunpack.c.l.b16 %v570
    %v1672 = vunpack.c.h.b16 %v570
    %v1673 = vunpack.c.l.b16 %v571
    %v1674 = vunpack.c.h.b16 %v571
    %v1675 = vunpack.c.l.b16 %v572
    %v1676 = vunpack.c.h.b16 %v572
    %v1677 = vunpack.c.l.b16 %v573
    %v1678 = vunpack.c.h.b16 %v573
    %v1679 = vunpack.c.l.b16 %v574
    %v1680 = vunpack.c.h.b16 %v574
    %v1681 = vunpack.c.l.b16 %v575
    %v1682 = vunpack.c.h.b16 %v575
    %v1683 = vunpack.c.l.b16 %v576
    %v1684 = vunpack.c.h.b16 %v576
    %v1685 = vunpack.c.l.b16 %v577
    %v1686 = vunpack.c.h.b16 %v577
    %v1687 = vunpack.c.l.b16 %v578
    %v1688 = vunpack.c.h.b16 %v578
    %v1689 = vunpack.c.l.b16 %v579
    %v1690 = vunpack.c.h.b16 %v579
    %v1691 = vunpack.c.l.b16 %v580
    %v1692 = vunpack.c.h.b16 %v580
    %v1693 = vunpack.c.l.b16 %v581
    %v1694 = vunpack.c.h.b16 %v581
    %v1695 = vunpack.c.l.b16 %v582
    %v1696 = vunpack.c.h.b16 %v582
    %v1697 = vunpack.c.l.b16 %v583
    %v1698 = vunpack.c.h.b16 %v583
    %v1699 = vunpack.c.l.b16 %v584
    %v1700 = vunpack.c.h.b16 %v584
    %v1701 = vunpack.c.l.b16 %v585
    %v1702 = vunpack.c.h.b16 %v585
    %v1703 = vunpack.c.l.b16 %v586
    %v1704 = vunpack.c.h.b16 %v586
    %v1705 = vunpack.c.l.b16 %v587
    %v1706 = vunpack.c.h.b16 %v587
    %v1707 = vunpack.c.l.b16 %v588
    %v1708 = vunpack.c.h.b16 %v588
    %v1709 = vunpack.c.l.b16 %v589
    %v1710 = vunpack.c.h.b16 %v589
    %v1711 = vunpack.c.l.b16 %v590
    %v1712 = vunpack.c.h.b16 %v590
    %v1713 = vunpack.c.l.b16 %v591
    %v1714 = vunpack.c.h.b16 %v591
    %v1715 = vunpack.c.l.b16 %v592
    %v1716 = vunpack.c.h.b16 %v592
    %v1717 = vunpack.c.l.b16 %v593
    %v1718 = vunpack.c.h.b16 %v593
    %v1719 = vunpack.c.l.b16 %v594
    %v1720 = vunpack.c.h.b16 %v594
    %v1721 = vunpack.c.l.b16 %v595
    %v1722 = vunpack.c.h.b16 %v595
    %v1723 = vunpack.c.l.b16 %v596
    %v1724 = vunpack.c.h.b16 %v596
    %v1725 = vunpack.c.l.b16 %v597
    %v1726 = vunpack.c.h.b16 %v597
    %v1727 = vunpack.c.l.b16 %v598
    %v1728 = vunpack.c.h.b16 %v598
    %v1729 = vunpack.c.l.b16 %v599
    %v1730 = vunpack.c.h.b16 %v599
    %v1731 = vunpack.c.l.b16 %v600
    %v1732 = vunpack.c.h.b16 %v600
    %v1733 = vunpack.c.l.b16 %v601
    %v1734 = vunpack.c.h.b16 %v601
    %v1735 = vunpack.c.l.b16 %v602
    %v1736 = vunpack.c.h.b16 %v602
    %v1737 = vunpack.c.l.b16 %v603
    %v1738 = vunpack.c.h.b16 %v603
    %v1739 = vunpack.c.l.b16 %v604
    %v1740 = vunpack.c.h.b16 %v604
    %v1741 = vunpack.c.l.b16 %v605
    %v1742 = vunpack.c.h.b16 %v605
    %v1743 = vunpack.c.l.b16 %v606
    %v1744 = vunpack.c.h.b16 %v606
    %v1745 = vunpack.c.l.b16 %v607
    %v1746 = vunpack.c.h.b16 %v607
    %v1747 = vunpack.c.l.b16 %v608
    %v1748 = vunpack.c.h.b16 %v608
    %v1749 = vunpack.c.l.b16 %v609
    %v1750 = vunpack.c.h.b16 %v609
    %v1751 = vunpack.c.l.b16 %v610
    %v1752 = vunpack.c.h.b16 %v610
    %v1753 = vunpack.c.l.b16 %v611
    %v1754 = vunpack.c.h.b16 %v611
    %v1755 = vunpack.c.l.b16 %v612
    %v1756 = vunpack.c.h.b16 %v612
    %v1757 = vunpack.c.l.b16 %v613
    %v1758 = vunpack.c.h.b16 %v613
    %v1759 = vunpack.c.l.b16 %v614
    %v1760 = vunpack.c.h.b16 %v614
    %v1761 = vunpack.c.l.b16 %v615
    %v1762 = vunpack.c.h.b16 %v615
    %v1763 = vunpack.c.l.b16 %v616
    %v1764 = vunpack.c.h.b16 %v616
    %v1765 = vunpack.c.l.b16 %v617
    %v1766 = vunpack.c.h.b16 %v617
    %v1767 = vunpack.c.l.b16 %v618
    %v1768 = vunpack.c.h.b16 %v618
    %v1769 = vunpack.c.l.b16 %v619
    %v1770 = vunpack.c.h.b16 %v619
    %v1771 = vunpack.c.l.b16 %v620
    %v1772 = vunpack.c.h.b16 %v620
    %v1773 = vunpack.c.l.b16 %v621
    %v1774 = vunpack.c.h.b16 %v621
    %v1775 = vunpack.c.l.b16 %v622
    %v1776 = vunpack.c.h.b16 %v622
    %v1777 = vunpack.c.l.b16 %v623
    %v1778 = vunpack.c.h.b16 %v623
    %v1779 = vunpack.c.l.b16 %v624
    %v1780 = vunpack.c.h.b16 %v624
    %v1781 = vunpack.c.l.b16 %v625
    %v1782 = vunpack.c.h.b16 %v625
    %v1783 = vunpack.c.l.b16 %v626
    %v1784 = vunpack.c.h.b16 %v626
    %v1785 = vunpack.c.l.b16 %v627
    %v1786 = vunpack.c.h.b16 %v627
    %v1787 = vunpack.c.l.b16 %v628
    %v1788 = vunpack.c.h.b16 %v628
    %v1789 = vunpack.c.l.b16 %v629
    %v1790 = vunpack.c.h.b16 %v629
    %v1791 = vunpack.c.l.b16 %v630
    %v1792 = vunpack.c.h.b16 %v630
    %v1793 = vunpack.c.l.b16 %v631
    %v1794 = vunpack.c.h.b16 %v631
    %v1795 = vunpack.c.l.b16 %v632
    %v1796 = vunpack.c.h.b16 %v632
    %v1797 = vunpack.c.l.b16 %v633
    %v1798 = vunpack.c.h.b16 %v633
    %v1799 = vunpack.c.l.b16 %v634
    %v1800 = vunpack.c.h.b16 %v634
    %v1801 = vunpack.c.l.b16 %v635
    %v1802 = vunpack.c.h.b16 %v635
    %v1803 = vunpack.c.l.b16 %v636
    %v1804 = vunpack.c.h.b16 %v636
    %v1805 = vunpack.c.l.b16 %v637
    %v1806 = vunpack.c.h.b16 %v637
    %v1807 = vunpack.c.l.b16 %v638
    %v1808 = vunpack.c.h.b16 %v638
    %v1809 = vunpack.c.l.b16 %v639
    %v1810 = vunpack.c.h.b16 %v639
    %v1811 = vunpack.c.l.b16 %v640
    %v1812 = vunpack.c.h.b16 %v640
    %v1813 = vunpack.c.l.b16 %v641
    %v1814 = vunpack.c.h.b16 %v641
    %v1815 = vunpack.c.l.b16 %v642
    %v1816 = vunpack.c.h.b16 %v642
    %v1817 = vunpack.c.l.b16 %v643
    %v1818 = vunpack.c.h.b16 %v643
    %v1819 = vunpack.c.l.b16 %v644
    %v1820 = vunpack.c.h.b16 %v644
    %v1821 = vunpack.c.l.b16 %v645
    %v1822 = vunpack.c.h.b16 %v645
    %v1823 = vunpack.c.l.b16 %v646
    %v1824 = vunpack.c.h.b16 %v646
    %v1825 = vunpack.c.l.b16 %v647
    %v1826 = vunpack.c.h.b16 %v647
    %v1827 = vunpack.c.l.b16 %v648
    %v1828 = vunpack.c.h.b16 %v648
    %v1829 = vunpack.c.l.b16 %v649
    %v1830 = vunpack.c.h.b16 %v649
    %v1831 = vunpack.c.l.b16 %v650
    %v1832 = vunpack.c.h.b16 %v650
    %v1833 = vunpack.c.l.b16 %v651
    %v1834 = vunpack.c.h.b16 %v651
    %v1835 = vunpack.c.l.b16 %v652
    %v1836 = vunpack.c.h.b16 %v652
    %v1837 = vunpack.c.l.b16 %v653
    %v1838 = vunpack.c.h.b16 %v653
    %v1839 = vunpack.c.l.b16 %v654
    %v1840 = vunpack.c.h.b16 %v654
    %v1841 = vunpack.c.l.b16 %v655
    %v1842 = vunpack.c.h.b16 %v655
    %v1843 = vunpack.c.l.b16 %v656
    %v1844 = vunpack.c.h.b16 %v656
    %v1845 = vunpack.c.l.b16 %v657
    %v1846 = vunpack.c.h.b16 %v657
    %v1847 = vunpack.c.l.b16 %v658
    %v1848 = vunpack.c.h.b16 %v658
    %v1849 = vunpack.c.l.b16 %v659
    %v1850 = vunpack.c.h.b16 %v659
    %v1851 = vunpack.c.l.b16 %v660
    %v1852 = vunpack.c.h.b16 %v660
    %v1853 = vunpack.c.l.b16 %v661
    %v1854 = vunpack.c.h.b16 %v661
    %v1855 = vunpack.c.l.b16 %v662
    %v1856 = vunpack.c.h.b16 %v662
    %v1857 = vunpack.c.l.b16 %v663
    %v1858 = vunpack.c.h.b16 %v663
    %v1859 = vunpack.c.l.b16 %v664
    %v1860 = vunpack.c.h.b16 %v664
    %v1861 = vunpack.c.l.b16 %v665
    %v1862 = vunpack.c.h.b16 %v665
    %v1863 = vunpack.c.l.b16 %v666
    %v1864 = vunpack.c.h.b16 %v666
    %v1865 = vunpack.c.l.b16 %v667
    %v1866 = vunpack.c.h.b16 %v667
    %v1867 = vunpack.c.l.b16 %v668
    %v1868 = vunpack.c.h.b16 %v668
    %v1869 = vunpack.c.l.b16 %v669
    %v1870 = vunpack.c.h.b16 %v669
    %v1871 = vunpack.c.l.b16 %v670
    %v1872 = vunpack.c.h.b16 %v670
    %v1873 = vunpack.c.l.b16 %v671
    %v1874 = vunpack.c.h.b16 %v671
    %v1875 = vunpack.c.l.b16 %v672
    %v1876 = vunpack.c.h.b16 %v672
    %v1877 = vunpack.c.l.b16 %v673
    %v1878 = vunpack.c.h.b16 %v673
    %v1879 = vunpack.c.l.b16 %v674
    %v1880 = vunpack.c.h.b16 %v674
    %v1881 = vunpack.c.l.b16 %v675
    %v1882 = vunpack.c.h.b16 %v675
    %v1883 = vunpack.c.l.b16 %v676
    %v1884 = vunpack.c.h.b16 %v676
    %v1885 = vunpack.c.l.b16 %v677
    %v1886 = vunpack.c.h.b16 %v677
    %v1887 = vunpack.c.l.b16 %v678
    %v1888 = vunpack.c.h.b16 %v678
    %v1889 = vunpack.c.l.b16 %v679
    %v1890 = vunpack.c.h.b16 %v679
    %v1891 = vunpack.c.l.b16 %v680
    %v1892 = vunpack.c.h.b16 %v680
    %v1893 = vunpack.c.l.b16 %v681
    %v1894 = vunpack.c.h.b16 %v681
    %v1895 = vunpack.c.l.b16 %v682
    %v1896 = vunpack.c.h.b16 %v682
    %v1897 = vunpack.c.l.b16 %v683
    %v1898 = vunpack.c.h.b16 %v683
    %v1899 = vunpack.c.l.b16 %v684
    %v1900 = vunpack.c.h.b16 %v684
    %v1901 = vunpack.c.l.b16 %v685
    %v1902 = vunpack.c.h.b16 %v685
    %v1903 = vunpack.c.l.b16 %v686
    %v1904 = vunpack.c.h.b16 %v686
    %v1905 = vunpack.c.l.b16 %v687
    %v1906 = vunpack.c.h.b16 %v687
    %v1907 = vunpack.c.l.b16 %v688
    %v1908 = vunpack.c.h.b16 %v688
    %v1909 = vunpack.c.l.b16 %v689
    %v1910 = vunpack.c.h.b16 %v689
    %v1911 = vunpack.c.l.b16 %v690
    %v1912 = vunpack.c.h.b16 %v690
    %v1913 = vunpack.c.l.b16 %v691
    %v1914 = vunpack.c.h.b16 %v691
    %v1915 = vunpack.c.l.b16 %v692
    %v1916 = vunpack.c.h.b16 %v692
    %v1917 = vunpack.c.l.b16 %v693
    %v1918 = vunpack.c.h.b16 %v693
    %v1919 = vunpack.c.l.b16 %v694
    %v1920 = vunpack.c.h.b16 %v694
    %v1921 = vunpack.c.l.b16 %v695
    %v1922 = vunpack.c.h.b16 %v695
    %v1923 = vunpack.c.l.b16 %v696
    %v1924 = vunpack.c.h.b16 %v696
    %v1925 = vunpack.c.l.b16 %v697
    %v1926 = vunpack.c.h.b16 %v697
    %v1927 = vunpack.c.l.b16 %v698
    %v1928 = vunpack.c.h.b16 %v698
    %v1929 = vunpack.c.l.b16 %v699
    %v1930 = vunpack.c.h.b16 %v699
    %v1931 = vunpack.c.l.b16 %v700
    %v1932 = vunpack.c.h.b16 %v700
    %v1933 = vunpack.c.l.b16 %v701
    %v1934 = vunpack.c.h.b16 %v701
    %v1935 = vunpack.c.l.b16 %v702
    %v1936 = vunpack.c.h.b16 %v702
    %v1937 = vunpack.c.l.b16 %v703
    %v1938 = vunpack.c.h.b16 %v703
    %v1939 = vunpack.c.l.b16 %v704
    %v1940 = vunpack.c.h.b16 %v704
    %v1941 = vunpack.c.l.b16 %v705
    %v1942 = vunpack.c.h.b16 %v705
    %v1943 = vunpack.c.l.b16 %v706
    %v1944 = vunpack.c.h.b16 %v706
    %v1945 = vunpack.c.l.b16 %v707
    %v1946 = vunpack.c.h.b16 %v707
    %v1947 = vunpack.c.l.b16 %v708
    %v1948 = vunpack.c.h.b16 %v708
    %v1949 = vunpack.c.l.b16 %v709
    %v1950 = vunpack.c.h.b16 %v709
    %v1951 = vunpack.c.l.b16 %v710
    %v1952 = vunpack.c.h.b16 %v710
    %v1953 = vunpack.c.l.b16 %v711
    %v1954 = vunpack.c.h.b16 %v711
    %v1955 = vunpack.c.l.b16 %v712
    %v1956 = vunpack.c.h.b16 %v712
    %v1957 = vunpack.c.l.b16 %v713
    %v1958 = vunpack.c.h.b16 %v713
    %v1959 = vunpack.c.l.b16 %v714
    %v1960 = vunpack.c.h.b16 %v714
    %v1961 = vunpack.c.l.b16 %v715
    %v1962 = vunpack.c.h.b16 %v715
    %v1963 = vunpack.c.l.b16 %v716
    %v1964 = vunpack.c.h.b16 %v716
    %v1965 = vunpack.c.l.b16 %v717
    %v1966 = vunpack.c.h.b16 %v717
    %v1967 = vunpack.c.l.b16 %v718
    %v1968 = vunpack.c.h.b16 %v718
    %v1969 = vunpack.c.l.b16 %v719
    %v1970 = vunpack.c.h.b16 %v719
    %v1971 = vunpack.c.l.b16 %v720
    %v1972 = vunpack.c.h.b16 %v720
    %v1973 = vunpack.c.l.b16 %v721
    %v1974 = vunpack.c.h.b16 %v721
    %v1975 = vunpack.c.l.b16 %v722
    %v1976 = vunpack.c.h.b16 %v722
    %v1977 = vunpack.c.l.b16 %v723
    %v1978 = vunpack.c.h.b16 %v723
    %v1979 = vunpack.c.l.b16 %v724
    %v1980 = vunpack.c.h.b16 %v724
    %v1981 = vunpack.c.l.b16 %v725
    %v1982 = vunpack.c.h.b16 %v725
    %v1983 = vunpack.c.l.b16 %v726
    %v1984 = vunpack.c.h.b16 %v726
    %v1985 = vunpack.c.l.b16 %v727
    %v1986 = vunpack.c.h.b16 %v727
    %v1987 = vunpack.c.l.b16 %v728
    %v1988 = vunpack.c.h.b16 %v728
    %v1989 = vunpack.c.l.b16 %v729
    %v1990 = vunpack.c.h.b16 %v729
    %v1991 = vunpack.c.l.b16 %v730
    %v1992 = vunpack.c.h.b16 %v730
    %v1993 = vunpack.c.l.b16 %v731
    %v1994 = vunpack.c.h.b16 %v731
    %v1995 = vunpack.c.l.b16 %v732
    %v1996 = vunpack.c.h.b16 %v732
    %v1997 = vunpack.c.l.b16 %v733
    %v1998 = vunpack.c.h.b16 %v733
    %v1999 = vunpack.c.l.b16 %v734
    %v2000 = vunpack.c.h.b16 %v734
    %v2001 = vunpack.c.l.b16 %v735
    %v2002 = vunpack.c.h.b16 %v735
    %v2003 = vunpack.c.l.b16 %v736
    %v2004 = vunpack.c.h.b16 %v736
    %v2005 = vunpack.c.l.b16 %v737
    %v2006 = vunpack.c.h.b16 %v737
    %v2007 = vunpack.c.l.b16 %v738
    %v2008 = vunpack.c.h.b16 %v738
    %v2009 = vunpack.c.l.b16 %v739
    %v2010 = vunpack.c.h.b16 %v739
    %v2011 = vunpack.c.l.b16 %v740
    %v2012 = vunpack.c.h.b16 %v740
    %v2013 = vunpack.c.l.b16 %v741
    %v2014 = vunpack.c.h.b16 %v741
    %v2015 = vunpack.c.l.b16 %v742
    %v2016 = vunpack.c.h.b16 %v742
    %v2017 = vunpack.c.l.b16 %v743
    %v2018 = vunpack.c.h.b16 %v743
    %v2019 = vunpack.c.l.b16 %v744
    %v2020 = vunpack.c.h.b16 %v744
    %v2021 = vunpack.c.l.b16 %v745
    %v2022 = vunpack.c.h.b16 %v745
    %v2023 = vunpack.c.l.b16 %v746
    %v2024 = vunpack.c.h.b16 %v746
    %v2025 = vunpack.c.l.b16 %v747
    %v2026 = vunpack.c.h.b16 %v747
    %v2027 = vunpack.c.l.b16 %v748
    %v2028 = vunpack.c.h.b16 %v748
    %v2029 = vunpack.c.l.b16 %v749
    %v2030 = vunpack.c.h.b16 %v749
    %v2031 = vunpack.c.l.b16 %v750
    %v2032 = vunpack.c.h.b16 %v750
    %v2033 = vunpack.c.l.b16 %v751
    %v2034 = vunpack.c.h.b16 %v751
    %v2035 = vunpack.c.l.b16 %v752
    %v2036 = vunpack.c.h.b16 %v752
    %v2037 = vunpack.c.l.b16 %v753
    %v2038 = vunpack.c.h.b16 %v753
    %v2039 = vunpack.c.l.b16 %v754
    %v2040 = vunpack.c.h.b16 %v754
    %v2041 = vunpack.c.l.b16 %v755
    %v2042 = vunpack.c.h.b16 %v755
    %v2043 = vunpack.c.l.b16 %v756
    %v2044 = vunpack.c.h.b16 %v756
    %v2045 = vunpack.c.l.b16 %v757
    %v2046 = vunpack.c.h.b16 %v757
    %v2047 = vunpack.c.l.b16 %v758
    %v2048 = vunpack.c.h.b16 %v758
    %v2049 = vunpack.c.l.b16 %v759
    %v2050 = vunpack.c.h.b16 %v759
    %v2051 = vunpack.c.l.b16 %v760
    %v2052 = vunpack.c.h.b16 %v760
    %v2053 = vunpack.c.l.b16 %v761
    %v2054 = vunpack.c.h.b16 %v761
    %v2055 = vunpack.c.l.b16 %v762
    %v2056 = vunpack.c.h.b16 %v762
    %v2057 = vunpack.c.l.b16 %v763
    %v2058 = vunpack.c.h.b16 %v763
    %v2059 = vunpack.c.l.b16 %v764
    %v2060 = vunpack.c.h.b16 %v764
    %v2061 = vunpack.c.l.b16 %v765
    %v2062 = vunpack.c.h.b16 %v765
    %v2063 = vunpack.c.l.b16 %v766
    %v2064 = vunpack.c.h.b16 %v766
    %v2065 = vunpack.c.l.b16 %v767
    %v2066 = vunpack.c.h.b16 %v767
    %v2067 = vunpack.c.l.b16 %v768
    %v2068 = vunpack.c.h.b16 %v768
    %v2069 = vunpack.c.l.b16 %v769
    %v2070 = vunpack.c.h.b16 %v769
    %v2071 = vunpack.c.l.b16 %v770
    %v2072 = vunpack.c.h.b16 %v770
    %v2073 = vunpack.c.l.b16 %v771
    %v2074 = vunpack.c.h.b16 %v771
    %v2075 = vunpack.c.l.b16 %v772
    %v2076 = vunpack.c.h.b16 %v772
    %v2077 = vunpack.c.l.b16 %v773
    %v2078 = vunpack.c.h.b16 %v773
    %v2079 = vunpack.c.l.b16 %v774
    %v2080 = vunpack.c.h.b16 %v774
    %v2081 = vunpack.c.l.b16 %v775
    %v2082 = vunpack.c.h.b16 %v775
    %v2083 = vunpack.c.l.b16 %v776
    %v2084 = vunpack.c.h.b16 %v776
    %v2085 = vunpack.c.l.b16 %v777
    %v2086 = vunpack.c.h.b16 %v777
    %v2087 = vunpack.c.l.b16 %v778
    %v2088 = vunpack.c.h.b16 %v778
    %v2089 = vunpack.c.l.b16 %v779
    %v2090 = vunpack.c.h.b16 %v779
    %v2091 = vunpack.c.l.b16 %v780
    %v2092 = vunpack.c.h.b16 %v780
    %v2093 = vunpack.c.l.b16 %v781
    %v2094 = vunpack.c.h.b16 %v781
    %v2095 = vunpack.c.l.b16 %v782
    %v2096 = vunpack.c.h.b16 %v782
    %v2097 = vunpack.c.l.b16 %v783
    %v2098 = vunpack.c.h.b16 %v783
    %v2099 = vunpack.c.l.b16 %v784
    %v2100 = vunpack.c.h.b16 %v784
    %v2101 = vunpack.c.l.b16 %v785
    %v2102 = vunpack.c.h.b16 %v785
    %v2103 = vunpack.c.l.b16 %v786
    %v2104 = vunpack.c.h.b16 %v786
    %v2105 = vunpack.c.l.b16 %v787
    %v2106 = vunpack.c.h.b16 %v787
    %v2107 = vunpack.c.l.b16 %v788
    %v2108 = vunpack.c.h.b16 %v788
    %v2109 = vunpack.c.l.b16 %v789
    %v2110 = vunpack.c.h.b16 %v789
    %v2111 = vunpack.c.l.b16 %v790
    %v2112 = vunpack.c.h.b16 %v790
    %v2113 = vunpack.c.l.b16 %v791
    %v2114 = vunpack.c.h.b16 %v791
    %v2115 = vunpack.c.l.b16 %v792
    %v2116 = vunpack.c.h.b16 %v792
    %v2117 = vunpack.c.l.b16 %v793
    %v2118 = vunpack.c.h.b16 %v793
    %v2119 = vunpack.c.l.b16 %v794
    %v2120 = vunpack.c.h.b16 %v794
    %v2121 = vunpack.c.l.b16 %v795
    %v2122 = vunpack.c.h.b16 %v795
    %v2123 = vunpack.c.l.b16 %v796
    %v2124 = vunpack.c.h.b16 %v796
    %v2125 = vunpack.c.l.b16 %v797
    %v2126 = vunpack.c.h.b16 %v797
    %v2127 = vunpack.c.l.b16 %v798
    %v2128 = vunpack.c.h.b16 %v798
    %v2129 = vunpack.c.l.b16 %v799
    %v2130 = vunpack.c.h.b16 %v799
    %v2131 = vunpack.c.l.b16 %v800
    %v2132 = vunpack.c.h.b16 %v800
    %v2133 = vunpack.c.l.b16 %v801
    %v2134 = vunpack.c.h.b16 %v801
    %v2135 = vunpack.c.l.b16 %v802
    %v2136 = vunpack.c.h.b16 %v802
    %v2137 = vunpack.c.l.b16 %v803
    %v2138 = vunpack.c.h.b16 %v803
    %v2139 = vunpack.c.l.b16 %v804
    %v2140 = vunpack.c.h.b16 %v804
    %v2141 = vunpack.c.l.b16 %v805
    %v2142 = vunpack.c.h.b16 %v805
    %v2143 = vunpack.c.l.b16 %v806
    %v2144 = vunpack.c.h.b16 %v806
    %v2145 = vunpack.c.l.b16 %v807
    %v2146 = vunpack.c.h.b16 %v807
    %v2147 = vunpack.c.l.b16 %v808
    %v2148 = vunpack.c.h.b16 %v808
    %v2149 = vunpack.c.l.b16 %v809
    %v2150 = vunpack.c.h.b16 %v809
    %v2151 = vunpack.c.l.b16 %v810
    %v2152 = vunpack.c.h.b16 %v810
    %v2153 = vunpack.c.l.b16 %v811
    %v2154 = vunpack.c.h.b16 %v811
    %v2155 = vunpack.c.l.b16 %v812
    %v2156 = vunpack.c.h.b16 %v812
    %v2157 = vunpack.c.l.b16 %v813
    %v2158 = vunpack.c.h.b16 %v813
    %v2159 = vunpack.c.l.b16 %v814
    %v2160 = vunpack.c.h.b16 %v814
    %v2161 = vunpack.c.l.b16 %v815
    %v2162 = vunpack.c.h.b16 %v815
    %v2163 = vunpack.c.l.b16 %v816
    %v2164 = vunpack.c.h.b16 %v816
    %v2165 = vunpack.c.l.b16 %v817
    %v2166 = vunpack.c.h.b16 %v817
    %v2167 = vunpack.c.l.b16 %v818
    %v2168 = vunpack.c.h.b16 %v818
    %v2169 = vunpack.c.l.b16 %v819
    %v2170 = vunpack.c.h.b16 %v819
    %v2171 = vunpack.c.l.b16 %v820
    %v2172 = vunpack.c.h.b16 %v820
    %v2173 = vunpack.c.l.b16 %v821
    %v2174 = vunpack.c.h.b16 %v821
    %v2175 = vunpack.c.l.b16 %v822
    %v2176 = vunpack.c.h.b16 %v822
    %v2177 = vunpack.c.l.b16 %v823
    %v2178 = vunpack.c.h.b16 %v823
    %v2179 = vunpack.c.l.b16 %v824
    %v2180 = vunpack.c.h.b16 %v824
    %v2181 = vunpack.c.l.b16 %v825
    %v2182 = vunpack.c.h.b16 %v825
    %v2183 = vunpack.c.l.b16 %v826
    %v2184 = vunpack.c.h.b16 %v826
    %v2185 = vunpack.c.l.b16 %v827
    %v2186 = vunpack.c.h.b16 %v827
    %v2187 = vunpack.c.l.b16 %v828
    %v2188 = vunpack.c.h.b16 %v828
    %v2189 = vunpack.c.l.b16 %v829
    %v2190 = vunpack.c.h.b16 %v829
    %v2191 = vunpack.c.l.b16 %v830
    %v2192 = vunpack.c.h.b16 %v830
    %v2193 = vunpack.c.l.b16 %v831
    %v2194 = vunpack.c.h.b16 %v831
    %v2195 = vunpack.c.l.b16 %v832
    %v2196 = vunpack.c.h.b16 %v832
    %v2197 = vunpack.c.l.b16 %v833
    %v2198 = vunpack.c.h.b16 %v833
    %v2199 = vunpack.c.l.b16 %v834
    %v2200 = vunpack.c.h.b16 %v834
    %v2201 = vunpack.c.l.b16 %v835
    %v2202 = vunpack.c.h.b16 %v835
    %v2203 = vunpack.c.l.b16 %v836
    %v2204 = vunpack.c.h.b16 %v836
    %v2205 = vunpack.c.l.b16 %v837
    %v2206 = vunpack.c.h.b16 %v837
    %v2207 = vunpack.c.l.b16 %v838
    %v2208 = vunpack.c.h.b16 %v838
    %v2209 = vunpack.c.l.b16 %v839
    %v2210 = vunpack.c.h.b16 %v839
    %v2211 = vunpack.c.l.b16 %v840
    %v2212 = vunpack.c.h.b16 %v840
    %v2213 = vunpack.c.l.b16 %v841
    %v2214 = vunpack.c.h.b16 %v841
    %v2215 = vunpack.c.l.b16 %v842
    %v2216 = vunpack.c.h.b16 %v842
    %v2217 = vunpack.c.l.b16 %v843
    %v2218 = vunpack.c.h.b16 %v843
    %v2219 = vunpack.c.l.b16 %v844
    %v2220 = vunpack.c.h.b16 %v844
    %v2221 = vunpack.c.l.b16 %v845
    %v2222 = vunpack.c.h.b16 %v845
    %v2223 = vunpack.c.l.b16 %v846
    %v2224 = vunpack.c.h.b16 %v846
    %v2225 = vunpack.c.l.b16 %v847
    %v2226 = vunpack.c.h.b16 %v847
    %v2227 = vunpack.c.l.b16 %v848
    %v2228 = vunpack.c.h.b16 %v848
    %v2229 = vunpack.c.l.b16 %v849
    %v2230 = vunpack.c.h.b16 %v849
    %v2231 = vunpack.c.l.b16 %v850
    %v2232 = vunpack.c.h.b16 %v850
    %v2233 = vunpack.c.l.b16 %v851
    %v2234 = vunpack.c.h.b16 %v851
    %v2235 = vunpack.c.l.b16 %v852
    %v2236 = vunpack.c.h.b16 %v852
    %v2237 = vunpack.c.l.b16 %v853
    %v2238 = vunpack.c.h.b16 %v853
    %v2239 = vunpack.c.l.b16 %v854
    %v2240 = vunpack.c.h.b16 %v854
    %v2241 = vunpack.c.l.b16 %v855
    %v2242 = vunpack.c.h.b16 %v855
    %v2243 = vunpack.c.l.b16 %v856
    %v2244 = vunpack.c.h.b16 %v856
    %v2245 = vunpack.c.l.b16 %v857
    %v2246 = vunpack.c.h.b16 %v857
    %v2247 = vunpack.c.l.b16 %v858
    %v2248 = vunpack.c.h.b16 %v858
    %v2249 = vunpack.c.l.b16 %v859
    %v2250 = vunpack.c.h.b16 %v859
    %v2251 = vunpack.c.l.b16 %v860
    %v2252 = vunpack.c.h.b16 %v860
    %v2253 = vunpack.c.l.b16 %v861
    %v2254 = vunpack.c.h.b16 %v861
    %v2255 = vunpack.c.l.b16 %v862
    %v2256 = vunpack.c.h.b16 %v862
    %v2257 = vunpack.c.l.b16 %v863
    %v2258 = vunpack.c.h.b16 %v863
    %v2259 = vunpack.c.l.b16 %v864
    %v2260 = vunpack.c.h.b16 %v864
    %v2261 = vunpack.c.l.b16 %v865
    %v2262 = vunpack.c.h.b16 %v865
    %v2263 = vunpack.c.l.b16 %v866
    %v2264 = vunpack.c.h.b16 %v866
    %v2265 = vunpack.c.l.b16 %v867
    %v2266 = vunpack.c.h.b16 %v867
    %v2267 = vunpack.c.l.b16 %v868
    %v2268 = vunpack.c.h.b16 %v868
    %v2269 = vunpack.c.l.b16 %v869
    %v2270 = vunpack.c.h.b16 %v869
    %v2271 = vunpack.c.l.b16 %v870
    %v2272 = vunpack.c.h.b16 %v870
    %v2273 = vunpack.c.l.b16 %v871
    %v2274 = vunpack.c.h.b16 %v871
    %v2275 = vunpack.c.l.b16 %v872
    %v2276 = vunpack.c.h.b16 %v872
    %v2277 = vunpack.c.l.b16 %v873
    %v2278 = vunpack.c.h.b16 %v873
    %v2279 = vunpack.c.l.b16 %v874
    %v2280 = vunpack.c.h.b16 %v874
    %v2281 = vunpack.c.l.b16 %v875
    %v2282 = vunpack.c.h.b16 %v875
    %v2283 = vunpack.c.l.b16 %v876
    %v2284 = vunpack.c.h.b16 %v876
    %v2285 = vunpack.c.l.b16 %v877
    %v2286 = vunpack.c.h.b16 %v877
    %v2287 = vunpack.c.l.b16 %v878
    %v2288 = vunpack.c.h.b16 %v878
    %v2289 = vunpack.c.l.b16 %v879
    %v2290 = vunpack.c.h.b16 %v879
    %v2291 = vunpack.c.l.b16 %v880
    %v2292 = vunpack.c.h.b16 %v880
    %v2293 = vunpack.c.l.b16 %v881
    %v2294 = vunpack.c.h.b16 %v881
    %v2295 = vunpack.c.l.b16 %v882
    %v2296 = vunpack.c.h.b16 %v882
    %v2297 = vunpack.c.l.b16 %v883
    %v2298 = vunpack.c.h.b16 %v883
    %v2299 = vunpack.c.l.b16 %v884
    %v2300 = vunpack.c.h.b16 %v884
    %v2301 = vunpack.c.l.b16 %v885
    %v2302 = vunpack.c.h.b16 %v885
    %v2303 = vunpack.c.l.b16 %v886
    %v2304 = vunpack.c.h.b16 %v886
    %v2305 = vunpack.c.l.b16 %v887
    %v2306 = vunpack.c.h.b16 %v887
    %v2307 = vunpack.c.l.b16 %v888
    %v2308 = vunpack.c.h.b16 %v888
    %v2309 = vunpack.c.l.b16 %v889
    %v2310 = vunpack.c.h.b16 %v889
    %v2311 = vunpack.c.l.b16 %v890
    %v2312 = vunpack.c.h.b16 %v890
    %v2313 = vunpack.c.l.b16 %v891
    %v2314 = vunpack.c.h.b16 %v891
    %v2315 = vunpack.c.l.b16 %v892
    %v2316 = vunpack.c.h.b16 %v892
    %v2317 = vunpack.c.l.b16 %v893
    %v2318 = vunpack.c.h.b16 %v893
    %v2319 = vunpack.c.l.b16 %v894
    %v2320 = vunpack.c.h.b16 %v894
    %v2321 = vunpack.c.l.b16 %v895
    %v2322 = vunpack.c.h.b16 %v895
    %v2323 = vunpack.c.l.b16 %v896
    %v2324 = vunpack.c.h.b16 %v896
    %v2325 = vunpack.c.l.b16 %v897
    %v2326 = vunpack.c.h.b16 %v897
    %v2327 = vunpack.c.l.b16 %v898
    %v2328 = vunpack.c.h.b16 %v898
    %v2329 = vunpack.c.l.b16 %v899
    %v2330 = vunpack.c.h.b16 %v899
    %v2331 = vunpack.c.l.b16 %v900
    %v2332 = vunpack.c.h.b16 %v900
    %v2333 = vunpack.c.l.b16 %v901
    %v2334 = vunpack.c.h.b16 %v901
    %v2335 = vunpack.c.l.b16 %v902
    %v2336 = vunpack.c.h.b16 %v902
    %v2337 = vunpack.c.l.b16 %v903
    %v2338 = vunpack.c.h.b16 %v903
    %v2339 = vunpack.c.l.b16 %v904
    %v2340 = vunpack.c.h.b16 %v904
    %v2341 = vunpack.c.l.b16 %v905
    %v2342 = vunpack.c.h.b16 %v905
    %v2343 = vunpack.c.l.b16 %v906
    %v2344 = vunpack.c.h.b16 %v906
    %v2345 = vunpack.c.l.b16 %v907
    %v2346 = vunpack.c.h.b16 %v907
    %v2347 = vunpack.c.l.b16 %v908
    %v2348 = vunpack.c.h.b16 %v908
    %v2349 = vunpack.c.l.b16 %v909
    %v2350 = vunpack.c.h.b16 %v909
    %v2351 = vunpack.c.l.b16 %v910
    %v2352 = vunpack.c.h.b16 %v910
    %v2353 = vunpack.c.l.b16 %v911
    %v2354 = vunpack.c.h.b16 %v911
    %v2355 = vunpack.c.l.b16 %v912
    %v2356 = vunpack.c.h.b16 %v912
    %v2357 = vunpack.c.l.b16 %v913
    %v2358 = vunpack.c.h.b16 %v913
    %v2359 = vunpack.c.l.b16 %v914
    %v2360 = vunpack.c.h.b16 %v914
    %v2361 = vunpack.c.l.b16 %v915
    %v2362 = vunpack.c.h.b16 %v915
    %v2363 = vunpack.c.l.b16 %v916
    %v2364 = vunpack.c.h.b16 %v916
    %v2365 = vunpack.c.l.b16 %v917
    %v2366 = vunpack.c.h.b16 %v917
    %v2367 = vunpack.c.l.b16 %v918
    %v2368 = vunpack.c.h.b16 %v918
    %v2369 = vunpack.c.l.b16 %v919
    %v2370 = vunpack.c.h.b16 %v919
    %v2371 = vunpack.c.l.b16 %v920
    %v2372 = vunpack.c.h.b16 %v920
    %v2373 = vunpack.c.l.b16 %v921
    %v2374 = vunpack.c.h.b16 %v921
    %v2375 = vunpack.c.l.b16 %v922
    %v2376 = vunpack.c.h.b16 %v922
    %v2377 = vunpack.c.l.b16 %v923
    %v2378 = vunpack.c.h.b16 %v923
    %v2379 = vunpack.c.l.b16 %v924
    %v2380 = vunpack.c.h.b16 %v924
    %v2381 = vunpack.c.l.b16 %v925
    %v2382 = vunpack.c.h.b16 %v925
    %v2383 = vunpack.c.l.b16 %v926
    %v2384 = vunpack.c.h.b16 %v926
    %v2385 = vunpack.c.l.b16 %v927
    %v2386 = vunpack.c.h.b16 %v927
    %v2387 = vunpack.c.l.b16 %v928
    %v2388 = vunpack.c.h.b16 %v928
    %v2389 = vunpack.c.l.b16 %v929
    %v2390 = vunpack.c.h.b16 %v929
    %v2391 = vunpack.c.l.b16 %v930
    %v2392 = vunpack.c.h.b16 %v930
    %v2393 = vunpack.c.l.b16 %v931
    %v2394 = vunpack.c.h.b16 %v931
    %v2395 = vunpack.c.l.b16 %v932
    %v2396 = vunpack.c.h.b16 %v932
    %v2397 = vunpack.c.l.b16 %v933
    %v2398 = vunpack.c.h.b16 %v933
    %v2399 = vunpack.c.l.b16 %v934
    %v2400 = vunpack.c.h.b16 %v934
    %v2401 = vunpack.c.l.b16 %v935
    %v2402 = vunpack.c.h.b16 %v935
    %v2403 = vunpack.c.l.b16 %v936
    %v2404 = vunpack.c.h.b16 %v936
    %v2405 = vunpack.c.l.b16 %v937
    %v2406 = vunpack.c.h.b16 %v937
    %v2407 = vunpack.c.l.b16 %v938
    %v2408 = vunpack.c.h.b16 %v938
    %v2409 = vunpack.c.l.b16 %v939
    %v2410 = vunpack.c.h.b16 %v939
    %v2411 = vunpack.c.l.b16 %v940
    %v2412 = vunpack.c.h.b16 %v940
    %v2413 = vunpack.c.l.b16 %v941
    %v2414 = vunpack.c.h.b16 %v941
    %v2415 = vunpack.c.l.b16 %v942
    %v2416 = vunpack.c.h.b16 %v942
    %v2417 = vunpack.c.l.b16 %v943
    %v2418 = vunpack.c.h.b16 %v943
    %v2419 = vunpack.c.l.b16 %v944
    %v2420 = vunpack.c.h.b16 %v944
    %v2421 = vunpack.c.l.b16 %v945
    %v2422 = vunpack.c.h.b16 %v945
    %v2423 = vunpack.c.l.b16 %v946
    %v2424 = vunpack.c.h.b16 %v946
    %v2425 = vunpack.c.l.b16 %v947
    %v2426 = vunpack.c.h.b16 %v947
    %v2427 = vunpack.c.l.b16 %v948
    %v2428 = vunpack.c.h.b16 %v948
    %v2429 = vunpack.c.l.b16 %v949
    %v2430 = vunpack.c.h.b16 %v949
    %v2431 = vunpack.c.l.b16 %v950
    %v2432 = vunpack.c.h.b16 %v950
    %v2433 = vunpack.c.l.b16 %v951
    %v2434 = vunpack.c.h.b16 %v951
    %v2435 = vunpack.c.l.b16 %v952
    %v2436 = vunpack.c.h.b16 %v952
    %v2437 = vunpack.c.l.b16 %v953
    %v2438 = vunpack.c.h.b16 %v953
    %v2439 = vunpack.c.l.b16 %v954
    %v2440 = vunpack.c.h.b16 %v954
    %v2441 = vunpack.c.l.b16 %v955
    %v2442 = vunpack.c.h.b16 %v955
    %v2443 = vunpack.c.l.b16 %v956
    %v2444 = vunpack.c.h.b16 %v956
    %v2445 = vunpack.c.l.b16 %v957
    %v2446 = vunpack.c.h.b16 %v957
    %v2447 = vunpack.c.l.b16 %v958
    %v2448 = vunpack.c.h.b16 %v958
    %v2449 = vunpack.c.l.b16 %v959
    %v2450 = vunpack.c.h.b16 %v959
    %v2451 = vunpack.c.l.b16 %v960
    %v2452 = vunpack.c.h.b16 %v960
    %v2453 = vunpack.c.l.b16 %v961
    %v2454 = vunpack.c.h.b16 %v961
    %v2455 = vunpack.c.l.b16 %v962
    %v2456 = vunpack.c.h.b16 %v962
    %v2457 = vunpack.c.l.b16 %v963
    %v2458 = vunpack.c.h.b16 %v963
    %v2459 = vunpack.c.l.b16 %v964
    %v2460 = vunpack.c.h.b16 %v964
    %v2461 = vunpack.c.l.b16 %v965
    %v2462 = vunpack.c.h.b16 %v965
    %v2463 = vunpack.c.l.b16 %v966
    %v2464 = vunpack.c.h.b16 %v966
    %v2465 = vunpack.c.l.b16 %v967
    %v2466 = vunpack.c.h.b16 %v967
    %v2467 = vunpack.c.l.b16 %v968
    %v2468 = vunpack.c.h.b16 %v968
    %v2469 = vunpack.c.l.b16 %v969
    %v2470 = vunpack.c.h.b16 %v969
    %v2471 = vunpack.c.l.b16 %v970
    %v2472 = vunpack.c.h.b16 %v970
    %v2473 = vunpack.c.l.b16 %v971
    %v2474 = vunpack.c.h.b16 %v971
    %v2475 = vunpack.c.l.b16 %v972
    %v2476 = vunpack.c.h.b16 %v972
    %v2477 = vunpack.c.l.b16 %v973
    %v2478 = vunpack.c.h.b16 %v973
    %v2479 = vunpack.c.l.b16 %v974
    %v2480 = vunpack.c.h.b16 %v974
    %v2481 = vunpack.c.l.b16 %v975
    %v2482 = vunpack.c.h.b16 %v975
    %v2483 = vunpack.c.l.b16 %v976
    %v2484 = vunpack.c.h.b16 %v976
    %v2485 = vunpack.c.l.b16 %v977
    %v2486 = vunpack.c.h.b16 %v977
    %v2487 = vunpack.c.l.b16 %v978
    %v2488 = vunpack.c.h.b16 %v978
    %v2489 = vunpack.c.l.b16 %v979
    %v2490 = vunpack.c.h.b16 %v979
    %v2491 = vunpack.c.l.b16 %v980
    %v2492 = vunpack.c.h.b16 %v980
    %v2493 = vunpack.c.l.b16 %v981
    %v2494 = vunpack.c.h.b16 %v981
    %v2495 = vunpack.c.l.b16 %v982
    %v2496 = vunpack.c.h.b16 %v982
    %v2497 = vunpack.c.l.b16 %v983
    %v2498 = vunpack.c.h.b16 %v983
    %v2499 = vunpack.c.l.b16 %v984
    %v2500 = vunpack.c.h.b16 %v984
    %v2501 = vunpack.c.l.b16 %v985
    %v2502 = vunpack.c.h.b16 %v985
    %v2503 = vunpack.c.l.b16 %v986
    %v2504 = vunpack.c.h.b16 %v986
    %v2505 = vunpack.c.l.b16 %v987
    %v2506 = vunpack.c.h.b16 %v987
    %v2507 = vunpack.c.l.b16 %v988
    %v2508 = vunpack.c.h.b16 %v988
    %v2509 = vunpack.c.l.b16 %v989
    %v2510 = vunpack.c.h.b16 %v989
    %v2511 = vunpack.c.l.b16 %v990
    %v2512 = vunpack.c.h.b16 %v990
    %v2513 = vunpack.c.l.b16 %v991
    %v2514 = vunpack.c.h.b16 %v991
    %v2515 = vunpack.c.l.b16 %v992
    %v2516 = vunpack.c.h.b16 %v992
    %v2517 = vunpack.c.l.b16 %v993
    %v2518 = vunpack.c.h.b16 %v993
    %v2519 = vunpack.c.l.b16 %v994
    %v2520 = vunpack.c.h.b16 %v994
    %v2521 = vunpack.c.l.b16 %v995
    %v2522 = vunpack.c.h.b16 %v995
    %v2523 = vunpack.c.l.b16 %v996
    %v2524 = vunpack.c.h.b16 %v996
    %v2525 = vunpack.c.l.b16 %v997
    %v2526 = vunpack.c.h.b16 %v997
    %v2527 = vunpack.c.l.b16 %v998
    %v2528 = vunpack.c.h.b16 %v998
    %v2529 = vunpack.c.l.b16 %v999
    %v2530 = vunpack.c.h.b16 %v999
    %v2531 = vunpack.c.l.b16 %v1000
    %v2532 = vunpack.c.h.b16 %v1000
    %v2533 = vunpack.c.l.b16 %v1001
    %v2534 = vunpack.c.h.b16 %v1001
    %v2535 = vunpack.c.l.b16 %v1002
    %v2536 = vunpack.c.h.b16 %v1002
    %v2537 = vunpack.c.l.b16 %v1003
    %v2538 = vunpack.c.h.b16 %v1003
    %v2539 = vunpack.c.l.b16 %v1004
    %v2540 = vunpack.c.h.b16 %v1004
    %v2541 = vpack.c.b16 %v1521, %v1517
    %v2542 = vpack.c.b16 %v1522, %v1518
    %v2543 = vpack.c.b16 %v1523, %v1519
    %v2544 = vpack.c.b16 %v1524, %v1520
    %v2545 = vpack.c.b16 %v1529, %v1525
    %v2546 = vpack.c.b16 %v1530, %v1526
    %v2547 = vpack.c.b16 %v1531, %v1527
    %v2548 = vpack.c.b16 %v1532, %v1528
    %v2549 = vpack.c.b16 %v1537, %v1533
    %v2550 = vpack.c.b16 %v1538, %v1534
    %v2551 = vpack.c.b16 %v1539, %v1535
    %v2552 = vpack.c.b16 %v1540, %v1536
    %v2553 = vpack.c.b16 %v1545, %v1541
    %v2554 = vpack.c.b16 %v1546, %v1542
    %v2555 = vpack.c.b16 %v1547, %v1543
    %v2556 = vpack.c.b16 %v1548, %v1544
    %v2557 = vpack.c.b16 %v1553, %v1549
    %v2558 = vpack.c.b16 %v1554, %v1550
    %v2559 = vpack.c.b16 %v1555, %v1551
    %v2560 = vpack.c.b16 %v1556, %v1552
    %v2561 = vpack.c.b16 %v1561, %v1557
    %v2562 = vpack.c.b16 %v1562, %v1558
    %v2563 = vpack.c.b16 %v1563, %v1559
    %v2564 = vpack.c.b16 %v1564, %v1560
    %v2565 = vpack.c.b16 %v1569, %v1565
    %v2566 = vpack.c.b16 %v1570, %v1566
    %v2567 = vpack.c.b16 %v1571, %v1567
    %v2568 = vpack.c.b16 %v1572, %v1568
    %v2569 = vpack.c.b16 %v1577, %v1573
    %v2570 = vpack.c.b16 %v1578, %v1574
    %v2571 = vpack.c.b16 %v1579, %v1575
    %v2572 = vpack.c.b16 %v1580, %v1576
    %v2573 = vpack.c.b16 %v1585, %v1581
    %v2574 = vpack.c.b16 %v1586, %v1582
    %v2575 = vpack.c.b16 %v1587, %v1583
    %v2576 = vpack.c.b16 %v1588, %v1584
    %v2577 = vpack.c.b16 %v1593, %v1589
    %v2578 = vpack.c.b16 %v1594, %v1590
    %v2579 = vpack.c.b16 %v1595, %v1591
    %v2580 = vpack.c.b16 %v1596, %v1592
    %v2581 = vpack.c.b16 %v1601, %v1597
    %v2582 = vpack.c.b16 %v1602, %v1598
    %v2583 = vpack.c.b16 %v1603, %v1599
    %v2584 = vpack.c.b16 %v1604, %v1600
    %v2585 = vpack.c.b16 %v1609, %v1605
    %v2586 = vpack.c.b16 %v1610, %v1606
    %v2587 = vpack.c.b16 %v1611, %v1607
    %v2588 = vpack.c.b16 %v1612, %v1608
    %v2589 = vpack.c.b16 %v1617, %v1613
    %v2590 = vpack.c.b16 %v1618, %v1614
    %v2591 = vpack.c.b16 %v1619, %v1615
    %v2592 = vpack.c.b16 %v1620, %v1616
    %v2593 = vpack.c.b16 %v1625, %v1621
    %v2594 = vpack.c.b16 %v1626, %v1622
    %v2595 = vpack.c.b16 %v1627, %v1623
    %v2596 = vpack.c.b16 %v1628, %v1624
    %v2597 = vpack.c.b16 %v1633, %v1629
    %v2598 = vpack.c.b16 %v1634, %v1630
    %v2599 = vpack.c.b16 %v1635, %v1631
    %v2600 = vpack.c.b16 %v1636, %v1632
    %v2601 = vpack.c.b16 %v1641, %v1637
    %v2602 = vpack.c.b16 %v1642, %v1638
    %v2603 = vpack.c.b16 %v1643, %v1639
    %v2604 = vpack.c.b16 %v1644, %v1640
    %v2605 = vpack.c.b16 %v1649, %v1645
    %v2606 = vpack.c.b16 %v1650, %v1646
    %v2607 = vpack.c.b16 %v1651, %v1647
    %v2608 = vpack.c.b16 %v1652, %v1648
    %v2609 = vpack.c.b16 %v1657, %v1653
    %v2610 = vpack.c.b16 %v1658, %v1654
    %v2611 = vpack.c.b16 %v1659, %v1655
    %v2612 = vpack.c.b16 %v1660, %v1656
    %v2613 = vpack.c.b16 %v1665, %v1661
    %v2614 = vpack.c.b16 %v1666, %v1662
    %v2615 = vpack.c.b16 %v1667, %v1663
    %v2616 = vpack.c.b16 %v1668, %v1664
    %v2617 = vpack.c.b16 %v1673, %v1669
    %v2618 = vpack.c.b16 %v1674, %v1670
    %v2619 = vpack.c.b16 %v1675, %v1671
    %v2620 = vpack.c.b16 %v1676, %v1672
    %v2621 = vpack.c.b16 %v1681, %v1677
    %v2622 = vpack.c.b16 %v1682, %v1678
    %v2623 = vpack.c.b16 %v1683, %v1679
    %v2624 = vpack.c.b16 %v1684, %v1680
    %v2625 = vpack.c.b16 %v1689, %v1685
    %v2626 = vpack.c.b16 %v1690, %v1686
    %v2627 = vpack.c.b16 %v1691, %v1687
    %v2628 = vpack.c.b16 %v1692, %v1688
    %v2629 = vpack.c.b16 %v1697, %v1693
    %v2630 = vpack.c.b16 %v1698, %v1694
    %v2631 = vpack.c.b16 %v1699, %v1695
    %v2632 = vpack.c.b16 %v1700, %v1696
    %v2633 = vpack.c.b16 %v1705, %v1701
    %v2634 = vpack.c.b16 %v1706, %v1702
    %v2635 = vpack.c.b16 %v1707, %v1703
    %v2636 = vpack.c.b16 %v1708, %v1704
    %v2637 = vpack.c.b16 %v1713, %v1709
    %v2638 = vpack.c.b16 %v1714, %v1710
    %v2639 = vpack.c.b16 %v1715, %v1711
    %v2640 = vpack.c.b16 %v1716, %v1712
    %v2641 = vpack.c.b16 %v1721, %v1717
    %v2642 = vpack.c.b16 %v1722, %v1718
    %v2643 = vpack.c.b16 %v1723, %v1719
    %v2644 = vpack.c.b16 %v1724, %v1720
    %v2645 = vpack.c.b16 %v1729, %v1725
    %v2646 = vpack.c.b16 %v1730, %v1726
    %v2647 = vpack.c.b16 %v1731, %v1727
    %v2648 = vpack.c.b16 %v1732, %v1728
    %v2649 = vpack.c.b16 %v1737, %v1733
    %v2650 = vpack.c.b16 %v1738, %v1734
    %v2651 = vpack.c.b16 %v1739, %v1735
    %v2652 = vpack.c.b16 %v1740, %v1736
    %v2653 = vpack.c.b16 %v1745, %v1741
    %v2654 = vpack.c.b16 %v1746, %v1742
    %v2655 = vpack.c.b16 %v1747, %v1743
    %v2656 = vpack.c.b16 %v1748, %v1744
    %v2657 = vpack.c.b16 %v1753, %v1749
    %v2658 = vpack.c.b16 %v1754, %v1750
    %v2659 = vpack.c.b16 %v1755, %v1751
    %v2660 = vpack.c.b16 %v1756, %v1752
    %v2661 = vpack.c.b16 %v1761, %v1757
    %v2662 = vpack.c.b16 %v1762, %v1758
    %v2663 = vpack.c.b16 %v1763, %v1759
    %v2664 = vpack.c.b16 %v1764, %v1760
    %v2665 = vpack.c.b16 %v1769, %v1765
    %v2666 = vpack.c.b16 %v1770, %v1766
    %v2667 = vpack.c.b16 %v1771, %v1767
    %v2668 = vpack.c.b16 %v1772, %v1768
    %v2669 = vpack.c.b16 %v1777, %v1773
    %v2670 = vpack.c.b16 %v1778, %v1774
    %v2671 = vpack.c.b16 %v1779, %v1775
    %v2672 = vpack.c.b16 %v1780, %v1776
    %v2673 = vpack.c.b16 %v1785, %v1781
    %v2674 = vpack.c.b16 %v1786, %v1782
    %v2675 = vpack.c.b16 %v1787, %v1783
    %v2676 = vpack.c.b16 %v1788, %v1784
    %v2677 = vpack.c.b16 %v1793, %v1789
    %v2678 = vpack.c.b16 %v1794, %v1790
    %v2679 = vpack.c.b16 %v1795, %v1791
    %v2680 = vpack.c.b16 %v1796, %v1792
    %v2681 = vpack.c.b16 %v1801, %v1797
    %v2682 = vpack.c.b16 %v1802, %v1798
    %v2683 = vpack.c.b16 %v1803, %v1799
    %v2684 = vpack.c.b16 %v1804, %v1800
    %v2685 = vpack.c.b16 %v1809, %v1805
    %v2686 = vpack.c.b16 %v1810, %v1806
    %v2687 = vpack.c.b16 %v1811, %v1807
    %v2688 = vpack.c.b16 %v1812, %v1808
    %v2689 = vpack.c.b16 %v1817, %v1813
    %v2690 = vpack.c.b16 %v1818, %v1814
    %v2691 = vpack.c.b16 %v1819, %v1815
    %v2692 = vpack.c.b16 %v1820, %v1816
    %v2693 = vpack.c.b16 %v1825, %v1821
    %v2694 = vpack.c.b16 %v1826, %v1822
    %v2695 = vpack.c.b16 %v1827, %v1823
    %v2696 = vpack.c.b16 %v1828, %v1824
    %v2697 = vpack.c.b16 %v1833, %v1829
    %v2698 = vpack.c.b16 %v1834, %v1830
    %v2699 = vpack.c.b16 %v1835, %v1831
    %v2700 = vpack.c.b16 %v1836, %v1832
    %v2701 = vpack.c.b16 %v1841, %v1837
    %v2702 = vpack.c.b16 %v1842, %v1838
    %v2703 = vpack.c.b16 %v1843, %v1839
    %v2704 = vpack.c.b16 %v1844, %v1840
    %v2705 = vpack.c.b16 %v1849, %v1845
    %v2706 = vpack.c.b16 %v1850, %v1846
    %v2707 = vpack.c.b16 %v1851, %v1847
    %v2708 = vpack.c.b16 %v1852, %v1848
    %v2709 = vpack.c.b16 %v1857, %v1853
    %v2710 = vpack.c.b16 %v1858, %v1854
    %v2711 = vpack.c.b16 %v1859, %v1855
    %v2712 = vpack.c.b16 %v1860, %v1856
    %v2713 = vpack.c.b16 %v1865, %v1861
    %v2714 = vpack.c.b16 %v1866, %v1862
    %v2715 = vpack.c.b16 %v1867, %v1863
    %v2716 = vpack.c.b16 %v1868, %v1864
    %v2717 = vpack.c.b16 %v1873, %v1869
    %v2718 = vpack.c.b16 %v1874, %v1870
    %v2719 = vpack.c.b16 %v1875, %v1871
    %v2720 = vpack.c.b16 %v1876, %v1872
    %v2721 = vpack.c.b16 %v1881, %v1877
    %v2722 = vpack.c.b16 %v1882, %v1878
    %v2723 = vpack.c.b16 %v1883, %v1879
    %v2724 = vpack.c.b16 %v1884, %v1880
    %v2725 = vpack.c.b16 %v1889, %v1885
    %v2726 = vpack.c.b16 %v1890, %v1886
    %v2727 = vpack.c.b16 %v1891, %v1887
    %v2728 = vpack.c.b16 %v1892, %v1888
    %v2729 = vpack.c.b16 %v1897, %v1893
    %v2730 = vpack.c.b16 %v1898, %v1894
    %v2731 = vpack.c.b16 %v1899, %v1895
    %v2732 = vpack.c.b16 %v1900, %v1896
    %v2733 = vpack.c.b16 %v1905, %v1901
    %v2734 = vpack.c.b16 %v1906, %v1902
    %v2735 = vpack.c.b16 %v1907, %v1903
    %v2736 = vpack.c.b16 %v1908, %v1904
    %v2737 = vpack.c.b16 %v1913, %v1909
    %v2738 = vpack.c.b16 %v1914, %v1910
    %v2739 = vpack.c.b16 %v1915, %v1911
    %v2740 = vpack.c.b16 %v1916, %v1912
    %v2741 = vpack.c.b16 %v1921, %v1917
    %v2742 = vpack.c.b16 %v1922, %v1918
    %v2743 = vpack.c.b16 %v1923, %v1919
    %v2744 = vpack.c.b16 %v1924, %v1920
    %v2745 = vpack.c.b16 %v1929, %v1925
    %v2746 = vpack.c.b16 %v1930, %v1926
    %v2747 = vpack.c.b16 %v1931, %v1927
    %v2748 = vpack.c.b16 %v1932, %v1928
    %v2749 = vpack.c.b16 %v1937, %v1933
    %v2750 = vpack.c.b16 %v1938, %v1934
    %v2751 = vpack.c.b16 %v1939, %v1935
    %v2752 = vpack.c.b16 %v1940, %v1936
    %v2753 = vpack.c.b16 %v1945, %v1941
    %v2754 = vpack.c.b16 %v1946, %v1942
    %v2755 = vpack.c.b16 %v1947, %v1943
    %v2756 = vpack.c.b16 %v1948, %v1944
    %v2757 = vpack.c.b16 %v1953, %v1949
    %v2758 = vpack.c.b16 %v1954, %v1950
    %v2759 = vpack.c.b16 %v1955, %v1951
    %v2760 = vpack.c.b16 %v1956, %v1952
    %v2761 = vpack.c.b16 %v1961, %v1957
    %v2762 = vpack.c.b16 %v1962, %v1958
    %v2763 = vpack.c.b16 %v1963, %v1959
    %v2764 = vpack.c.b16 %v1964, %v1960
    %v2765 = vpack.c.b16 %v1969, %v1965
    %v2766 = vpack.c.b16 %v1970, %v1966
    %v2767 = vpack.c.b16 %v1971, %v1967
    %v2768 = vpack.c.b16 %v1972, %v1968
    %v2769 = vpack.c.b16 %v1977, %v1973
    %v2770 = vpack.c.b16 %v1978, %v1974
    %v2771 = vpack.c.b16 %v1979, %v1975
    %v2772 = vpack.c.b16 %v1980, %v1976
    %v2773 = vpack.c.b16 %v1985, %v1981
    %v2774 = vpack.c.b16 %v1986, %v1982
    %v2775 = vpack.c.b16 %v1987, %v1983
    %v2776 = vpack.c.b16 %v1988, %v1984
    %v2777 = vpack.c.b16 %v1993, %v1989
    %v2778 = vpack.c.b16 %v1994, %v1990
    %v2779 = vpack.c.b16 %v1995, %v1991
    %v2780 = vpack.c.b16 %v1996, %v1992
    %v2781 = vpack.c.b16 %v2001, %v1997
    %v2782 = vpack.c.b16 %v2002, %v1998
    %v2783 = vpack.c.b16 %v2003, %v1999
    %v2784 = vpack.c.b16 %v2004, %v2000
    %v2785 = vpack.c.b16 %v2009, %v2005
    %v2786 = vpack.c.b16 %v2010, %v2006
    %v2787 = vpack.c.b16 %v2011, %v2007
    %v2788 = vpack.c.b16 %v2012, %v2008
    %v2789 = vpack.c.b16 %v2017, %v2013
    %v2790 = vpack.c.b16 %v2018, %v2014
    %v2791 = vpack.c.b16 %v2019, %v2015
    %v2792 = vpack.c.b16 %v2020, %v2016
    %v2793 = vpack.c.b16 %v2025, %v2021
    %v2794 = vpack.c.b16 %v2026, %v2022
    %v2795 = vpack.c.b16 %v2027, %v2023
    %v2796 = vpack.c.b16 %v2028, %v2024
    %v2797 = vpack.c.b16 %v2033, %v2029
    %v2798 = vpack.c.b16 %v2034, %v2030
    %v2799 = vpack.c.b16 %v2035, %v2031
    %v2800 = vpack.c.b16 %v2036, %v2032
    %v2801 = vpack.c.b16 %v2041, %v2037
    %v2802 = vpack.c.b16 %v2042, %v2038
    %v2803 = vpack.c.b16 %v2043, %v2039
    %v2804 = vpack.c.b16 %v2044, %v2040
    %v2805 = vpack.c.b16 %v2049, %v2045
    %v2806 = vpack.c.b16 %v2050, %v2046
    %v2807 = vpack.c.b16 %v2051, %v2047
    %v2808 = vpack.c.b16 %v2052, %v2048
    %v2809 = vpack.c.b16 %v2057, %v2053
    %v2810 = vpack.c.b16 %v2058, %v2054
    %v2811 = vpack.c.b16 %v2059, %v2055
    %v2812 = vpack.c.b16 %v2060, %v2056
    %v2813 = vpack.c.b16 %v2065, %v2061
    %v2814 = vpack.c.b16 %v2066, %v2062
    %v2815 = vpack.c.b16 %v2067, %v2063
    %v2816 = vpack.c.b16 %v2068, %v2064
    %v2817 = vpack.c.b16 %v2073, %v2069
    %v2818 = vpack.c.b16 %v2074, %v2070
    %v2819 = vpack.c.b16 %v2075, %v2071
    %v2820 = vpack.c.b16 %v2076, %v2072
    %v2821 = vpack.c.b16 %v2081, %v2077
    %v2822 = vpack.c.b16 %v2082, %v2078
    %v2823 = vpack.c.b16 %v2083, %v2079
    %v2824 = vpack.c.b16 %v2084, %v2080
    %v2825 = vpack.c.b16 %v2089, %v2085
    %v2826 = vpack.c.b16 %v2090, %v2086
    %v2827 = vpack.c.b16 %v2091, %v2087
    %v2828 = vpack.c.b16 %v2092, %v2088
    %v2829 = vpack.c.b16 %v2097, %v2093
    %v2830 = vpack.c.b16 %v2098, %v2094
    %v2831 = vpack.c.b16 %v2099, %v2095
    %v2832 = vpack.c.b16 %v2100, %v2096
    %v2833 = vpack.c.b16 %v2105, %v2101
    %v2834 = vpack.c.b16 %v2106, %v2102
    %v2835 = vpack.c.b16 %v2107, %v2103
    %v2836 = vpack.c.b16 %v2108, %v2104
    %v2837 = vpack.c.b16 %v2113, %v2109
    %v2838 = vpack.c.b16 %v2114, %v2110
    %v2839 = vpack.c.b16 %v2115, %v2111
    %v2840 = vpack.c.b16 %v2116, %v2112
    %v2841 = vpack.c.b16 %v2121, %v2117
    %v2842 = vpack.c.b16 %v2122, %v2118
    %v2843 = vpack.c.b16 %v2123, %v2119
    %v2844 = vpack.c.b16 %v2124, %v2120
    %v2845 = vpack.c.b16 %v2129, %v2125
    %v2846 = vpack.c.b16 %v2130, %v2126
    %v2847 = vpack.c.b16 %v2131, %v2127
    %v2848 = vpack.c.b16 %v2132, %v2128
    %v2849 = vpack.c.b16 %v2137, %v2133
    %v2850 = vpack.c.b16 %v2138, %v2134
    %v2851 = vpack.c.b16 %v2139, %v2135
    %v2852 = vpack.c.b16 %v2140, %v2136
    %v2853 = vpack.c.b16 %v2145, %v2141
    %v2854 = vpack.c.b16 %v2146, %v2142
    %v2855 = vpack.c.b16 %v2147, %v2143
    %v2856 = vpack.c.b16 %v2148, %v2144
    %v2857 = vpack.c.b16 %v2153, %v2149
    %v2858 = vpack.c.b16 %v2154, %v2150
    %v2859 = vpack.c.b16 %v2155, %v2151
    %v2860 = vpack.c.b16 %v2156, %v2152
    %v2861 = vpack.c.b16 %v2161, %v2157
    %v2862 = vpack.c.b16 %v2162, %v2158
    %v2863 = vpack.c.b16 %v2163, %v2159
    %v2864 = vpack.c.b16 %v2164, %v2160
    %v2865 = vpack.c.b16 %v2169, %v2165
    %v2866 = vpack.c.b16 %v2170, %v2166
    %v2867 = vpack.c.b16 %v2171, %v2167
    %v2868 = vpack.c.b16 %v2172, %v2168
    %v2869 = vpack.c.b16 %v2177, %v2173
    %v2870 = vpack.c.b16 %v2178, %v2174
    %v2871 = vpack.c.b16 %v2179, %v2175
    %v2872 = vpack.c.b16 %v2180, %v2176
    %v2873 = vpack.c.b16 %v2185, %v2181
    %v2874 = vpack.c.b16 %v2186, %v2182
    %v2875 = vpack.c.b16 %v2187, %v2183
    %v2876 = vpack.c.b16 %v2188, %v2184
    %v2877 = vpack.c.b16 %v2193, %v2189
    %v2878 = vpack.c.b16 %v2194, %v2190
    %v2879 = vpack.c.b16 %v2195, %v2191
    %v2880 = vpack.c.b16 %v2196, %v2192
    %v2881 = vpack.c.b16 %v2201, %v2197
    %v2882 = vpack.c.b16 %v2202, %v2198
    %v2883 = vpack.c.b16 %v2203, %v2199
    %v2884 = vpack.c.b16 %v2204, %v2200
    %v2885 = vpack.c.b16 %v2209, %v2205
    %v2886 = vpack.c.b16 %v2210, %v2206
    %v2887 = vpack.c.b16 %v2211, %v2207
    %v2888 = vpack.c.b16 %v2212, %v2208
    %v2889 = vpack.c.b16 %v2217, %v2213
    %v2890 = vpack.c.b16 %v2218, %v2214
    %v2891 = vpack.c.b16 %v2219, %v2215
    %v2892 = vpack.c.b16 %v2220, %v2216
    %v2893 = vpack.c.b16 %v2225, %v2221
    %v2894 = vpack.c.b16 %v2226, %v2222
    %v2895 = vpack.c.b16 %v2227, %v2223
    %v2896 = vpack.c.b16 %v2228, %v2224
    %v2897 = vpack.c.b16 %v2233, %v2229
    %v2898 = vpack.c.b16 %v2234, %v2230
    %v2899 = vpack.c.b16 %v2235, %v2231
    %v2900 = vpack.c.b16 %v2236, %v2232
    %v2901 = vpack.c.b16 %v2241, %v2237
    %v2902 = vpack.c.b16 %v2242, %v2238
    %v2903 = vpack.c.b16 %v2243, %v2239
    %v2904 = vpack.c.b16 %v2244, %v2240
    %v2905 = vpack.c.b16 %v2249, %v2245
    %v2906 = vpack.c.b16 %v2250, %v2246
    %v2907 = vpack.c.b16 %v2251, %v2247
    %v2908 = vpack.c.b16 %v2252, %v2248
    %v2909 = vpack.c.b16 %v2257, %v2253
    %v2910 = vpack.c.b16 %v2258, %v2254
    %v2911 = vpack.c.b16 %v2259, %v2255
    %v2912 = vpack.c.b16 %v2260, %v2256
    %v2913 = vpack.c.b16 %v2265, %v2261
    %v2914 = vpack.c.b16 %v2266, %v2262
    %v2915 = vpack.c.b16 %v2267, %v2263
    %v2916 = vpack.c.b16 %v2268, %v2264
    %v2917 = vpack.c.b16 %v2273, %v2269
    %v2918 = vpack.c.b16 %v2274, %v2270
    %v2919 = vpack.c.b16 %v2275, %v2271
    %v2920 = vpack.c.b16 %v2276, %v2272
    %v2921 = vpack.c.b16 %v2281, %v2277
    %v2922 = vpack.c.b16 %v2282, %v2278
    %v2923 = vpack.c.b16 %v2283, %v2279
    %v2924 = vpack.c.b16 %v2284, %v2280
    %v2925 = vpack.c.b16 %v2289, %v2285
    %v2926 = vpack.c.b16 %v2290, %v2286
    %v2927 = vpack.c.b16 %v2291, %v2287
    %v2928 = vpack.c.b16 %v2292, %v2288
    %v2929 = vpack.c.b16 %v2297, %v2293
    %v2930 = vpack.c.b16 %v2298, %v2294
    %v2931 = vpack.c.b16 %v2299, %v2295
    %v2932 = vpack.c.b16 %v2300, %v2296
    %v2933 = vpack.c.b16 %v2305, %v2301
    %v2934 = vpack.c.b16 %v2306, %v2302
    %v2935 = vpack.c.b16 %v2307, %v2303
    %v2936 = vpack.c.b16 %v2308, %v2304
    %v2937 = vpack.c.b16 %v2313, %v2309
    %v2938 = vpack.c.b16 %v2314, %v2310
    %v2939 = vpack.c.b16 %v2315, %v2311
    %v2940 = vpack.c.b16 %v2316, %v2312
    %v2941 = vpack.c.b16 %v2321, %v2317
    %v2942 = vpack.c.b16 %v2322, %v2318
    %v2943 = vpack.c.b16 %v2323, %v2319
    %v2944 = vpack.c.b16 %v2324, %v2320
    %v2945 = vpack.c.b16 %v2329, %v2325
    %v2946 = vpack.c.b16 %v2330, %v2326
    %v2947 = vpack.c.b16 %v2331, %v2327
    %v2948 = vpack.c.b16 %v2332, %v2328
    %v2949 = vpack.c.b16 %v2337, %v2333
    %v2950 = vpack.c.b16 %v2338, %v2334
    %v2951 = vpack.c.b16 %v2339, %v2335
    %v2952 = vpack.c.b16 %v2340, %v2336
    %v2953 = vpack.c.b16 %v2345, %v2341
    %v2954 = vpack.c.b16 %v2346, %v2342
    %v2955 = vpack.c.b16 %v2347, %v2343
    %v2956 = vpack.c.b16 %v2348, %v2344
    %v2957 = vpack.c.b16 %v2353, %v2349
    %v2958 = vpack.c.b16 %v2354, %v2350
    %v2959 = vpack.c.b16 %v2355, %v2351
    %v2960 = vpack.c.b16 %v2356, %v2352
    %v2961 = vpack.c.b16 %v2361, %v2357
    %v2962 = vpack.c.b16 %v2362, %v2358
    %v2963 = vpack.c.b16 %v2363, %v2359
    %v2964 = vpack.c.b16 %v2364, %v2360
    %v2965 = vpack.c.b16 %v2369, %v2365
    %v2966 = vpack.c.b16 %v2370, %v2366
    %v2967 = vpack.c.b16 %v2371, %v2367
    %v2968 = vpack.c.b16 %v2372, %v2368
    %v2969 = vpack.c.b16 %v2377, %v2373
    %v2970 = vpack.c.b16 %v2378, %v2374
    %v2971 = vpack.c.b16 %v2379, %v2375
    %v2972 = vpack.c.b16 %v2380, %v2376
    %v2973 = vpack.c.b16 %v2385, %v2381
    %v2974 = vpack.c.b16 %v2386, %v2382
    %v2975 = vpack.c.b16 %v2387, %v2383
    %v2976 = vpack.c.b16 %v2388, %v2384
    %v2977 = vpack.c.b16 %v2393, %v2389
    %v2978 = vpack.c.b16 %v2394, %v2390
    %v2979 = vpack.c.b16 %v2395, %v2391
    %v2980 = vpack.c.b16 %v2396, %v2392
    %v2981 = vpack.c.b16 %v2401, %v2397
    %v2982 = vpack.c.b16 %v2402, %v2398
    %v2983 = vpack.c.b16 %v2403, %v2399
    %v2984 = vpack.c.b16 %v2404, %v2400
    %v2985 = vpack.c.b16 %v2409, %v2405
    %v2986 = vpack.c.b16 %v2410, %v2406
    %v2987 = vpack.c.b16 %v2411, %v2407
    %v2988 = vpack.c.b16 %v2412, %v2408
    %v2989 = vpack.c.b16 %v2417, %v2413
    %v2990 = vpack.c.b16 %v2418, %v2414
    %v2991 = vpack.c.b16 %v2419, %v2415
    %v2992 = vpack.c.b16 %v2420, %v2416
    %v2993 = vpack.c.b16 %v2425, %v2421
    %v2994 = vpack.c.b16 %v2426, %v2422
    %v2995 = vpack.c.b16 %v2427, %v2423
    %v2996 = vpack.c.b16 %v2428, %v2424
    %v2997 = vpack.c.b16 %v2433, %v2429
    %v2998 = vpack.c.b16 %v2434, %v2430
    %v2999 = vpack.c.b16 %v2435, %v2431
    %v3000 = vpack.c.b16 %v2436, %v2432
    %v3001 = vpack.c.b16 %v2441, %v2437
    %v3002 = vpack.c.b16 %v2442, %v2438
    %v3003 = vpack.c.b16 %v2443, %v2439
    %v3004 = vpack.c.b16 %v2444, %v2440
    %v3005 = vpack.c.b16 %v2449, %v2445
    %v3006 = vpack.c.b16 %v2450, %v2446
    %v3007 = vpack.c.b16 %v2451, %v2447
    %v3008 = vpack.c.b16 %v2452, %v2448
    %v3009 = vpack.c.b16 %v2457, %v2453
    %v3010 = vpack.c.b16 %v2458, %v2454
    %v3011 = vpack.c.b16 %v2459, %v2455
    %v3012 = vpack.c.b16 %v2460, %v2456
    %v3013 = vpack.c.b16 %v2465, %v2461
    %v3014 = vpack.c.b16 %v2466, %v2462
    %v3015 = vpack.c.b16 %v2467, %v2463
    %v3016 = vpack.c.b16 %v2468, %v2464
    %v3017 = vpack.c.b16 %v2473, %v2469
    %v3018 = vpack.c.b16 %v2474, %v2470
    %v3019 = vpack.c.b16 %v2475, %v2471
    %v3020 = vpack.c.b16 %v2476, %v2472
    %v3021 = vpack.c.b16 %v2481, %v2477
    %v3022 = vpack.c.b16 %v2482, %v2478
    %v3023 = vpack.c.b16 %v2483, %v2479
    %v3024 = vpack.c.b16 %v2484, %v2480
    %v3025 = vpack.c.b16 %v2489, %v2485
    %v3026 = vpack.c.b16 %v2490, %v2486
    %v3027 = vpack.c.b16 %v2491, %v2487
    %v3028 = vpack.c.b16 %v2492, %v2488
    %v3029 = vpack.c.b16 %v2497, %v2493
    %v3030 = vpack.c.b16 %v2498, %v2494
    %v3031 = vpack.c.b16 %v2499, %v2495
    %v3032 = vpack.c.b16 %v2500, %v2496
    %v3033 = vpack.c.b16 %v2505, %v2501
    %v3034 = vpack.c.b16 %v2506, %v2502
    %v3035 = vpack.c.b16 %v2507, %v2503
    %v3036 = vpack.c.b16 %v2508, %v2504
    %v3037 = vpack.c.b16 %v2513, %v2509
    %v3038 = vpack.c.b16 %v2514, %v2510
    %v3039 = vpack.c.b16 %v2515, %v2511
    %v3040 = vpack.c.b16 %v2516, %v2512
    %v3041 = vpack.c.b16 %v2521, %v2517
    %v3042 = vpack.c.b16 %v2522, %v2518
    %v3043 = vpack.c.b16 %v2523, %v2519
    %v3044 = vpack.c.b16 %v2524, %v2520
    %v3045 = vpack.c.b16 %v2529, %v2525
    %v3046 = vpack.c.b16 %v2530, %v2526
    %v3047 = vpack.c.b16 %v2531, %v2527
    %v3048 = vpack.c.b16 %v2532, %v2528
    %v3049 = vpack.c.b16 %v2537, %v2533
    %v3050 = vpack.c.b16 %v2538, %v2534
    %v3051 = vpack.c.b16 %v2539, %v2535
    %v3052 = vpack.c.b16 %v2540, %v2536
    %3565 = vmatprep.subr.bf16.mxu0 %v2542
    %3566 = vmatpush1.bf16.msra.mxu0 %v2541
    %3567 = vmatprep.subr.bf16.mxu0 %v2546
    %3568 = vmatpush1.bf16.msra.mxu0 %v2545
    %3569 = vmatprep.subr.bf16.mxu0 %v2550
    %3570 = vmatpush1.bf16.msra.mxu0 %v2549
    %3571 = vmatprep.subr.bf16.mxu0 %v2554
    %3572 = vmatpush1.bf16.msra.mxu0 %v2553
    %3573 = vmatprep.subr.bf16.mxu0 %v2558
    %3574 = vmatpush1.bf16.msra.mxu0 %v2557
    %3575 = vmatprep.subr.bf16.mxu0 %v2562
    %3576 = vmatpush1.bf16.msra.mxu0 %v2561
    %3577 = vmatprep.subr.bf16.mxu0 %v2566
    %3578 = vmatpush1.bf16.msra.mxu0 %v2565
    %3579 = vmatprep.subr.bf16.mxu0 %v2570
    %3580 = vmatpush1.bf16.msra.mxu0 %v2569
    %3581 = vmatprep.subr.bf16.mxu0 %v2574
    %3582 = vmatpush1.bf16.msra.mxu0 %v2573
    %3583 = vmatprep.subr.bf16.mxu0 %v2578
    %3584 = vmatpush1.bf16.msra.mxu0 %v2577
    %3585 = vmatprep.subr.bf16.mxu0 %v2582
    %3586 = vmatpush1.bf16.msra.mxu0 %v2581
    %3587 = vmatprep.subr.bf16.mxu0 %v2586
    %3588 = vmatpush1.bf16.msra.mxu0 %v2585
    %3589 = vmatprep.subr.bf16.mxu0 %v2590
    %3590 = vmatpush1.bf16.msra.mxu0 %v2589
    %3591 = vmatprep.subr.bf16.mxu0 %v2594
    %3592 = vmatpush1.bf16.msra.mxu0 %v2593
    %3593 = vmatprep.subr.bf16.mxu0 %v2598
    %3594 = vmatpush1.bf16.msra.mxu0 %v2597
    %3595 = vmatprep.subr.bf16.mxu0 %v2602
    %3596 = vmatpush1.bf16.msra.mxu0 %v2601
    %3597 = vmatprep.mubr.bf16.mxu0 %v448
    %3598 = vmatmul.mubr.bf16.gmra.mrb[0].mxu0 %v447
    %v3599 = vpop.f32.mrb[0].mxu0
    %v3600 = vadd.f32 0.0, %v3599
    %v3601 = vpop.f32.mrb[0].mxu0
    %v3602 = vadd.f32 0.0, %v3601
    %v3603 = vpop.f32.mrb[0].mxu0
    %v3604 = vpop.f32.mrb[0].mxu0
    %3605 = vdwg.mxu0
    %3606 = vmatprep.subr.bf16.mxu0 %v2606
    %3607 = vmatpush1.bf16.msra.mxu0 %v2605
    %3608 = vmatprep.subr.bf16.mxu0 %v2610
    %3609 = vmatpush1.bf16.msra.mxu0 %v2609
    %3610 = vmatprep.subr.bf16.mxu0 %v2614
    %3611 = vmatpush1.bf16.msra.mxu0 %v2613
    %3612 = vmatprep.subr.bf16.mxu0 %v2618
    %3613 = vmatpush1.bf16.msra.mxu0 %v2617
    %3614 = vmatprep.subr.bf16.mxu0 %v2622
    %3615 = vmatpush1.bf16.msra.mxu0 %v2621
    %3616 = vmatprep.subr.bf16.mxu0 %v2626
    %3617 = vmatpush1.bf16.msra.mxu0 %v2625
    %3618 = vmatprep.subr.bf16.mxu0 %v2630
    %3619 = vmatpush1.bf16.msra.mxu0 %v2629
    %3620 = vmatprep.subr.bf16.mxu0 %v2634
    %3621 = vmatpush1.bf16.msra.mxu0 %v2633
    %3622 = vmatprep.subr.bf16.mxu0 %v2638
    %3623 = vmatpush1.bf16.msra.mxu0 %v2637
    %3624 = vmatprep.subr.bf16.mxu0 %v2642
    %3625 = vmatpush1.bf16.msra.mxu0 %v2641
    %3626 = vmatprep.subr.bf16.mxu0 %v2646
    %3627 = vmatpush1.bf16.msra.mxu0 %v2645
    %3628 = vmatprep.subr.bf16.mxu0 %v2650
    %3629 = vmatpush1.bf16.msra.mxu0 %v2649
    %3630 = vmatprep.subr.bf16.mxu0 %v2654
    %3631 = vmatpush1.bf16.msra.mxu0 %v2653
    %3632 = vmatprep.subr.bf16.mxu0 %v2658
    %3633 = vmatpush1.bf16.msra.mxu0 %v2657
    %3634 = vmatprep.subr.bf16.mxu0 %v2662
    %3635 = vmatpush1.bf16.msra.mxu0 %v2661
    %3636 = vmatprep.subr.bf16.mxu0 %v2666
    %3637 = vmatpush1.bf16.msra.mxu0 %v2665
    %3638 = vmatprep.mubr.bf16.mxu0 %v454
    %3639 = vmatmul.mubr.bf16.gmra.mrb[0].mxu0 %v453
    %v3640 = vpop.f32.mrb[0].mxu0
    %v3641 = vadd.f32 %v3600, %v3640
    %v3642 = vpop.f32.mrb[0].mxu0
    %v3643 = vadd.f32 %v3602, %v3642
    %v3644 = vpop.f32.mrb[0].mxu0
    %v3645 = vpop.f32.mrb[0].mxu0
    %3646 = vdwg.mxu0
    %3647 = vmatprep.subr.bf16.mxu0 %v2670
    %3648 = vmatpush1.bf16.msra.mxu0 %v2669
    %3649 = vmatprep.subr.bf16.mxu0 %v2674
    %3650 = vmatpush1.bf16.msra.mxu0 %v2673
    %3651 = vmatprep.subr.bf16.mxu0 %v2678
    %3652 = vmatpush1.bf16.msra.mxu0 %v2677
    %3653 = vmatprep.subr.bf16.mxu0 %v2682
    %3654 = vmatpush1.bf16.msra.mxu0 %v2681
    %3655 = vmatprep.subr.bf16.mxu0 %v2686
    %3656 = vmatpush1.bf16.msra.mxu0 %v2685
    %3657 = vmatprep.subr.bf16.mxu0 %v2690
    %3658 = vmatpush1.bf16.msra.mxu0 %v2689
    %3659 = vmatprep.subr.bf16.mxu0 %v2694
    %3660 = vmatpush1.bf16.msra.mxu0 %v2693
    %3661 = vmatprep.subr.bf16.mxu0 %v2698
    %3662 = vmatpush1.bf16.msra.mxu0 %v2697
    %3663 = vmatprep.subr.bf16.mxu0 %v2702
    %3664 = vmatpush1.bf16.msra.mxu0 %v2701
    %3665 = vmatprep.subr.bf16.mxu0 %v2706
    %3666 = vmatpush1.bf16.msra.mxu0 %v2705
    %3667 = vmatprep.subr.bf16.mxu0 %v2710
    %3668 = vmatpush1.bf16.msra.mxu0 %v2709
    %3669 = vmatprep.subr.bf16.mxu0 %v2714
    %3670 = vmatpush1.bf16.msra.mxu0 %v2713
    %3671 = vmatprep.subr.bf16.mxu0 %v2718
    %3672 = vmatpush1.bf16.msra.mxu0 %v2717
    %3673 = vmatprep.subr.bf16.mxu0 %v2722
    %3674 = vmatpush1.bf16.msra.mxu0 %v2721
    %3675 = vmatprep.subr.bf16.mxu0 %v2726
    %3676 = vmatpush1.bf16.msra.mxu0 %v2725
    %3677 = vmatprep.subr.bf16.mxu0 %v2730
    %3678 = vmatpush1.bf16.msra.mxu0 %v2729
    %3679 = vmatprep.mubr.bf16.mxu0 %v460
    %3680 = vmatmul.mubr.bf16.gmra.mrb[0].mxu0 %v459
    %v3681 = vpop.f32.mrb[0].mxu0
    %v3682 = vadd.f32 %v3641, %v3681
    %v3683 = vpop.f32.mrb[0].mxu0
    %v3684 = vadd.f32 %v3643, %v3683
    %v3685 = vpop.f32.mrb[0].mxu0
    %v3686 = vpop.f32.mrb[0].mxu0
    %3687 = vdwg.mxu0
    %3688 = vmatprep.subr.bf16.mxu0 %v2734
    %3689 = vmatpush1.bf16.msra.mxu0 %v2733
    %3690 = vmatprep.subr.bf16.mxu0 %v2738
    %3691 = vmatpush1.bf16.msra.mxu0 %v2737
    %3692 = vmatprep.subr.bf16.mxu0 %v2742
    %3693 = vmatpush1.bf16.msra.mxu0 %v2741
    %3694 = vmatprep.subr.bf16.mxu0 %v2746
    %3695 = vmatpush1.bf16.msra.mxu0 %v2745
    %3696 = vmatprep.subr.bf16.mxu0 %v2750
    %3697 = vmatpush1.bf16.msra.mxu0 %v2749
    %3698 = vmatprep.subr.bf16.mxu0 %v2754
    %3699 = vmatpush1.bf16.msra.mxu0 %v2753
    %3700 = vmatprep.subr.bf16.mxu0 %v2758
    %3701 = vmatpush1.bf16.msra.mxu0 %v2757
    %3702 = vmatprep.subr.bf16.mxu0 %v2762
    %3703 = vmatpush1.bf16.msra.mxu0 %v2761
    %3704 = vmatprep.subr.bf16.mxu0 %v2766
    %3705 = vmatpush1.bf16.msra.mxu0 %v2765
    %3706 = vmatprep.subr.bf16.mxu0 %v2770
    %3707 = vmatpush1.bf16.msra.mxu0 %v2769
    %3708 = vmatprep.subr.bf16.mxu0 %v2774
    %3709 = vmatpush1.bf16.msra.mxu0 %v2773
    %3710 = vmatprep.subr.bf16.mxu0 %v2778
    %3711 = vmatpush1.bf16.msra.mxu0 %v2777
    %3712 = vmatprep.subr.bf16.mxu0 %v2782
    %3713 = vmatpush1.bf16.msra.mxu0 %v2781
    %3714 = vmatprep.subr.bf16.mxu0 %v2786
    %3715 = vmatpush1.bf16.msra.mxu0 %v2785
    %3716 = vmatprep.subr.bf16.mxu0 %v2790
    %3717 = vmatpush1.bf16.msra.mxu0 %v2789
    %3718 = vmatprep.subr.bf16.mxu0 %v2794
    %3719 = vmatpush1.bf16.msra.mxu0 %v2793
    %3720 = vmatprep.mubr.bf16.mxu0 %v466
    %3721 = vmatmul.mubr.bf16.gmra.mrb[0].mxu0 %v465
    %v3722 = vpop.f32.mrb[0].mxu0
    %v3723 = vadd.f32 %v3682, %v3722
    %v3724 = vpop.f32.mrb[0].mxu0
    %v3725 = vadd.f32 %v3684, %v3724
    %v3726 = vpop.f32.mrb[0].mxu0
    %v3727 = vpop.f32.mrb[0].mxu0
    %3728 = vdwg.mxu0
    %3729 = vmatprep.subr.bf16.mxu0 %v2798
    %3730 = vmatpush1.bf16.msra.mxu0 %v2797
    %3731 = vmatprep.subr.bf16.mxu0 %v2802
    %3732 = vmatpush1.bf16.msra.mxu0 %v2801
    %3733 = vmatprep.subr.bf16.mxu0 %v2806
    %3734 = vmatpush1.bf16.msra.mxu0 %v2805
    %3735 = vmatprep.subr.bf16.mxu0 %v2810
    %3736 = vmatpush1.bf16.msra.mxu0 %v2809
    %3737 = vmatprep.subr.bf16.mxu0 %v2814
    %3738 = vmatpush1.bf16.msra.mxu0 %v2813
    %3739 = vmatprep.subr.bf16.mxu0 %v2818
    %3740 = vmatpush1.bf16.msra.mxu0 %v2817
    %3741 = vmatprep.subr.bf16.mxu0 %v2822
    %3742 = vmatpush1.bf16.msra.mxu0 %v2821
    %3743 = vmatprep.subr.bf16.mxu0 %v2826
    %3744 = vmatpush1.bf16.msra.mxu0 %v2825
    %3745 = vmatprep.subr.bf16.mxu0 %v2830
    %3746 = vmatpush1.bf16.msra.mxu0 %v2829
    %3747 = vmatprep.subr.bf16.mxu0 %v2834
    %3748 = vmatpush1.bf16.msra.mxu0 %v2833
    %3749 = vmatprep.subr.bf16.mxu0 %v2838
    %3750 = vmatpush1.bf16.msra.mxu0 %v2837
    %3751 = vmatprep.subr.bf16.mxu0 %v2842
    %3752 = vmatpush1.bf16.msra.mxu0 %v2841
    %3753 = vmatprep.subr.bf16.mxu0 %v2846
    %3754 = vmatpush1.bf16.msra.mxu0 %v2845
    %3755 = vmatprep.subr.bf16.mxu0 %v2850
    %3756 = vmatpush1.bf16.msra.mxu0 %v2849
    %3757 = vmatprep.subr.bf16.mxu0 %v2854
    %3758 = vmatpush1.bf16.msra.mxu0 %v2853
    %3759 = vmatprep.subr.bf16.mxu0 %v2858
    %3760 = vmatpush1.bf16.msra.mxu0 %v2857
    %3761 = vmatprep.mubr.bf16.mxu0 %v472
    %3762 = vmatmul.mubr.bf16.gmra.mrb[0].mxu0 %v471
    %v3763 = vpop.f32.mrb[0].mxu0
    %v3764 = vadd.f32 %v3723, %v3763
    %v3765 = vpop.f32.mrb[0].mxu0
    %v3766 = vadd.f32 %v3725, %v3765
    %v3767 = vpop.f32.mrb[0].mxu0
    %v3768 = vpop.f32.mrb[0].mxu0
    %3769 = vdwg.mxu0
    %3770 = vmatprep.subr.bf16.mxu0 %v2862
    %3771 = vmatpush1.bf16.msra.mxu0 %v2861
    %3772 = vmatprep.subr.bf16.mxu0 %v2866
    %3773 = vmatpush1.bf16.msra.mxu0 %v2865
    %3774 = vmatprep.subr.bf16.mxu0 %v2870
    %3775 = vmatpush1.bf16.msra.mxu0 %v2869
    %3776 = vmatprep.subr.bf16.mxu0 %v2874
    %3777 = vmatpush1.bf16.msra.mxu0 %v2873
    %3778 = vmatprep.subr.bf16.mxu0 %v2878
    %3779 = vmatpush1.bf16.msra.mxu0 %v2877
    %3780 = vmatprep.subr.bf16.mxu0 %v2882
    %3781 = vmatpush1.bf16.msra.mxu0 %v2881
    %3782 = vmatprep.subr.bf16.mxu0 %v2886
    %3783 = vmatpush1.bf16.msra.mxu0 %v2885
    %3784 = vmatprep.subr.bf16.mxu0 %v2890
    %3785 = vmatpush1.bf16.msra.mxu0 %v2889
    %3786 = vmatprep.subr.bf16.mxu0 %v2894
    %3787 = vmatpush1.bf16.msra.mxu0 %v2893
    %3788 = vmatprep.subr.bf16.mxu0 %v2898
    %3789 = vmatpush1.bf16.msra.mxu0 %v2897
    %3790 = vmatprep.subr.bf16.mxu0 %v2902
    %3791 = vmatpush1.bf16.msra.mxu0 %v2901
    %3792 = vmatprep.subr.bf16.mxu0 %v2906
    %3793 = vmatpush1.bf16.msra.mxu0 %v2905
    %3794 = vmatprep.subr.bf16.mxu0 %v2910
    %3795 = vmatpush1.bf16.msra.mxu0 %v2909
    %3796 = vmatprep.subr.bf16.mxu0 %v2914
    %3797 = vmatpush1.bf16.msra.mxu0 %v2913
    %3798 = vmatprep.subr.bf16.mxu0 %v2918
    %3799 = vmatpush1.bf16.msra.mxu0 %v2917
    %3800 = vmatprep.subr.bf16.mxu0 %v2922
    %3801 = vmatpush1.bf16.msra.mxu0 %v2921
    %3802 = vmatprep.mubr.bf16.mxu0 %v478
    %3803 = vmatmul.mubr.bf16.gmra.mrb[0].mxu0 %v477
    %v3804 = vpop.f32.mrb[0].mxu0
    %v3805 = vadd.f32 %v3764, %v3804
    %v3806 = vpop.f32.mrb[0].mxu0
    %v3807 = vadd.f32 %v3766, %v3806
    %v3808 = vpop.f32.mrb[0].mxu0
    %v3809 = vpop.f32.mrb[0].mxu0
    %3810 = vdwg.mxu0
    %3811 = vmatprep.subr.bf16.mxu0 %v2926
    %3812 = vmatpush1.bf16.msra.mxu0 %v2925
    %3813 = vmatprep.subr.bf16.mxu0 %v2930
    %3814 = vmatpush1.bf16.msra.mxu0 %v2929
    %3815 = vmatprep.subr.bf16.mxu0 %v2934
    %3816 = vmatpush1.bf16.msra.mxu0 %v2933
    %3817 = vmatprep.subr.bf16.mxu0 %v2938
    %3818 = vmatpush1.bf16.msra.mxu0 %v2937
    %3819 = vmatprep.subr.bf16.mxu0 %v2942
    %3820 = vmatpush1.bf16.msra.mxu0 %v2941
    %3821 = vmatprep.subr.bf16.mxu0 %v2946
    %3822 = vmatpush1.bf16.msra.mxu0 %v2945
    %3823 = vmatprep.subr.bf16.mxu0 %v2950
    %3824 = vmatpush1.bf16.msra.mxu0 %v2949
    %3825 = vmatprep.subr.bf16.mxu0 %v2954
    %3826 = vmatpush1.bf16.msra.mxu0 %v2953
    %3827 = vmatprep.subr.bf16.mxu0 %v2958
    %3828 = vmatpush1.bf16.msra.mxu0 %v2957
    %3829 = vmatprep.subr.bf16.mxu0 %v2962
    %3830 = vmatpush1.bf16.msra.mxu0 %v2961
    %3831 = vmatprep.subr.bf16.mxu0 %v2966
    %3832 = vmatpush1.bf16.msra.mxu0 %v2965
    %3833 = vmatprep.subr.bf16.mxu0 %v2970
    %3834 = vmatpush1.bf16.msra.mxu0 %v2969
    %3835 = vmatprep.subr.bf16.mxu0 %v2974
    %3836 = vmatpush1.bf16.msra.mxu0 %v2973
    %3837 = vmatprep.subr.bf16.mxu0 %v2978
    %3838 = vmatpush1.bf16.msra.mxu0 %v2977
    %3839 = vmatprep.subr.bf16.mxu0 %v2982
    %3840 = vmatpush1.bf16.msra.mxu0 %v2981
    %3841 = vmatprep.subr.bf16.mxu0 %v2986
    %3842 = vmatpush1.bf16.msra.mxu0 %v2985
    %3843 = vmatprep.mubr.bf16.mxu0 %v484
    %3844 = vmatmul.mubr.bf16.gmra.mrb[0].mxu0 %v483
    %v3845 = vpop.f32.mrb[0].mxu0
    %v3846 = vadd.f32 %v3805, %v3845
    %v3847 = vpop.f32.mrb[0].mxu0
    %v3848 = vadd.f32 %v3807, %v3847
    %v3849 = vpop.f32.mrb[0].mxu0
    %v3850 = vpop.f32.mrb[0].mxu0
    %3851 = vdwg.mxu0
    %3852 = vmatprep.subr.bf16.mxu0 %v2990
    %3853 = vmatpush1.bf16.msra.mxu0 %v2989
    %3854 = vmatprep.subr.bf16.mxu0 %v2994
    %3855 = vmatpush1.bf16.msra.mxu0 %v2993
    %3856 = vmatprep.subr.bf16.mxu0 %v2998
    %3857 = vmatpush1.bf16.msra.mxu0 %v2997
    %3858 = vmatprep.subr.bf16.mxu0 %v3002
    %3859 = vmatpush1.bf16.msra.mxu0 %v3001
    %3860 = vmatprep.subr.bf16.mxu0 %v3006
    %3861 = vmatpush1.bf16.msra.mxu0 %v3005
    %3862 = vmatprep.subr.bf16.mxu0 %v3010
    %3863 = vmatpush1.bf16.msra.mxu0 %v3009
    %3864 = vmatprep.subr.bf16.mxu0 %v3014
    %3865 = vmatpush1.bf16.msra.mxu0 %v3013
    %3866 = vmatprep.subr.bf16.mxu0 %v3018
    %3867 = vmatpush1.bf16.msra.mxu0 %v3017
    %3868 = vmatprep.subr.bf16.mxu0 %v3022
    %3869 = vmatpush1.bf16.msra.mxu0 %v3021
    %3870 = vmatprep.subr.bf16.mxu0 %v3026
    %3871 = vmatpush1.bf16.msra.mxu0 %v3025
    %3872 = vmatprep.subr.bf16.mxu0 %v3030
    %3873 = vmatpush1.bf16.msra.mxu0 %v3029
    %3874 = vmatprep.subr.bf16.mxu0 %v3034
    %3875 = vmatpush1.bf16.msra.mxu0 %v3033
    %3876 = vmatprep.subr.bf16.mxu0 %v3038
    %3877 = vmatpush1.bf16.msra.mxu0 %v3037
    %3878 = vmatprep.subr.bf16.mxu0 %v3042
    %3879 = vmatpush1.bf16.msra.mxu0 %v3041
    %3880 = vmatprep.subr.bf16.mxu0 %v3046
    %3881 = vmatpush1.bf16.msra.mxu0 %v3045
    %3882 = vmatprep.subr.bf16.mxu0 %v3050
    %3883 = vmatpush1.bf16.msra.mxu0 %v3049
    %3884 = vmatprep.mubr.bf16.mxu0 %v490
    %3885 = vmatmul.mubr.bf16.gmra.mrb[0].mxu0 %v489
    %v3886 = vpop.f32.mrb[0].mxu0
    %v3887 = vadd.f32 %v3846, %v3886
    %v3888 = vpop.f32.mrb[0].mxu0
    %v3889 = vadd.f32 %v3848, %v3888
    %v3890 = vpop.f32.mrb[0].mxu0
    %v3891 = vpop.f32.mrb[0].mxu0
    %3892 = vdwg.mxu0
    %3893 = vmatprep.subr.bf16.mxu0 %v2544
    %3894 = vmatpush1.bf16.msra.mxu0 %v2543
    %3895 = vmatprep.subr.bf16.mxu0 %v2548
    %3896 = vmatpush1.bf16.msra.mxu0 %v2547
    %3897 = vmatprep.subr.bf16.mxu0 %v2552
    %3898 = vmatpush1.bf16.msra.mxu0 %v2551
    %3899 = vmatprep.subr.bf16.mxu0 %v2556
    %3900 = vmatpush1.bf16.msra.mxu0 %v2555
    %3901 = vmatprep.subr.bf16.mxu0 %v2560
    %3902 = vmatpush1.bf16.msra.mxu0 %v2559
    %3903 = vmatprep.subr.bf16.mxu0 %v2564
    %3904 = vmatpush1.bf16.msra.mxu0 %v2563
    %3905 = vmatprep.subr.bf16.mxu0 %v2568
    %3906 = vmatpush1.bf16.msra.mxu0 %v2567
    %3907 = vmatprep.subr.bf16.mxu0 %v2572
    %3908 = vmatpush1.bf16.msra.mxu0 %v2571
    %3909 = vmatprep.subr.bf16.mxu0 %v2576
    %3910 = vmatpush1.bf16.msra.mxu0 %v2575
    %3911 = vmatprep.subr.bf16.mxu0 %v2580
    %3912 = vmatpush1.bf16.msra.mxu0 %v2579
    %3913 = vmatprep.subr.bf16.mxu0 %v2584
    %3914 = vmatpush1.bf16.msra.mxu0 %v2583
    %3915 = vmatprep.subr.bf16.mxu0 %v2588
    %3916 = vmatpush1.bf16.msra.mxu0 %v2587
    %3917 = vmatprep.subr.bf16.mxu0 %v2592
    %3918 = vmatpush1.bf16.msra.mxu0 %v2591
    %3919 = vmatprep.subr.bf16.mxu0 %v2596
    %3920 = vmatpush1.bf16.msra.mxu0 %v2595
    %3921 = vmatprep.subr.bf16.mxu0 %v2600
    %3922 = vmatpush1.bf16.msra.mxu0 %v2599
    %3923 = vmatprep.subr.bf16.mxu0 %v2604
    %3924 = vmatpush1.bf16.msra.mxu0 %v2603
    %3925 = vmatprep.mubr.bf16.mxu0 %v448
    %3926 = vmatmul.mubr.bf16.gmra.mrb[0].mxu0 %v447
    %v3927 = vpop.f32.mrb[0].mxu0
    %v3928 = vadd.f32 0.0, %v3927
    %v3929 = vpop.f32.mrb[0].mxu0
    %v3930 = vadd.f32 0.0, %v3929
    %v3931 = vpop.f32.mrb[0].mxu0
    %v3932 = vpop.f32.mrb[0].mxu0
    %3933 = vdwg.mxu0
    %3934 = vmatprep.subr.bf16.mxu0 %v2608
    %3935 = vmatpush1.bf16.msra.mxu0 %v2607
    %3936 = vmatprep.subr.bf16.mxu0 %v2612
    %3937 = vmatpush1.bf16.msra.mxu0 %v2611
    %3938 = vmatprep.subr.bf16.mxu0 %v2616
    %3939 = vmatpush1.bf16.msra.mxu0 %v2615
    %3940 = vmatprep.subr.bf16.mxu0 %v2620
    %3941 = vmatpush1.bf16.msra.mxu0 %v2619
    %3942 = vmatprep.subr.bf16.mxu0 %v2624
    %3943 = vmatpush1.bf16.msra.mxu0 %v2623
    %3944 = vmatprep.subr.bf16.mxu0 %v2628
    %3945 = vmatpush1.bf16.msra.mxu0 %v2627
    %3946 = vmatprep.subr.bf16.mxu0 %v2632
    %3947 = vmatpush1.bf16.msra.mxu0 %v2631
    %3948 = vmatprep.subr.bf16.mxu0 %v2636
    %3949 = vmatpush1.bf16.msra.mxu0 %v2635
    %3950 = vmatprep.subr.bf16.mxu0 %v2640
    %3951 = vmatpush1.bf16.msra.mxu0 %v2639
    %3952 = vmatprep.subr.bf16.mxu0 %v2644
    %3953 = vmatpush1.bf16.msra.mxu0 %v2643
    %3954 = vmatprep.subr.bf16.mxu0 %v2648
    %3955 = vmatpush1.bf16.msra.mxu0 %v2647
    %3956 = vmatprep.subr.bf16.mxu0 %v2652
    %3957 = vmatpush1.bf16.msra.mxu0 %v2651
    %3958 = vmatprep.subr.bf16.mxu0 %v2656
    %3959 = vmatpush1.bf16.msra.mxu0 %v2655
    %3960 = vmatprep.subr.bf16.mxu0 %v2660
    %3961 = vmatpush1.bf16.msra.mxu0 %v2659
    %3962 = vmatprep.subr.bf16.mxu0 %v2664
    %3963 = vmatpush1.bf16.msra.mxu0 %v2663
    %3964 = vmatprep.subr.bf16.mxu0 %v2668
    %3965 = vmatpush1.bf16.msra.mxu0 %v2667
    %3966 = vmatprep.mubr.bf16.mxu0 %v454
    %3967 = vmatmul.mubr.bf16.gmra.mrb[0].mxu0 %v453
    %v3968 = vpop.f32.mrb[0].mxu0
    %v3969 = vadd.f32 %v3928, %v3968
    %v3970 = vpop.f32.mrb[0].mxu0
    %v3971 = vadd.f32 %v3930, %v3970
    %v3972 = vpop.f32.mrb[0].mxu0
    %v3973 = vpop.f32.mrb[0].mxu0
    %3974 = vdwg.mxu0
    %3975 = vmatprep.subr.bf16.mxu0 %v2672
    %3976 = vmatpush1.bf16.msra.mxu0 %v2671
    %3977 = vmatprep.subr.bf16.mxu0 %v2676
    %3978 = vmatpush1.bf16.msra.mxu0 %v2675
    %3979 = vmatprep.subr.bf16.mxu0 %v2680
    %3980 = vmatpush1.bf16.msra.mxu0 %v2679
    %3981 = vmatprep.subr.bf16.mxu0 %v2684
    %3982 = vmatpush1.bf16.msra.mxu0 %v2683
    %3983 = vmatprep.subr.bf16.mxu0 %v2688
    %3984 = vmatpush1.bf16.msra.mxu0 %v2687
    %3985 = vmatprep.subr.bf16.mxu0 %v2692
    %3986 = vmatpush1.bf16.msra.mxu0 %v2691
    %3987 = vmatprep.subr.bf16.mxu0 %v2696
    %3988 = vmatpush1.bf16.msra.mxu0 %v2695
    %3989 = vmatprep.subr.bf16.mxu0 %v2700
    %3990 = vmatpush1.bf16.msra.mxu0 %v2699
    %3991 = vmatprep.subr.bf16.mxu0 %v2704
    %3992 = vmatpush1.bf16.msra.mxu0 %v2703
    %3993 = vmatprep.subr.bf16.mxu0 %v2708
    %3994 = vmatpush1.bf16.msra.mxu0 %v2707
    %3995 = vmatprep.subr.bf16.mxu0 %v2712
    %3996 = vmatpush1.bf16.msra.mxu0 %v2711
    %3997 = vmatprep.subr.bf16.mxu0 %v2716
    %3998 = vmatpush1.bf16.msra.mxu0 %v2715
    %3999 = vmatprep.subr.bf16.mxu0 %v2720
    %4000 = vmatpush1.bf16.msra.mxu0 %v2719
    %4001 = vmatprep.subr.bf16.mxu0 %v2724
    %4002 = vmatpush1.bf16.msra.mxu0 %v2723
    %4003 = vmatprep.subr.bf16.mxu0 %v2728
    %4004 = vmatpush1.bf16.msra.mxu0 %v2727
    %4005 = vmatprep.subr.bf16.mxu0 %v2732
    %4006 = vmatpush1.bf16.msra.mxu0 %v2731
    %4007 = vmatprep.mubr.bf16.mxu0 %v460
    %4008 = vmatmul.mubr.bf16.gmra.mrb[0].mxu0 %v459
    %v4009 = vpop.f32.mrb[0].mxu0
    %v4010 = vadd.f32 %v3969, %v4009
    %v4011 = vpop.f32.mrb[0].mxu0
    %v4012 = vadd.f32 %v3971, %v4011
    %v4013 = vpop.f32.mrb[0].mxu0
    %v4014 = vpop.f32.mrb[0].mxu0
    %4015 = vdwg.mxu0
    %4016 = vmatprep.subr.bf16.mxu0 %v2736
    %4017 = vmatpush1.bf16.msra.mxu0 %v2735
    %4018 = vmatprep.subr.bf16.mxu0 %v2740
    %4019 = vmatpush1.bf16.msra.mxu0 %v2739
    %4020 = vmatprep.subr.bf16.mxu0 %v2744
    %4021 = vmatpush1.bf16.msra.mxu0 %v2743
    %4022 = vmatprep.subr.bf16.mxu0 %v2748
    %4023 = vmatpush1.bf16.msra.mxu0 %v2747
    %4024 = vmatprep.subr.bf16.mxu0 %v2752
    %4025 = vmatpush1.bf16.msra.mxu0 %v2751
    %4026 = vmatprep.subr.bf16.mxu0 %v2756
    %4027 = vmatpush1.bf16.msra.mxu0 %v2755
    %4028 = vmatprep.subr.bf16.mxu0 %v2760
    %4029 = vmatpush1.bf16.msra.mxu0 %v2759
    %4030 = vmatprep.subr.bf16.mxu0 %v2764
    %4031 = vmatpush1.bf16.msra.mxu0 %v2763
    %4032 = vmatprep.subr.bf16.mxu0 %v2768
    %4033 = vmatpush1.bf16.msra.mxu0 %v2767
    %4034 = vmatprep.subr.bf16.mxu0 %v2772
    %4035 = vmatpush1.bf16.msra.mxu0 %v2771
    %4036 = vmatprep.subr.bf16.mxu0 %v2776
    %4037 = vmatpush1.bf16.msra.mxu0 %v2775
    %4038 = vmatprep.subr.bf16.mxu0 %v2780
    %4039 = vmatpush1.bf16.msra.mxu0 %v2779
    %4040 = vmatprep.subr.bf16.mxu0 %v2784
    %4041 = vmatpush1.bf16.msra.mxu0 %v2783
    %4042 = vmatprep.subr.bf16.mxu0 %v2788
    %4043 = vmatpush1.bf16.msra.mxu0 %v2787
    %4044 = vmatprep.subr.bf16.mxu0 %v2792
    %4045 = vmatpush1.bf16.msra.mxu0 %v2791
    %4046 = vmatprep.subr.bf16.mxu0 %v2796
    %4047 = vmatpush1.bf16.msra.mxu0 %v2795
    %4048 = vmatprep.mubr.bf16.mxu0 %v466
    %4049 = vmatmul.mubr.bf16.gmra.mrb[0].mxu0 %v465
    %v4050 = vpop.f32.mrb[0].mxu0
    %v4051 = vadd.f32 %v4010, %v4050
    %v4052 = vpop.f32.mrb[0].mxu0
    %v4053 = vadd.f32 %v4012, %v4052
    %v4054 = vpop.f32.mrb[0].mxu0
    %v4055 = vpop.f32.mrb[0].mxu0
    %4056 = vdwg.mxu0
    %4057 = vmatprep.subr.bf16.mxu0 %v2800
    %4058 = vmatpush1.bf16.msra.mxu0 %v2799
    %4059 = vmatprep.subr.bf16.mxu0 %v2804
    %4060 = vmatpush1.bf16.msra.mxu0 %v2803
    %4061 = vmatprep.subr.bf16.mxu0 %v2808
    %4062 = vmatpush1.bf16.msra.mxu0 %v2807
    %4063 = vmatprep.subr.bf16.mxu0 %v2812
    %4064 = vmatpush1.bf16.msra.mxu0 %v2811
    %4065 = vmatprep.subr.bf16.mxu0 %v2816
    %4066 = vmatpush1.bf16.msra.mxu0 %v2815
    %4067 = vmatprep.subr.bf16.mxu0 %v2820
    %4068 = vmatpush1.bf16.msra.mxu0 %v2819
    %4069 = vmatprep.subr.bf16.mxu0 %v2824
    %4070 = vmatpush1.bf16.msra.mxu0 %v2823
    %4071 = vmatprep.subr.bf16.mxu0 %v2828
    %4072 = vmatpush1.bf16.msra.mxu0 %v2827
    %4073 = vmatprep.subr.bf16.mxu0 %v2832
    %4074 = vmatpush1.bf16.msra.mxu0 %v2831
    %4075 = vmatprep.subr.bf16.mxu0 %v2836
    %4076 = vmatpush1.bf16.msra.mxu0 %v2835
    %4077 = vmatprep.subr.bf16.mxu0 %v2840
    %4078 = vmatpush1.bf16.msra.mxu0 %v2839
    %4079 = vmatprep.subr.bf16.mxu0 %v2844
    %4080 = vmatpush1.bf16.msra.mxu0 %v2843
    %4081 = vmatprep.subr.bf16.mxu0 %v2848
    %4082 = vmatpush1.bf16.msra.mxu0 %v2847
    %4083 = vmatprep.subr.bf16.mxu0 %v2852
    %4084 = vmatpush1.bf16.msra.mxu0 %v2851
    %4085 = vmatprep.subr.bf16.mxu0 %v2856
    %4086 = vmatpush1.bf16.msra.mxu0 %v2855
    %4087 = vmatprep.subr.bf16.mxu0 %v2860
    %4088 = vmatpush1.bf16.msra.mxu0 %v2859
    %4089 = vmatprep.mubr.bf16.mxu0 %v472
    %4090 = vmatmul.mubr.bf16.gmra.mrb[0].mxu0 %v471
    %v4091 = vpop.f32.mrb[0].mxu0
    %v4092 = vadd.f32 %v4051, %v4091
    %v4093 = vpop.f32.mrb[0].mxu0
    %v4094 = vadd.f32 %v4053, %v4093
    %v4095 = vpop.f32.mrb[0].mxu0
    %v4096 = vpop.f32.mrb[0].mxu0
    %4097 = vdwg.mxu0
    %4098 = vmatprep.subr.bf16.mxu0 %v2864
    %4099 = vmatpush1.bf16.msra.mxu0 %v2863
    %4100 = vmatprep.subr.bf16.mxu0 %v2868
    %4101 = vmatpush1.bf16.msra.mxu0 %v2867
    %4102 = vmatprep.subr.bf16.mxu0 %v2872
    %4103 = vmatpush1.bf16.msra.mxu0 %v2871
    %4104 = vmatprep.subr.bf16.mxu0 %v2876
    %4105 = vmatpush1.bf16.msra.mxu0 %v2875
    %4106 = vmatprep.subr.bf16.mxu0 %v2880
    %4107 = vmatpush1.bf16.msra.mxu0 %v2879
    %4108 = vmatprep.subr.bf16.mxu0 %v2884
    %4109 = vmatpush1.bf16.msra.mxu0 %v2883
    %4110 = vmatprep.subr.bf16.mxu0 %v2888
    %4111 = vmatpush1.bf16.msra.mxu0 %v2887
    %4112 = vmatprep.subr.bf16.mxu0 %v2892
    %4113 = vmatpush1.bf16.msra.mxu0 %v2891
    %4114 = vmatprep.subr.bf16.mxu0 %v2896
    %4115 = vmatpush1.bf16.msra.mxu0 %v2895
    %4116 = vmatprep.subr.bf16.mxu0 %v2900
    %4117 = vmatpush1.bf16.msra.mxu0 %v2899
    %4118 = vmatprep.subr.bf16.mxu0 %v2904
    %4119 = vmatpush1.bf16.msra.mxu0 %v2903
    %4120 = vmatprep.subr.bf16.mxu0 %v2908
    %4121 = vmatpush1.bf16.msra.mxu0 %v2907
    %4122 = vmatprep.subr.bf16.mxu0 %v2912
    %4123 = vmatpush1.bf16.msra.mxu0 %v2911
    %4124 = vmatprep.subr.bf16.mxu0 %v2916
    %4125 = vmatpush1.bf16.msra.mxu0 %v2915
    %4126 = vmatprep.subr.bf16.mxu0 %v2920
    %4127 = vmatpush1.bf16.msra.mxu0 %v2919
    %4128 = vmatprep.subr.bf16.mxu0 %v2924
    %4129 = vmatpush1.bf16.msra.mxu0 %v2923
    %4130 = vmatprep.mubr.bf16.mxu0 %v478
    %4131 = vmatmul.mubr.bf16.gmra.mrb[0].mxu0 %v477
    %v4132 = vpop.f32.mrb[0].mxu0
    %v4133 = vadd.f32 %v4092, %v4132
    %v4134 = vpop.f32.mrb[0].mxu0
    %v4135 = vadd.f32 %v4094, %v4134
    %v4136 = vpop.f32.mrb[0].mxu0
    %v4137 = vpop.f32.mrb[0].mxu0
    %4138 = vdwg.mxu0
    %4139 = vmatprep.subr.bf16.mxu0 %v2928
    %4140 = vmatpush1.bf16.msra.mxu0 %v2927
    %4141 = vmatprep.subr.bf16.mxu0 %v2932
    %4142 = vmatpush1.bf16.msra.mxu0 %v2931
    %4143 = vmatprep.subr.bf16.mxu0 %v2936
    %4144 = vmatpush1.bf16.msra.mxu0 %v2935
    %4145 = vmatprep.subr.bf16.mxu0 %v2940
    %4146 = vmatpush1.bf16.msra.mxu0 %v2939
    %4147 = vmatprep.subr.bf16.mxu0 %v2944
    %4148 = vmatpush1.bf16.msra.mxu0 %v2943
    %4149 = vmatprep.subr.bf16.mxu0 %v2948
    %4150 = vmatpush1.bf16.msra.mxu0 %v2947
    %4151 = vmatprep.subr.bf16.mxu0 %v2952
    %4152 = vmatpush1.bf16.msra.mxu0 %v2951
    %4153 = vmatprep.subr.bf16.mxu0 %v2956
    %4154 = vmatpush1.bf16.msra.mxu0 %v2955
    %4155 = vmatprep.subr.bf16.mxu0 %v2960
    %4156 = vmatpush1.bf16.msra.mxu0 %v2959
    %4157 = vmatprep.subr.bf16.mxu0 %v2964
    %4158 = vmatpush1.bf16.msra.mxu0 %v2963
    %4159 = vmatprep.subr.bf16.mxu0 %v2968
    %4160 = vmatpush1.bf16.msra.mxu0 %v2967
    %4161 = vmatprep.subr.bf16.mxu0 %v2972
    %4162 = vmatpush1.bf16.msra.mxu0 %v2971
    %4163 = vmatprep.subr.bf16.mxu0 %v2976
    %4164 = vmatpush1.bf16.msra.mxu0 %v2975
    %4165 = vmatprep.subr.bf16.mxu0 %v2980
    %4166 = vmatpush1.bf16.msra.mxu0 %v2979
    %4167 = vmatprep.subr.bf16.mxu0 %v2984
    %4168 = vmatpush1.bf16.msra.mxu0 %v2983
    %4169 = vmatprep.subr.bf16.mxu0 %v2988
    %4170 = vmatpush1.bf16.msra.mxu0 %v2987
    %4171 = vmatprep.mubr.bf16.mxu0 %v484
    %4172 = vmatmul.mubr.bf16.gmra.mrb[0].mxu0 %v483
    %v4173 = vpop.f32.mrb[0].mxu0
    %v4174 = vadd.f32 %v4133, %v4173
    %v4175 = vpop.f32.mrb[0].mxu0
    %v4176 = vadd.f32 %v4135, %v4175
    %v4177 = vpop.f32.mrb[0].mxu0
    %v4178 = vpop.f32.mrb[0].mxu0
    %4179 = vdwg.mxu0
    %4180 = vmatprep.subr.bf16.mxu0 %v2992
    %4181 = vmatpush1.bf16.msra.mxu0 %v2991
    %4182 = vmatprep.subr.bf16.mxu0 %v2996
    %4183 = vmatpush1.bf16.msra.mxu0 %v2995
    %4184 = vmatprep.subr.bf16.mxu0 %v3000
    %4185 = vmatpush1.bf16.msra.mxu0 %v2999
    %4186 = vmatprep.subr.bf16.mxu0 %v3004
    %4187 = vmatpush1.bf16.msra.mxu0 %v3003
    %4188 = vmatprep.subr.bf16.mxu0 %v3008
    %4189 = vmatpush1.bf16.msra.mxu0 %v3007
    %4190 = vmatprep.subr.bf16.mxu0 %v3012
    %4191 = vmatpush1.bf16.msra.mxu0 %v3011
    %4192 = vmatprep.subr.bf16.mxu0 %v3016
    %4193 = vmatpush1.bf16.msra.mxu0 %v3015
    %4194 = vmatprep.subr.bf16.mxu0 %v3020
    %4195 = vmatpush1.bf16.msra.mxu0 %v3019
    %4196 = vmatprep.subr.bf16.mxu0 %v3024
    %4197 = vmatpush1.bf16.msra.mxu0 %v3023
    %4198 = vmatprep.subr.bf16.mxu0 %v3028
    %4199 = vmatpush1.bf16.msra.mxu0 %v3027
    %4200 = vmatprep.subr.bf16.mxu0 %v3032
    %4201 = vmatpush1.bf16.msra.mxu0 %v3031
    %4202 = vmatprep.subr.bf16.mxu0 %v3036
    %4203 = vmatpush1.bf16.msra.mxu0 %v3035
    %4204 = vmatprep.subr.bf16.mxu0 %v3040
    %4205 = vmatpush1.bf16.msra.mxu0 %v3039
    %4206 = vmatprep.subr.bf16.mxu0 %v3044
    %4207 = vmatpush1.bf16.msra.mxu0 %v3043
    %4208 = vmatprep.subr.bf16.mxu0 %v3048
    %4209 = vmatpush1.bf16.msra.mxu0 %v3047
    %4210 = vmatprep.subr.bf16.mxu0 %v3052
    %4211 = vmatpush1.bf16.msra.mxu0 %v3051
    %4212 = vmatprep.mubr.bf16.mxu0 %v490
    %4213 = vmatmul.mubr.bf16.gmra.mrb[0].mxu0 %v489
    %v4214 = vpop.f32.mrb[0].mxu0
    %v4215 = vadd.f32 %v4174, %v4214
    %v4216 = vpop.f32.mrb[0].mxu0
    %v4217 = vadd.f32 %v4176, %v4216
    %v4218 = vpop.f32.mrb[0].mxu0
    %v4219 = vpop.f32.mrb[0].mxu0
    %4220 = vdwg.mxu0
    %vm4221 = vcmp.gt.f32.partialorder %v3887, 0.0
    %vm4222 = vcmp.gt.f32.partialorder %v3889, 0.0
    %vm4223 = vcmp.gt.f32.partialorder %v4215, 0.0
    %vm4224 = vcmp.gt.f32.partialorder %v4217, 0.0
    %v4225 = vsel %vm4221, 1.0, -1.0
    %v4226 = vsel %vm4222, 1.0, -1.0
    %v4227 = vsel %vm4223, 1.0, -1.0
    %v4228 = vsel %vm4224, 1.0, -1.0
    %v4229 = vpack.c.bf16 %v4225, %v4225
    %v4230 = vpack.c.bf16 %v4226, %v4226
    %v4231 = vpack.c.bf16 %v4227, %v4227
    %v4232 = vpack.c.bf16 %v4228, %v4228
    %v4233 = vld [vmem:[#allocation7] sm:$0xf]
    %v4234 = vld [vmem:[#allocation7 + $0x4] sm:$0xf]
    %v4235 = vld [vmem:[#allocation7 + $0x8] sm:$0xf]
    %v4236 = vld [vmem:[#allocation7 + $0xc] sm:$0xf]
    %v4237 = vld [vmem:[#allocation7 + $0x10] sm:$0xf]
    %v4238 = vld [vmem:[#allocation7 + $0x14] sm:$0xf]
    %v4239 = vld [vmem:[#allocation7 + $0x18] sm:$0xf]
    %v4240 = vld [vmem:[#allocation7 + $0x1c] sm:$0xf]
    %v4241 = vld [vmem:[#allocation7 + $0x20] sm:$0xf]
    %v4242 = vld [vmem:[#allocation7 + $0x24] sm:$0xf]
    %v4243 = vld [vmem:[#allocation7 + $0x28] sm:$0xf]
    %v4244 = vld [vmem:[#allocation7 + $0x2c] sm:$0xf]
    %v4245 = vld [vmem:[#allocation7 + $0x30] sm:$0xf]
    %v4246 = vld [vmem:[#allocation7 + $0x34] sm:$0xf]
    %v4247 = vld [vmem:[#allocation7 + $0x38] sm:$0xf]
    %v4248 = vld [vmem:[#allocation7 + $0x3c] sm:$0xf]
    %v4249 = vld [vmem:[#allocation7 + $0x40] sm:$0xf]
    %v4250 = vld [vmem:[#allocation7 + $0x44] sm:$0xf]
    %v4251 = vld [vmem:[#allocation7 + $0x48] sm:$0xf]
    %v4252 = vld [vmem:[#allocation7 + $0x4c] sm:$0xf]
    %v4253 = vld [vmem:[#allocation7 + $0x50] sm:$0xf]
    %v4254 = vld [vmem:[#allocation7 + $0x54] sm:$0xf]
    %v4255 = vld [vmem:[#allocation7 + $0x58] sm:$0xf]
    %v4256 = vld [vmem:[#allocation7 + $0x5c] sm:$0xf]
    %v4257 = vld [vmem:[#allocation7 + $0x60] sm:$0xf]
    %v4258 = vld [vmem:[#allocation7 + $0x64] sm:$0xf]
    %v4259 = vld [vmem:[#allocation7 + $0x68] sm:$0xf]
    %v4260 = vld [vmem:[#allocation7 + $0x6c] sm:$0xf]
    %v4261 = vld [vmem:[#allocation7 + $0x70] sm:$0xf]
    %v4262 = vld [vmem:[#allocation7 + $0x74] sm:$0xf]
    %v4263 = vld [vmem:[#allocation7 + $0x78] sm:$0xf]
    %v4264 = vld [vmem:[#allocation7 + $0x7c] sm:$0xf]
    %v4265 = vld [vmem:[#allocation7 + $0x80] sm:$0xf]
    %v4266 = vld [vmem:[#allocation7 + $0x84] sm:$0xf]
    %v4267 = vld [vmem:[#allocation7 + $0x88] sm:$0xf]
    %v4268 = vld [vmem:[#allocation7 + $0x8c] sm:$0xf]
    %v4269 = vld [vmem:[#allocation7 + $0x90] sm:$0xf]
    %v4270 = vld [vmem:[#allocation7 + $0x94] sm:$0xf]
    %v4271 = vld [vmem:[#allocation7 + $0x98] sm:$0xf]
    %v4272 = vld [vmem:[#allocation7 + $0x9c] sm:$0xf]
    %v4273 = vld [vmem:[#allocation7 + $0xa0] sm:$0xf]
    %v4274 = vld [vmem:[#allocation7 + $0xa4] sm:$0xf]
    %v4275 = vld [vmem:[#allocation7 + $0xa8] sm:$0xf]
    %v4276 = vld [vmem:[#allocation7 + $0xac] sm:$0xf]
    %v4277 = vld [vmem:[#allocation7 + $0xb0] sm:$0xf]
    %v4278 = vld [vmem:[#allocation7 + $0xb4] sm:$0xf]
    %v4279 = vld [vmem:[#allocation7 + $0xb8] sm:$0xf]
    %v4280 = vld [vmem:[#allocation7 + $0xbc] sm:$0xf]
    %v4281 = vld [vmem:[#allocation7 + $0xc0] sm:$0xf]
    %v4282 = vld [vmem:[#allocation7 + $0xc4] sm:$0xf]
    %v4283 = vld [vmem:[#allocation7 + $0xc8] sm:$0xf]
    %v4284 = vld [vmem:[#allocation7 + $0xcc] sm:$0xf]
    %v4285 = vld [vmem:[#allocation7 + $0xd0] sm:$0xf]
    %v4286 = vld [vmem:[#allocation7 + $0xd4] sm:$0xf]
    %v4287 = vld [vmem:[#allocation7 + $0xd8] sm:$0xf]
    %v4288 = vld [vmem:[#allocation7 + $0xdc] sm:$0xf]
    %v4289 = vld [vmem:[#allocation7 + $0xe0] sm:$0xf]
    %v4290 = vld [vmem:[#allocation7 + $0xe4] sm:$0xf]
    %v4291 = vld [vmem:[#allocation7 + $0xe8] sm:$0xf]
    %v4292 = vld [vmem:[#allocation7 + $0xec] sm:$0xf]
    %v4293 = vld [vmem:[#allocation7 + $0xf0] sm:$0xf]
    %v4294 = vld [vmem:[#allocation7 + $0xf4] sm:$0xf]
    %v4295 = vld [vmem:[#allocation7 + $0xf8] sm:$0xf]
    %v4296 = vld [vmem:[#allocation7 + $0xfc] sm:$0xf]
    %v4361 = vunpack.c.l.b16 %v4233
    %v4362 = vunpack.c.l.b16 %v4234
    %v4363 = vunpack.c.l.b16 %v4235
    %v4364 = vunpack.c.l.b16 %v4236
    %v4365 = vunpack.c.l.b16 %v4237
    %v4366 = vunpack.c.l.b16 %v4238
    %v4367 = vunpack.c.l.b16 %v4239
    %v4368 = vunpack.c.l.b16 %v4240
    %v4369 = vunpack.c.l.b16 %v4241
    %v4370 = vunpack.c.l.b16 %v4242
    %v4371 = vunpack.c.l.b16 %v4243
    %v4372 = vunpack.c.l.b16 %v4244
    %v4373 = vunpack.c.l.b16 %v4245
    %v4374 = vunpack.c.l.b16 %v4246
    %v4375 = vunpack.c.l.b16 %v4247
    %v4376 = vunpack.c.l.b16 %v4248
    %v4377 = vunpack.c.l.b16 %v4249
    %v4378 = vunpack.c.l.b16 %v4250
    %v4379 = vunpack.c.l.b16 %v4251
    %v4380 = vunpack.c.l.b16 %v4252
    %v4381 = vunpack.c.l.b16 %v4253
    %v4382 = vunpack.c.l.b16 %v4254
    %v4383 = vunpack.c.l.b16 %v4255
    %v4384 = vunpack.c.l.b16 %v4256
    %v4385 = vunpack.c.l.b16 %v4257
    %v4386 = vunpack.c.l.b16 %v4258
    %v4387 = vunpack.c.l.b16 %v4259
    %v4388 = vunpack.c.l.b16 %v4260
    %v4389 = vunpack.c.l.b16 %v4261
    %v4390 = vunpack.c.l.b16 %v4262
    %v4391 = vunpack.c.l.b16 %v4263
    %v4392 = vunpack.c.l.b16 %v4264
    %v4393 = vunpack.c.l.b16 %v4265
    %v4394 = vunpack.c.l.b16 %v4266
    %v4395 = vunpack.c.l.b16 %v4267
    %v4396 = vunpack.c.l.b16 %v4268
    %v4397 = vunpack.c.l.b16 %v4269
    %v4398 = vunpack.c.l.b16 %v4270
    %v4399 = vunpack.c.l.b16 %v4271
    %v4400 = vunpack.c.l.b16 %v4272
    %v4401 = vunpack.c.l.b16 %v4273
    %v4402 = vunpack.c.l.b16 %v4274
    %v4403 = vunpack.c.l.b16 %v4275
    %v4404 = vunpack.c.l.b16 %v4276
    %v4405 = vunpack.c.l.b16 %v4277
    %v4406 = vunpack.c.l.b16 %v4278
    %v4407 = vunpack.c.l.b16 %v4279
    %v4408 = vunpack.c.l.b16 %v4280
    %v4409 = vunpack.c.l.b16 %v4281
    %v4410 = vunpack.c.l.b16 %v4282
    %v4411 = vunpack.c.l.b16 %v4283
    %v4412 = vunpack.c.l.b16 %v4284
    %v4413 = vunpack.c.l.b16 %v4285
    %v4414 = vunpack.c.l.b16 %v4286
    %v4415 = vunpack.c.l.b16 %v4287
    %v4416 = vunpack.c.l.b16 %v4288
    %v4417 = vunpack.c.l.b16 %v4289
    %v4418 = vunpack.c.l.b16 %v4290
    %v4419 = vunpack.c.l.b16 %v4291
    %v4420 = vunpack.c.l.b16 %v4292
    %v4421 = vunpack.c.l.b16 %v4293
    %v4422 = vunpack.c.l.b16 %v4294
    %v4423 = vunpack.c.l.b16 %v4295
    %v4424 = vunpack.c.l.b16 %v4296
    %v4425 = vpack.c.b16 %v4362, %v4361
    %v4426 = vpack.c.b16 %v4364, %v4363
    %v4427 = vpack.c.b16 %v4366, %v4365
    %v4428 = vpack.c.b16 %v4368, %v4367
    %v4429 = vpack.c.b16 %v4370, %v4369
    %v4430 = vpack.c.b16 %v4372, %v4371
    %v4431 = vpack.c.b16 %v4374, %v4373
    %v4432 = vpack.c.b16 %v4376, %v4375
    %v4433 = vpack.c.b16 %v4378, %v4377
    %v4434 = vpack.c.b16 %v4380, %v4379
    %v4435 = vpack.c.b16 %v4382, %v4381
    %v4436 = vpack.c.b16 %v4384, %v4383
    %v4437 = vpack.c.b16 %v4386, %v4385
    %v4438 = vpack.c.b16 %v4388, %v4387
    %v4439 = vpack.c.b16 %v4390, %v4389
    %v4440 = vpack.c.b16 %v4392, %v4391
    %v4441 = vpack.c.b16 %v4394, %v4393
    %v4442 = vpack.c.b16 %v4396, %v4395
    %v4443 = vpack.c.b16 %v4398, %v4397
    %v4444 = vpack.c.b16 %v4400, %v4399
    %v4445 = vpack.c.b16 %v4402, %v4401
    %v4446 = vpack.c.b16 %v4404, %v4403
    %v4447 = vpack.c.b16 %v4406, %v4405
    %v4448 = vpack.c.b16 %v4408, %v4407
    %v4449 = vpack.c.b16 %v4410, %v4409
    %v4450 = vpack.c.b16 %v4412, %v4411
    %v4451 = vpack.c.b16 %v4414, %v4413
    %v4452 = vpack.c.b16 %v4416, %v4415
    %v4453 = vpack.c.b16 %v4418, %v4417
    %v4454 = vpack.c.b16 %v4420, %v4419
    %v4455 = vpack.c.b16 %v4422, %v4421
    %v4456 = vpack.c.b16 %v4424, %v4423
    %4489 = vmatprep.subr.bf16.mxu0 0
    %4490 = vmatpush1.bf16.msra.mxu0 %v4425
    %4491 = vmatprep.subr.bf16.mxu0 0
    %4492 = vmatpush1.bf16.msra.mxu0 %v4426
    %4493 = vmatprep.subr.bf16.mxu0 0
    %4494 = vmatpush1.bf16.msra.mxu0 %v4427
    %4495 = vmatprep.subr.bf16.mxu0 0
    %4496 = vmatpush1.bf16.msra.mxu0 %v4428
    %4497 = vmatprep.subr.bf16.mxu0 0
    %4498 = vmatpush1.bf16.msra.mxu0 %v4429
    %4499 = vmatprep.subr.bf16.mxu0 0
    %4500 = vmatpush1.bf16.msra.mxu0 %v4430
    %4501 = vmatprep.subr.bf16.mxu0 0
    %4502 = vmatpush1.bf16.msra.mxu0 %v4431
    %4503 = vmatprep.subr.bf16.mxu0 0
    %4504 = vmatpush1.bf16.msra.mxu0 %v4432
    %4505 = vmatprep.subr.bf16.mxu0 0
    %4506 = vmatpush1.bf16.msra.mxu0 %v4433
    %4507 = vmatprep.subr.bf16.mxu0 0
    %4508 = vmatpush1.bf16.msra.mxu0 %v4434
    %4509 = vmatprep.subr.bf16.mxu0 0
    %4510 = vmatpush1.bf16.msra.mxu0 %v4435
    %4511 = vmatprep.subr.bf16.mxu0 0
    %4512 = vmatpush1.bf16.msra.mxu0 %v4436
    %4513 = vmatprep.subr.bf16.mxu0 0
    %4514 = vmatpush1.bf16.msra.mxu0 %v4437
    %4515 = vmatprep.subr.bf16.mxu0 0
    %4516 = vmatpush1.bf16.msra.mxu0 %v4438
    %4517 = vmatprep.subr.bf16.mxu0 0
    %4518 = vmatpush1.bf16.msra.mxu0 %v4439
    %4519 = vmatprep.subr.bf16.mxu0 0
    %4520 = vmatpush1.bf16.msra.mxu0 %v4440
    %4521 = vmatprep.mubr.bf16.mxu0 %v4230
    %4522 = vmatmul.mubr.bf16.gmra.mrb[0].mxu0 %v4229
    %v4523 = vpop.f32.mrb[0].mxu0
    %v4524 = vadd.f32 0.0, %v4523
    %v4525 = vpop.f32.mrb[0].mxu0
    %v4526 = vpop.f32.mrb[0].mxu0
    %v4527 = vpop.f32.mrb[0].mxu0
    %4528 = vdwg.mxu0
    %4529 = vmatprep.subr.bf16.mxu0 0
    %4530 = vmatpush1.bf16.msra.mxu0 %v4441
    %4531 = vmatprep.subr.bf16.mxu0 0
    %4532 = vmatpush1.bf16.msra.mxu0 %v4442
    %4533 = vmatprep.subr.bf16.mxu0 0
    %4534 = vmatpush1.bf16.msra.mxu0 %v4443
    %4535 = vmatprep.subr.bf16.mxu0 0
    %4536 = vmatpush1.bf16.msra.mxu0 %v4444
    %4537 = vmatprep.subr.bf16.mxu0 0
    %4538 = vmatpush1.bf16.msra.mxu0 %v4445
    %4539 = vmatprep.subr.bf16.mxu0 0
    %4540 = vmatpush1.bf16.msra.mxu0 %v4446
    %4541 = vmatprep.subr.bf16.mxu0 0
    %4542 = vmatpush1.bf16.msra.mxu0 %v4447
    %4543 = vmatprep.subr.bf16.mxu0 0
    %4544 = vmatpush1.bf16.msra.mxu0 %v4448
    %4545 = vmatprep.subr.bf16.mxu0 0
    %4546 = vmatpush1.bf16.msra.mxu0 %v4449
    %4547 = vmatprep.subr.bf16.mxu0 0
    %4548 = vmatpush1.bf16.msra.mxu0 %v4450
    %4549 = vmatprep.subr.bf16.mxu0 0
    %4550 = vmatpush1.bf16.msra.mxu0 %v4451
    %4551 = vmatprep.subr.bf16.mxu0 0
    %4552 = vmatpush1.bf16.msra.mxu0 %v4452
    %4553 = vmatprep.subr.bf16.mxu0 0
    %4554 = vmatpush1.bf16.msra.mxu0 %v4453
    %4555 = vmatprep.subr.bf16.mxu0 0
    %4556 = vmatpush1.bf16.msra.mxu0 %v4454
    %4557 = vmatprep.subr.bf16.mxu0 0
    %4558 = vmatpush1.bf16.msra.mxu0 %v4455
    %4559 = vmatprep.subr.bf16.mxu0 0
    %4560 = vmatpush1.bf16.msra.mxu0 %v4456
    %4561 = vmatprep.mubr.bf16.mxu0 %v4232
    %4562 = vmatmul.mubr.bf16.gmra.mrb[0].mxu0 %v4231
    %v4563 = vpop.f32.mrb[0].mxu0
    %v4564 = vadd.f32 %v4524, %v4563
    %v4565 = vpop.f32.mrb[0].mxu0
    %v4566 = vpop.f32.mrb[0].mxu0
    %v4567 = vpop.f32.mrb[0].mxu0
    %4568 = vdwg.mxu0
    %4569 = vst [vmem:[#allocation8] sm:$0xff] %v4564
    // Predicated region
    $region26: #{tpu_custom_call.1} parent=1 // pred_check
      _
    $region27: #{tpu_custom_call.1} parent=1 // pred_check_branch
      %4571 = sbr.rel (0) target = $region29
    $region28: #{tpu_custom_call.1} parent=1 // pred_region
      %s4573 = ssub.s32 128, 128
      %4574 = vsyncadd [#allocation4], %s4573
      %s4576 = sshll.u32 [#allocation8], 4
      %s4577 = int_to_ptr.vmem [resolvable:$true] %s4576
      %4579 = dma.vmem_to_hbm [thread:$0]  %s4577, 128, %s3, [#allocation4]
    $region29: #{tpu_custom_call.1} parent=1 // pred_fallthru
      _
    // Predicated region
    $region30: #{tpu_custom_call.1} parent=1 // pred_check
      _
    $region31: #{tpu_custom_call.1} parent=1 // pred_check_branch
      %4581 = sbr.rel (0) target = $region33
    $region32: #{tpu_custom_call.1} parent=1 // pred_region
      %4582 = dma.done [#allocation4], 128
    $region33: #{tpu_custom_call.1} parent=1 // pred_fallthru
      _
    %4583 = vsyncpa [#allocation3], 1
    %4584 = vsyncpa [#allocation6], 1
    %4585 = vsyncpa [#allocation4], 1

</llo_original>
